<compile_context>
chip_gen: v7x
topology: tpu7x:2x2x1
jax: 0.10.0
libtpu: 0.0.40
codegen_flags: <defaults>
</compile_context>

<pallas_src>
import math

import jax
import jax.numpy as jnp
from jax.experimental import pallas as pl
from jax.experimental.pallas import tpu as pltpu

# torchstain Macenko defaults
IO = 240.0
INV_IO = 1.0 / 240.0
ALPHA = 1.0
BETA = 0.15
PI = math.pi

TR_MAX = 512                       # pixel-row tile (sublane axis); lane axis is always 128
BIG = 1.0e30                       # sentinel for percentile masking (fits f32)
VMEM_LIMIT = 32 * 1024 * 1024      # stays within v7x's tighter VMEM budget too

HE_REF = jnp.array([[0.5626, 0.2159],
                    [0.7201, 0.8012],
                    [0.4062, 0.5581]], dtype=jnp.float32)
MAX_C_REF = jnp.array([1.9705, 1.0308], dtype=jnp.float32)


def _plan_layout(n_pix):
    """Pick (tile_rows, padded_rows, blocks_per_core_half) for N pixels."""
    rows = -(-n_pix // 128)                        # rows of 128 pixels
    rows8 = -(-rows // 8) * 8                      # sublane multiple
    tr = min(TR_MAX, rows8)
    r_pad = -(-rows8 // (2 * tr)) * (2 * tr)       # multiple of 2*tr (2-way core split)
    return tr, r_pad, r_pad // (2 * tr)


def _fold_rows(x):
    """Sublane-fold a (tr, 128) plane to (8, 128): balanced tree of 8-aligned static
    slices + vector adds (pure VALU, no cross-lane XLU work)."""
    tr = x.shape[0]
    chunks = [x[s:s + 8] for s in range(0, tr, 8)]
    while len(chunks) > 1:
        nxt = [a + b for a, b in zip(chunks[0::2], chunks[1::2])]
        if len(chunks) % 2:
            nxt.append(chunks[-1])
        chunks = nxt
    return chunks[0]


def _atan2_vpu(y, x):
    """atan2 from VPU ops only (abs/min/max/div/poly/select); ~1e-7 abs error on [-pi, pi]."""
    ax, ay = jnp.abs(x), jnp.abs(y)
    amax = jnp.maximum(ax, ay)
    amin = jnp.minimum(ax, ay)
    a = amin / jnp.maximum(amax, 1e-30)            # in [0, 1]
    shift = a > 0.4142135623730951                 # tan(pi/8): Cephes-style range reduction
    t = jnp.where(shift, (a - 1.0) / (a + 1.0), a)
    z = t * t
    p = (((8.05374449538e-2 * z - 1.38776856032e-1) * z
          + 1.99777106478e-1) * z - 3.33329491539e-1) * z * t + t
    r = jnp.where(shift, p + 0.25 * PI, p)
    r = jnp.where(ay > ax, 0.5 * PI - r, r)
    r = jnp.where(x < 0.0, PI - r, r)
    return jnp.where(y < 0.0, -r, r)


# ----------------------------- Pallas kernels -----------------------------

def _od_stats_kernel(img_ref, od_ref, stats_ref):
    """OD transform + masked-moment partials, sublane-folded into a (10,8,128) per-core acc."""
    @pl.when(pl.program_id(1) == 0)
    def _():
        stats_ref[...] = jnp.zeros_like(stats_ref)

    img = img_ref[...]                                   # (3, TR, 128)
    od = -jnp.log((img + 1.0) * INV_IO)                  # multiply, not divide (EUP slot -> log)
    od_ref[...] = od

    od0, od1, od2 = od[0], od[1], od[2]
    keep = (jnp.minimum(jnp.minimum(od0, od1), od2) >= BETA).astype(jnp.float32)
    w0, w1, w2 = keep * od0, keep * od1, keep * od2      # masked OD rows

    stats_ref[0, 0] += _fold_rows(w0 * od0)
    stats_ref[0, 1] += _fold_rows(w0 * od1)
    stats_ref[0, 2] += _fold_rows(w0 * od2)
    stats_ref[0, 3] += _fold_rows(w1 * od1)
    stats_ref[0, 4] += _fold_rows(w1 * od2)
    stats_ref[0, 5] += _fold_rows(w2 * od2)
    stats_ref[0, 6] += _fold_rows(w0)
    stats_ref[0, 7] += _fold_rows(w1)
    stats_ref[0, 8] += _fold_rows(w2)
    stats_ref[0, 9] += _fold_rows(keep)


def _phi_kernel(ev_ref, od_ref, phi_ref):
    """Fused: proj = eigvecs.T @ OD, phi = atan2(proj1, proj0), transparent pixels -> +BIG."""
    od = od_ref[...]                                     # (3, TR, 128)
    keep = jnp.minimum(jnp.minimum(od[0], od[1]), od[2]) >= BETA
    t0 = ev_ref[0, 0] * od[0] + ev_ref[0, 1] * od[1] + ev_ref[0, 2] * od[2]
    t1 = ev_ref[1, 0] * od[0] + ev_ref[1, 1] * od[1] + ev_ref[1, 2] * od[2]
    phi = _atan2_vpu(t1, t0)
    phi_ref[...] = jnp.where(keep, phi, BIG)


def _make_conc_kernel(n_pix):
    def kernel(hp_ref, od_ref, conc_ref):
        """C = pinv(HE) @ OD; padded tail pixels forced to -BIG for the percentile."""
        od = od_ref[...]                                 # (3, TR, 128)
        tr = od.shape[1]
        row = jax.lax.broadcasted_iota(jnp.int32, (tr, 128), 0) + pl.program_id(0) * tr
        lane = jax.lax.broadcasted_iota(jnp.int32, (tr, 128), 1)
        valid = (row * 128 + lane) < n_pix
        for k in range(2):
            v = (hp_ref[k, 0] * od[0]
                 + hp_ref[k, 1] * od[1]
                 + hp_ref[k, 2] * od[2])
            conc_ref[k] = jnp.where(valid, v, -BIG)
    return kernel


def _recon_pack_kernel(mix_ref, conc_ref, out_ref):
    """Inorm = min(Io*exp(-(HERef/ratio)@C),255), packed R | G<<8 | B<<16 into one int32/pixel."""
    c = conc_ref[...]                                    # (2, TR, 128)
    packed = None
    for k in range(3):
        v = mix_ref[k, 0] * c[0] + mix_ref[k, 1] * c[1]
        px = jnp.maximum(jnp.minimum(IO * jnp.exp(-v), 255.0), 0.0).astype(jnp.int32)
        term = px * (1 << (8 * k))
        packed = term if packed is None else packed + term
    out_ref[...] = packed


# ----------------------------- pallas_call wrappers -----------------------------

def od_and_stats(img_slab, tr, nb_half):
    _, r_pad, _ = img_slab.shape
    return pl.pallas_call(
        _od_stats_kernel,
        out_shape=(
            jax.ShapeDtypeStruct((3, r_pad, 128), jnp.float32),      # OD slab
            jax.ShapeDtypeStruct((2, 10, 8, 128), jnp.float32),      # per-core folded partials
        ),
        grid_spec=pltpu.PrefetchScalarGridSpec(
            num_scalar_prefetch=0,
            grid=(2, nb_half),
            in_specs=[pl.BlockSpec((3, tr, 128), lambda c, i: (0, c * nb_half + i, 0))],
            out_specs=(
                pl.BlockSpec((3, tr, 128), lambda c, i: (0, c * nb_half + i, 0)),
                pl.BlockSpec((1, 10, 8, 128), lambda c, i: (c, 0, 0, 0)),
            ),
        ),
        compiler_params=pltpu.CompilerParams(
            dimension_semantics=("parallel", "arbitrary"),
            vmem_limit_bytes=VMEM_LIMIT),
    )(img_slab)


def compute_phi(ev_t, od_slab, tr):
    _, r_pad, _ = od_slab.shape
    nblocks = r_pad // tr
    return pl.pallas_call(
        _phi_kernel,
        out_shape=jax.ShapeDtypeStruct((r_pad, 128), jnp.float32),
        grid_spec=pltpu.PrefetchScalarGridSpec(
            num_scalar_prefetch=0,
            grid=(nblocks,),
            in_specs=[
                pl.BlockSpec(memory_space=pltpu.MemorySpace.SMEM),   # (2, 3) scalars
                pl.BlockSpec((3, tr, 128), lambda i: (0, i, 0)),
            ],
            out_specs=pl.BlockSpec((tr, 128), lambda i: (i, 0)),
        ),
        compiler_params=pltpu.CompilerParams(
            dimension_semantics=("parallel",),
            vmem_limit_bytes=VMEM_LIMIT),
    )(ev_t.astype(jnp.float32), od_slab)


def concentrations(h_pinv, od_slab, tr, n_pix):
    _, r_pad, _ = od_slab.shape
    nblocks = r_pad // tr
    return pl.pallas_call(
        _make_conc_kernel(n_pix),
        out_shape=jax.ShapeDtypeStruct((2, r_pad, 128), jnp.float32),
        grid_spec=pltpu.PrefetchScalarGridSpec(
            num_scalar_prefetch=0,
            grid=(nblocks,),
            in_specs=[
                pl.BlockSpec(memory_space=pltpu.MemorySpace.SMEM),   # (2, 3) scalars
                pl.BlockSpec((3, tr, 128), lambda i: (0, i, 0)),
            ],
            out_specs=pl.BlockSpec((2, tr, 128), lambda i: (0, i, 0)),
        ),
        compiler_params=pltpu.CompilerParams(
            dimension_semantics=("parallel",),
            vmem_limit_bytes=VMEM_LIMIT),
    )(h_pinv.astype(jnp.float32), od_slab)


def reconstruct_packed(mix, conc_slab, tr):
    _, r_pad, _ = conc_slab.shape
    nblocks = r_pad // tr
    return pl.pallas_call(
        _recon_pack_kernel,
        out_shape=jax.ShapeDtypeStruct((r_pad, 128), jnp.int32),
        grid_spec=pltpu.PrefetchScalarGridSpec(
            num_scalar_prefetch=0,
            grid=(nblocks,),
            in_specs=[
                pl.BlockSpec(memory_space=pltpu.MemorySpace.SMEM),   # (3, 2) scalars
                pl.BlockSpec((2, tr, 128), lambda i: (0, i, 0)),
            ],
            out_specs=pl.BlockSpec((tr, 128), lambda i: (i, 0)),
        ),
        compiler_params=pltpu.CompilerParams(
            dimension_semantics=("parallel",),
            vmem_limit_bytes=VMEM_LIMIT),
    )(mix.astype(jnp.float32), conc_slab)


# ----------------------------- JAX glue (tiny linalg / percentiles) -----------------------------

def macenko_normalize(img_chw):
    """Replicates TorchMacenkoNormalizer.normalize(I)[0] for a (3, H, W) float image in [0,255]."""
    c, h, w = img_chw.shape
    n = h * w
    tr, r_pad, nb_half = _plan_layout(n)
    n_pad = r_pad * 128

    # Pad with 255 -> OD < beta, so padded pixels are transparent (excluded from stats/phi).
    img2d = img_chw.reshape(c, n)
    img_slab = jnp.pad(img2d, ((0, 0), (0, n_pad - n)),
                       constant_values=255.0).reshape(c, r_pad, 128)

    # --- pass 1: OD + masked covariance partial sums --------------------------------
    od, stats = od_and_stats(img_slab, tr, nb_half)
    sums = jnp.sum(stats, axis=(0, 2, 3))                       # (10,) -- 80 KB slab only
    s2 = jnp.stack([jnp.stack([sums[0], sums[1], sums[2]]),
                    jnp.stack([sums[1], sums[3], sums[4]]),
                    jnp.stack([sums[2], sums[4], sums[5]])])    # masked sum OD OD^T
    s1 = sums[6:9]                                              # masked sum OD
    cnt = sums[9]                                               # masked pixel count
    n_mask = jnp.maximum(cnt, 2.0)                              # guard fully-transparent tiles
    cov = (s2 - jnp.outer(s1, s1) / n_mask) / (n_mask - 1.0)    # == cov(ODhat.T)

    _, eigvecs = jnp.linalg.eigh(cov)                           # ascending eigenvalues
    eigvecs = eigvecs[:, 1:3].astype(jnp.float32)               # (3, 2): two largest

    # --- pass 2 (fused): phi plane with +BIG sentinel for transparent pixels ----------
    phi_plane = compute_phi(eigvecs.T, od, tr).reshape(n_pad)

    # kth-value percentiles over the M kept pixels via O(N) top_k selection (no full sort).
    ksel = max(2, min(n_pad, 2 + (max(n - 1, 1) + 99) // 100))          # static ~1% bound
    small_asc = -jax.lax.top_k(-phi_plane, ksel)[0]                     # ksel smallest phi
    large_desc = jax.lax.top_k(
        jnp.where(phi_plane > 0.5 * BIG, -BIG, phi_plane), ksel)[0]     # ksel largest phi

    m_eff = jnp.maximum(cnt.astype(jnp.int32), 1)
    mf = (m_eff - 1).astype(jnp.float32)
    idx_min = jnp.round(0.01 * ALPHA * mf).astype(jnp.int32)                          # k1 - 1
    idx_max = (m_eff - 1) - jnp.round(0.01 * (100.0 - ALPHA) * mf).astype(jnp.int32)  # M - k2
    min_phi = jnp.take(small_asc, jnp.clip(idx_min, 0, ksel - 1))
    max_phi = jnp.take(large_desc, jnp.clip(idx_max, 0, ksel - 1))

    v_min = eigvecs @ jnp.stack([jnp.cos(min_phi), jnp.sin(min_phi)])
    v_max = eigvecs @ jnp.stack([jnp.cos(max_phi), jnp.sin(max_phi)])
    he_a = jnp.stack([v_min, v_max], axis=1)
    he_b = jnp.stack([v_max, v_min], axis=1)
    HE = jnp.where(v_min[0] > v_max[0], he_a, he_b)             # (3, 2)

    # lstsq(HE, OD.T).solution == (HE^T HE)^-1 HE^T OD.T for full column rank
    h_pinv = jnp.linalg.solve(HE.T @ HE, HE.T).astype(jnp.float32)   # (2, 3)

    # --- pass 3: concentrations -------------------------------------------------------
    conc = concentrations(h_pinv, od, tr, n)                    # (2, r_pad, 128); pads = -BIG

    # 99th percentile of C over all N real pixels (static k) via top_k selection.
    k99 = 1 + int(round(0.99 * (n - 1)))
    m99 = n - k99 + 1
    max_c = jax.lax.top_k(conc.reshape(2, n_pad), m99)[0][:, m99 - 1]   # (2,)
    ratio = max_c / MAX_C_REF
    mix = HE_REF / ratio[None, :]                               # fold C2 = C / ratio into mixing

    # --- pass 4: reconstruction, one packed int32 per pixel ----------------------------
    packed = reconstruct_packed(mix, conc, tr)                  # (r_pad, 128) int32
    flat = packed.reshape(n_pad)[:n]
    # TODO(synk): the byte unpack + (N,3)->(H,W,3) relayout stays as fused XLA ops
    # (lane-sparse re-layout has no efficient Pallas form).
    rgb = jnp.stack([flat & 0xFF, (flat >> 8) & 0xFF, (flat >> 16) & 0xFF], axis=-1)
    return rgb.reshape(h, w, c)                                 # == Inorm.T.reshape(h, w, c).int()


class ColorNormalizerPallas:
    """Pallas port of wsidata ColorNormalizer (default method='macenko')."""

    def __init__(self, method="macenko"):
        if method != "macenko":
            # TODO(synk): reinhard / multi_macenko / macenko_aug variants not ported.
            raise NotImplementedError(f"Requested method '{method}' not implemented")
        self.method = method
        self._fn = jax.jit(self._normalize)

    @staticmethod
    def _normalize(t):
        # transform(): scale to [0, 255] if the image looks like it is in [0, 1]
        t = jnp.where(jnp.max(t) <= 1.0, t * 255.0, t)
        return macenko_normalize(t)

    def __repr__(self):
        return f"ColorNormalizer(method='{self.method}')"

    def __call__(self, img):
        return self._fn(jnp.asarray(img, dtype=jnp.float32))


if __name__ == "__main__":
    key = jax.random.PRNGKey(0)
    # CHW image like torchvision ToTensor() output, values in [0, 1) -> transform scales by 255.
    img = jax.random.uniform(key, (3, 16, 16), dtype=jnp.float32)

    model = ColorNormalizerPallas(method="macenko")
    out = model(img)
    out = jax.block_until_ready(out)

    assert out.shape == (16, 16, 3), out.shape
    assert out.dtype == jnp.int32, out.dtype
    print("KERNEL_OK")
</pallas_src>

<mosaic_0001>
module attributes {stable_mosaic.version = 11 : i64} {
  func.func @_od_stats_kernel(%arg0: i32, %arg1: i32, %arg2: memref<3x8x128xf32, #tpu.memory_space<vmem>>, %arg3: memref<3x8x128xf32, #tpu.memory_space<vmem>>, %arg4: memref<1x10x8x128xf32, #tpu.memory_space<vmem>>) attributes {dimension_semantics = [#tpu.dimension_semantics<parallel>, #tpu.dimension_semantics<arbitrary>], iteration_bounds = array<i64: 2, 1>, scalar_prefetch = 0 : i64, scratch_operands = 0 : i64, tpu.core_type = #tpu.core_type<tc>, window_params = [{transform_indices = @transform_0, window_bounds = array<i64: 3, 8, 128>}, {transform_indices = @transform_1, window_bounds = array<i64: 3, 8, 128>}, {transform_indices = @transform_2, window_bounds = array<i64: 1, 10, 8, 128>}]} {
    %c0_i32 = arith.constant 0 : i32
    %0 = arith.cmpi eq, %arg1, %c0_i32 : i32
    %1 = arith.extui %0 : i1 to i32
    %c0_i32_0 = arith.constant 0 : i32
    %2 = arith.cmpi ne, %1, %c0_i32_0 : i32
    scf.if %2 {
      %cst_80 = arith.constant 0.000000e+00 : f32
      %93 = vector.broadcast %cst_80 : f32 to vector<1x10x8x128xf32>
      %c0_81 = arith.constant 0 : index
      %c0_82 = arith.constant 0 : index
      %c0_83 = arith.constant 0 : index
      %c0_84 = arith.constant 0 : index
      %94 = vector.load %arg4[%c0_81, %c0_82, %c0_83, %c0_84] : memref<1x10x8x128xf32, #tpu.memory_space<vmem>>, vector<1x10x8x128xf32>
      tpu.vector_store %arg4[%c0_81, %c0_82, %c0_83, %c0_84], %93 {strides = array<i32>} : memref<1x10x8x128xf32, #tpu.memory_space<vmem>>, vector<1x10x8x128xf32>,
    } else {
    }
    %c0 = arith.constant 0 : index
    %c0_1 = arith.constant 0 : index
    %c0_2 = arith.constant 0 : index
    %3 = vector.load %arg2[%c0, %c0_1, %c0_2] : memref<3x8x128xf32, #tpu.memory_space<vmem>>, vector<3x8x128xf32>
    %cst = arith.constant 1.000000e+00 : f32
    %4 = vector.broadcast %cst : f32 to vector<3x8x128xf32>
    %5 = arith.addf %3, %4 : vector<3x8x128xf32>
    %cst_3 = arith.constant 0.00416666688 : f32
    %6 = vector.broadcast %cst_3 : f32 to vector<3x8x128xf32>
    %7 = arith.mulf %5, %6 : vector<3x8x128xf32>
    %8 = math.log %7 : vector<3x8x128xf32>
    %cst_4 = arith.constant 0.000000e+00 : f32
    %9 = vector.broadcast %cst_4 : f32 to vector<3x8x128xf32>
    %10 = arith.subf %9, %8 : vector<3x8x128xf32>
    %c0_5 = arith.constant 0 : index
    %c0_6 = arith.constant 0 : index
    %c0_7 = arith.constant 0 : index
    %11 = vector.load %arg3[%c0_5, %c0_6, %c0_7] : memref<3x8x128xf32, #tpu.memory_space<vmem>>, vector<3x8x128xf32>
    tpu.vector_store %arg3[%c0_5, %c0_6, %c0_7], %10 {strides = array<i32>} : memref<3x8x128xf32, #tpu.memory_space<vmem>>, vector<3x8x128xf32>,
    %12 = vector.extract_strided_slice %10 {offsets = [0, 0, 0], sizes = [1, 8, 128], strides = [1, 1, 1]} : vector<3x8x128xf32> to vector<1x8x128xf32>
    %13 = vector.shape_cast %12 : vector<1x8x128xf32> to vector<8x128xf32>
    %14 = vector.extract_strided_slice %10 {offsets = [1, 0, 0], sizes = [1, 8, 128], strides = [1, 1, 1]} : vector<3x8x128xf32> to vector<1x8x128xf32>
    %15 = vector.shape_cast %14 : vector<1x8x128xf32> to vector<8x128xf32>
    %16 = vector.extract_strided_slice %10 {offsets = [2, 0, 0], sizes = [1, 8, 128], strides = [1, 1, 1]} : vector<3x8x128xf32> to vector<1x8x128xf32>
    %17 = vector.shape_cast %16 : vector<1x8x128xf32> to vector<8x128xf32>
    %18 = arith.minimumf %13, %15 : vector<8x128xf32>
    %19 = arith.minimumf %18, %17 : vector<8x128xf32>
    %cst_8 = arith.constant 1.500000e-01 : f32
    %20 = vector.broadcast %cst_8 : f32 to vector<8x128xf32>
    %21 = arith.cmpf oge, %19, %20 : vector<8x128xf32>
    %22 = arith.extui %21 : vector<8x128xi1> to vector<8x128xi32>
    %23 = arith.sitofp %22 : vector<8x128xi32> to vector<8x128xf32>
    %24 = arith.mulf %23, %13 : vector<8x128xf32>
    %25 = arith.mulf %23, %15 : vector<8x128xf32>
    %26 = arith.mulf %23, %17 : vector<8x128xf32>
    %c0_9 = arith.constant 0 : index
    %c0_10 = arith.constant 0 : index
    %c0_11 = arith.constant 0 : index
    %c0_12 = arith.constant 0 : index
    %27 = vector.load %arg4[%c0_9, %c0_10, %c0_11, %c0_12] : memref<1x10x8x128xf32, #tpu.memory_space<vmem>>, vector<1x1x8x128xf32>
    %28 = vector.shape_cast %27 : vector<1x1x8x128xf32> to vector<8x128xf32>
    %29 = arith.mulf %24, %13 : vector<8x128xf32>
    %30 = arith.addf %28, %29 : vector<8x128xf32>
    %c0_13 = arith.constant 0 : index
    %c0_14 = arith.constant 0 : index
    %c0_15 = arith.constant 0 : index
    %c0_16 = arith.constant 0 : index
    %31 = vector.load %arg4[%c0_13, %c0_14, %c0_15, %c0_16] : memref<1x10x8x128xf32, #tpu.memory_space<vmem>>, vector<1x1x8x128xf32>
    %32 = vector.shape_cast %31 : vector<1x1x8x128xf32> to vector<8x128xf32>
    %33 = vector.shape_cast %30 : vector<8x128xf32> to vector<1x1x8x128xf32>
    tpu.vector_store %arg4[%c0_13, %c0_14, %c0_15, %c0_16], %33 {strides = array<i32>} : memref<1x10x8x128xf32, #tpu.memory_space<vmem>>, vector<1x1x8x128xf32>,
    %c0_17 = arith.constant 0 : index
    %c1 = arith.constant 1 : index
    %c0_18 = arith.constant 0 : index
    %c0_19 = arith.constant 0 : index
    %34 = vector.load %arg4[%c0_17, %c1, %c0_18, %c0_19] : memref<1x10x8x128xf32, #tpu.memory_space<vmem>>, vector<1x1x8x128xf32>
    %35 = vector.shape_cast %34 : vector<1x1x8x128xf32> to vector<8x128xf32>
    %36 = arith.mulf %24, %15 : vector<8x128xf32>
    %37 = arith.addf %35, %36 : vector<8x128xf32>
    %c0_20 = arith.constant 0 : index
    %c1_21 = arith.constant 1 : index
    %c0_22 = arith.constant 0 : index
    %c0_23 = arith.constant 0 : index
    %38 = vector.load %arg4[%c0_20, %c1_21, %c0_22, %c0_23] : memref<1x10x8x128xf32, #tpu.memory_space<vmem>>, vector<1x1x8x128xf32>
    %39 = vector.shape_cast %38 : vector<1x1x8x128xf32> to vector<8x128xf32>
    %40 = vector.shape_cast %37 : vector<8x128xf32> to vector<1x1x8x128xf32>
    tpu.vector_store %arg4[%c0_20, %c1_21, %c0_22, %c0_23], %40 {strides = array<i32>} : memref<1x10x8x128xf32, #tpu.memory_space<vmem>>, vector<1x1x8x128xf32>,
    %c0_24 = arith.constant 0 : index
    %c2 = arith.constant 2 : index
    %c0_25 = arith.constant 0 : index
    %c0_26 = arith.constant 0 : index
    %41 = vector.load %arg4[%c0_24, %c2, %c0_25, %c0_26] : memref<1x10x8x128xf32, #tpu.memory_space<vmem>>, vector<1x1x8x128xf32>
    %42 = vector.shape_cast %41 : vector<1x1x8x128xf32> to vector<8x128xf32>
    %43 = arith.mulf %24, %17 : vector<8x128xf32>
    %44 = arith.addf %42, %43 : vector<8x128xf32>
    %c0_27 = arith.constant 0 : index
    %c2_28 = arith.constant 2 : index
    %c0_29 = arith.constant 0 : index
    %c0_30 = arith.constant 0 : index
    %45 = vector.load %arg4[%c0_27, %c2_28, %c0_29, %c0_30] : memref<1x10x8x128xf32, #tpu.memory_space<vmem>>, vector<1x1x8x128xf32>
    %46 = vector.shape_cast %45 : vector<1x1x8x128xf32> to vector<8x128xf32>
    %47 = vector.shape_cast %44 : vector<8x128xf32> to vector<1x1x8x128xf32>
    tpu.vector_store %arg4[%c0_27, %c2_28, %c0_29, %c0_30], %47 {strides = array<i32>} : memref<1x10x8x128xf32, #tpu.memory_space<vmem>>, vector<1x1x8x128xf32>,
    %c0_31 = arith.constant 0 : index
    %c3 = arith.constant 3 : index
    %c0_32 = arith.constant 0 : index
    %c0_33 = arith.constant 0 : index
    %48 = vector.load %arg4[%c0_31, %c3, %c0_32, %c0_33] : memref<1x10x8x128xf32, #tpu.memory_space<vmem>>, vector<1x1x8x128xf32>
    %49 = vector.shape_cast %48 : vector<1x1x8x128xf32> to vector<8x128xf32>
    %50 = arith.mulf %25, %15 : vector<8x128xf32>
    %51 = arith.addf %49, %50 : vector<8x128xf32>
    %c0_34 = arith.constant 0 : index
    %c3_35 = arith.constant 3 : index
    %c0_36 = arith.constant 0 : index
    %c0_37 = arith.constant 0 : index
    %52 = vector.load %arg4[%c0_34, %c3_35, %c0_36, %c0_37] : memref<1x10x8x128xf32, #tpu.memory_space<vmem>>, vector<1x1x8x128xf32>
    %53 = vector.shape_cast %52 : vector<1x1x8x128xf32> to vector<8x128xf32>
    %54 = vector.shape_cast %51 : vector<8x128xf32> to vector<1x1x8x128xf32>
    tpu.vector_store %arg4[%c0_34, %c3_35, %c0_36, %c0_37], %54 {strides = array<i32>} : memref<1x10x8x128xf32, #tpu.memory_space<vmem>>, vector<1x1x8x128xf32>,
    %c0_38 = arith.constant 0 : index
    %c4 = arith.constant 4 : index
    %c0_39 = arith.constant 0 : index
    %c0_40 = arith.constant 0 : index
    %55 = vector.load %arg4[%c0_38, %c4, %c0_39, %c0_40] : memref<1x10x8x128xf32, #tpu.memory_space<vmem>>, vector<1x1x8x128xf32>
    %56 = vector.shape_cast %55 : vector<1x1x8x128xf32> to vector<8x128xf32>
    %57 = arith.mulf %25, %17 : vector<8x128xf32>
    %58 = arith.addf %56, %57 : vector<8x128xf32>
    %c0_41 = arith.constant 0 : index
    %c4_42 = arith.constant 4 : index
    %c0_43 = arith.constant 0 : index
    %c0_44 = arith.constant 0 : index
    %59 = vector.load %arg4[%c0_41, %c4_42, %c0_43, %c0_44] : memref<1x10x8x128xf32, #tpu.memory_space<vmem>>, vector<1x1x8x128xf32>
    %60 = vector.shape_cast %59 : vector<1x1x8x128xf32> to vector<8x128xf32>
    %61 = vector.shape_cast %58 : vector<8x128xf32> to vector<1x1x8x128xf32>
    tpu.vector_store %arg4[%c0_41, %c4_42, %c0_43, %c0_44], %61 {strides = array<i32>} : memref<1x10x8x128xf32, #tpu.memory_space<vmem>>, vector<1x1x8x128xf32>,
    %c0_45 = arith.constant 0 : index
    %c5 = arith.constant 5 : index
    %c0_46 = arith.constant 0 : index
    %c0_47 = arith.constant 0 : index
    %62 = vector.load %arg4[%c0_45, %c5, %c0_46, %c0_47] : memref<1x10x8x128xf32, #tpu.memory_space<vmem>>, vector<1x1x8x128xf32>
    %63 = vector.shape_cast %62 : vector<1x1x8x128xf32> to vector<8x128xf32>
    %64 = arith.mulf %26, %17 : vector<8x128xf32>
    %65 = arith.addf %63, %64 : vector<8x128xf32>
    %c0_48 = arith.constant 0 : index
    %c5_49 = arith.constant 5 : index
    %c0_50 = arith.constant 0 : index
    %c0_51 = arith.constant 0 : index
    %66 = vector.load %arg4[%c0_48, %c5_49, %c0_50, %c0_51] : memref<1x10x8x128xf32, #tpu.memory_space<vmem>>, vector<1x1x8x128xf32>
    %67 = vector.shape_cast %66 : vector<1x1x8x128xf32> to vector<8x128xf32>
    %68 = vector.shape_cast %65 : vector<8x128xf32> to vector<1x1x8x128xf32>
    tpu.vector_store %arg4[%c0_48, %c5_49, %c0_50, %c0_51], %68 {strides = array<i32>} : memref<1x10x8x128xf32, #tpu.memory_space<vmem>>, vector<1x1x8x128xf32>,
    %c0_52 = arith.constant 0 : index
    %c6 = arith.constant 6 : index
    %c0_53 = arith.constant 0 : index
    %c0_54 = arith.constant 0 : index
    %69 = vector.load %arg4[%c0_52, %c6, %c0_53, %c0_54] : memref<1x10x8x128xf32, #tpu.memory_space<vmem>>, vector<1x1x8x128xf32>
    %70 = vector.shape_cast %69 : vector<1x1x8x128xf32> to vector<8x128xf32>
    %71 = arith.addf %70, %24 : vector<8x128xf32>
    %c0_55 = arith.constant 0 : index
    %c6_56 = arith.constant 6 : index
    %c0_57 = arith.constant 0 : index
    %c0_58 = arith.constant 0 : index
    %72 = vector.load %arg4[%c0_55, %c6_56, %c0_57, %c0_58] : memref<1x10x8x128xf32, #tpu.memory_space<vmem>>, vector<1x1x8x128xf32>
    %73 = vector.shape_cast %72 : vector<1x1x8x128xf32> to vector<8x128xf32>
    %74 = vector.shape_cast %71 : vector<8x128xf32> to vector<1x1x8x128xf32>
    tpu.vector_store %arg4[%c0_55, %c6_56, %c0_57, %c0_58], %74 {strides = array<i32>} : memref<1x10x8x128xf32, #tpu.memory_space<vmem>>, vector<1x1x8x128xf32>,
    %c0_59 = arith.constant 0 : index
    %c7 = arith.constant 7 : index
    %c0_60 = arith.constant 0 : index
    %c0_61 = arith.constant 0 : index
    %75 = vector.load %arg4[%c0_59, %c7, %c0_60, %c0_61] : memref<1x10x8x128xf32, #tpu.memory_space<vmem>>, vector<1x1x8x128xf32>
    %76 = vector.shape_cast %75 : vector<1x1x8x128xf32> to vector<8x128xf32>
    %77 = arith.addf %76, %25 : vector<8x128xf32>
    %c0_62 = arith.constant 0 : index
    %c7_63 = arith.constant 7 : index
    %c0_64 = arith.constant 0 : index
    %c0_65 = arith.constant 0 : index
    %78 = vector.load %arg4[%c0_62, %c7_63, %c0_64, %c0_65] : memref<1x10x8x128xf32, #tpu.memory_space<vmem>>, vector<1x1x8x128xf32>
    %79 = vector.shape_cast %78 : vector<1x1x8x128xf32> to vector<8x128xf32>
    %80 = vector.shape_cast %77 : vector<8x128xf32> to vector<1x1x8x128xf32>
    tpu.vector_store %arg4[%c0_62, %c7_63, %c0_64, %c0_65], %80 {strides = array<i32>} : memref<1x10x8x128xf32, #tpu.memory_space<vmem>>, vector<1x1x8x128xf32>,
    %c0_66 = arith.constant 0 : index
    %c8 = arith.constant 8 : index
    %c0_67 = arith.constant 0 : index
    %c0_68 = arith.constant 0 : index
    %81 = vector.load %arg4[%c0_66, %c8, %c0_67, %c0_68] : memref<1x10x8x128xf32, #tpu.memory_space<vmem>>, vector<1x1x8x128xf32>
    %82 = vector.shape_cast %81 : vector<1x1x8x128xf32> to vector<8x128xf32>
    %83 = arith.addf %82, %26 : vector<8x128xf32>
    %c0_69 = arith.constant 0 : index
    %c8_70 = arith.constant 8 : index
    %c0_71 = arith.constant 0 : index
    %c0_72 = arith.constant 0 : index
    %84 = vector.load %arg4[%c0_69, %c8_70, %c0_71, %c0_72] : memref<1x10x8x128xf32, #tpu.memory_space<vmem>>, vector<1x1x8x128xf32>
    %85 = vector.shape_cast %84 : vector<1x1x8x128xf32> to vector<8x128xf32>
    %86 = vector.shape_cast %83 : vector<8x128xf32> to vector<1x1x8x128xf32>
    tpu.vector_store %arg4[%c0_69, %c8_70, %c0_71, %c0_72], %86 {strides = array<i32>} : memref<1x10x8x128xf32, #tpu.memory_space<vmem>>, vector<1x1x8x128xf32>,
    %c0_73 = arith.constant 0 : index
    %c9 = arith.constant 9 : index
    %c0_74 = arith.constant 0 : index
    %c0_75 = arith.constant 0 : index
    %87 = vector.load %arg4[%c0_73, %c9, %c0_74, %c0_75] : memref<1x10x8x128xf32, #tpu.memory_space<vmem>>, vector<1x1x8x128xf32>
    %88 = vector.shape_cast %87 : vector<1x1x8x128xf32> to vector<8x128xf32>
    %89 = arith.addf %88, %23 : vector<8x128xf32>
    %c0_76 = arith.constant 0 : index
    %c9_77 = arith.constant 9 : index
    %c0_78 = arith.constant 0 : index
    %c0_79 = arith.constant 0 : index
    %90 = vector.load %arg4[%c0_76, %c9_77, %c0_78, %c0_79] : memref<1x10x8x128xf32, #tpu.memory_space<vmem>>, vector<1x1x8x128xf32>
    %91 = vector.shape_cast %90 : vector<1x1x8x128xf32> to vector<8x128xf32>
    %92 = vector.shape_cast %89 : vector<8x128xf32> to vector<1x1x8x128xf32>
    tpu.vector_store %arg4[%c0_76, %c9_77, %c0_78, %c0_79], %92 {strides = array<i32>} : memref<1x10x8x128xf32, #tpu.memory_space<vmem>>, vector<1x1x8x128xf32>,
    return
  }
  func.func @transform_0(%arg0: i32, %arg1: i32) -> (i32, i32, i32) {
    %c1_i32 = arith.constant 1 : i32
    %0 = arith.muli %arg0, %c1_i32 : i32
    %1 = arith.addi %0, %arg1 : i32
    %c0_i32 = arith.constant 0 : i32
    %c0_i32_0 = arith.constant 0 : i32
    %c0_i32_1 = arith.constant 0 : i32
    return %c0_i32, %1, %c0_i32_0 : i32, i32, i32
  }
  func.func @transform_1(%arg0: i32, %arg1: i32) -> (i32, i32, i32) {
    %c1_i32 = arith.constant 1 : i32
    %0 = arith.muli %arg0, %c1_i32 : i32
    %1 = arith.addi %0, %arg1 : i32
    %c0_i32 = arith.constant 0 : i32
    %c0_i32_0 = arith.constant 0 : i32
    %c0_i32_1 = arith.constant 0 : i32
    return %c0_i32, %1, %c0_i32_0 : i32, i32, i32
  }
  func.func @transform_2(%arg0: i32, %arg1: i32) -> (i32, i32, i32, i32) {
    %c0_i32 = arith.constant 0 : i32
    %c0_i32_0 = arith.constant 0 : i32
    %c0_i32_1 = arith.constant 0 : i32
    %c0_i32_2 = arith.constant 0 : i32
    return %arg0, %c0_i32, %c0_i32_0, %c0_i32_1 : i32, i32, i32, i32
  }
}

module attributes {stable_mosaic.version = 11 : i64} {
  func.func @_phi_kernel(%arg0: i32, %arg1: memref<2x3xf32, #tpu.memory_space<smem>>, %arg2: memref<3x8x128xf32, #tpu.memory_space<vmem>>, %arg3: memref<8x128xf32, #tpu.memory_space<vmem>>) attributes {dimension_semantics = [#tpu.dimension_semantics<parallel>], iteration_bounds = array<i64: 2>, scalar_prefetch = 0 : i64, scratch_operands = 0 : i64, tpu.core_type = #tpu.core_type<tc>, window_params = [{transform_indices = @transform_0, window_bounds = array<i64: 2, 3>}, {transform_indices = @transform_1, window_bounds = array<i64: 3, 8, 128>}, {transform_indices = @transform_2, window_bounds = array<i64: 8, 128>}]} {
    %c0 = arith.constant 0 : index
    %c0_0 = arith.constant 0 : index
    %c0_1 = arith.constant 0 : index
    %0 = vector.load %arg2[%c0, %c0_0, %c0_1] : memref<3x8x128xf32, #tpu.memory_space<vmem>>, vector<3x8x128xf32>
    %1 = vector.extract_strided_slice %0 {offsets = [0, 0, 0], sizes = [1, 8, 128], strides = [1, 1, 1]} : vector<3x8x128xf32> to vector<1x8x128xf32>
    %2 = vector.shape_cast %1 : vector<1x8x128xf32> to vector<8x128xf32>
    %3 = vector.extract_strided_slice %0 {offsets = [1, 0, 0], sizes = [1, 8, 128], strides = [1, 1, 1]} : vector<3x8x128xf32> to vector<1x8x128xf32>
    %4 = vector.shape_cast %3 : vector<1x8x128xf32> to vector<8x128xf32>
    %5 = arith.minimumf %2, %4 : vector<8x128xf32>
    %6 = vector.extract_strided_slice %0 {offsets = [2, 0, 0], sizes = [1, 8, 128], strides = [1, 1, 1]} : vector<3x8x128xf32> to vector<1x8x128xf32>
    %7 = vector.shape_cast %6 : vector<1x8x128xf32> to vector<8x128xf32>
    %8 = arith.minimumf %5, %7 : vector<8x128xf32>
    %cst = arith.constant 1.500000e-01 : f32
    %9 = vector.broadcast %cst : f32 to vector<8x128xf32>
    %10 = arith.cmpf oge, %8, %9 : vector<8x128xf32>
    %c0_2 = arith.constant 0 : index
    %c0_3 = arith.constant 0 : index
    %11 = memref.load %arg1[%c0_2, %c0_3] : memref<2x3xf32, #tpu.memory_space<smem>>
    %12 = vector.extract_strided_slice %0 {offsets = [0, 0, 0], sizes = [1, 8, 128], strides = [1, 1, 1]} : vector<3x8x128xf32> to vector<1x8x128xf32>
    %13 = vector.shape_cast %12 : vector<1x8x128xf32> to vector<8x128xf32>
    %14 = vector.broadcast %11 : f32 to vector<8x128xf32>
    %15 = arith.mulf %14, %13 : vector<8x128xf32>
    %c0_4 = arith.constant 0 : index
    %c1 = arith.constant 1 : index
    %16 = memref.load %arg1[%c0_4, %c1] : memref<2x3xf32, #tpu.memory_space<smem>>
    %17 = vector.extract_strided_slice %0 {offsets = [1, 0, 0], sizes = [1, 8, 128], strides = [1, 1, 1]} : vector<3x8x128xf32> to vector<1x8x128xf32>
    %18 = vector.shape_cast %17 : vector<1x8x128xf32> to vector<8x128xf32>
    %19 = vector.broadcast %16 : f32 to vector<8x128xf32>
    %20 = arith.mulf %19, %18 : vector<8x128xf32>
    %21 = arith.addf %15, %20 : vector<8x128xf32>
    %c0_5 = arith.constant 0 : index
    %c2 = arith.constant 2 : index
    %22 = memref.load %arg1[%c0_5, %c2] : memref<2x3xf32, #tpu.memory_space<smem>>
    %23 = vector.extract_strided_slice %0 {offsets = [2, 0, 0], sizes = [1, 8, 128], strides = [1, 1, 1]} : vector<3x8x128xf32> to vector<1x8x128xf32>
    %24 = vector.shape_cast %23 : vector<1x8x128xf32> to vector<8x128xf32>
    %25 = vector.broadcast %22 : f32 to vector<8x128xf32>
    %26 = arith.mulf %25, %24 : vector<8x128xf32>
    %27 = arith.addf %21, %26 : vector<8x128xf32>
    %c1_6 = arith.constant 1 : index
    %c0_7 = arith.constant 0 : index
    %28 = memref.load %arg1[%c1_6, %c0_7] : memref<2x3xf32, #tpu.memory_space<smem>>
    %29 = vector.extract_strided_slice %0 {offsets = [0, 0, 0], sizes = [1, 8, 128], strides = [1, 1, 1]} : vector<3x8x128xf32> to vector<1x8x128xf32>
    %30 = vector.shape_cast %29 : vector<1x8x128xf32> to vector<8x128xf32>
    %31 = vector.broadcast %28 : f32 to vector<8x128xf32>
    %32 = arith.mulf %31, %30 : vector<8x128xf32>
    %c1_8 = arith.constant 1 : index
    %c1_9 = arith.constant 1 : index
    %33 = memref.load %arg1[%c1_8, %c1_9] : memref<2x3xf32, #tpu.memory_space<smem>>
    %34 = vector.extract_strided_slice %0 {offsets = [1, 0, 0], sizes = [1, 8, 128], strides = [1, 1, 1]} : vector<3x8x128xf32> to vector<1x8x128xf32>
    %35 = vector.shape_cast %34 : vector<1x8x128xf32> to vector<8x128xf32>
    %36 = vector.broadcast %33 : f32 to vector<8x128xf32>
    %37 = arith.mulf %36, %35 : vector<8x128xf32>
    %38 = arith.addf %32, %37 : vector<8x128xf32>
    %c1_10 = arith.constant 1 : index
    %c2_11 = arith.constant 2 : index
    %39 = memref.load %arg1[%c1_10, %c2_11] : memref<2x3xf32, #tpu.memory_space<smem>>
    %40 = vector.extract_strided_slice %0 {offsets = [2, 0, 0], sizes = [1, 8, 128], strides = [1, 1, 1]} : vector<3x8x128xf32> to vector<1x8x128xf32>
    %41 = vector.shape_cast %40 : vector<1x8x128xf32> to vector<8x128xf32>
    %42 = vector.broadcast %39 : f32 to vector<8x128xf32>
    %43 = arith.mulf %42, %41 : vector<8x128xf32>
    %44 = arith.addf %38, %43 : vector<8x128xf32>
    %45 = math.absf %27 : vector<8x128xf32>
    %46 = math.absf %44 : vector<8x128xf32>
    %47 = arith.maximumf %45, %46 : vector<8x128xf32>
    %48 = arith.minimumf %45, %46 : vector<8x128xf32>
    %cst_12 = arith.constant 1.000000e-30 : f32
    %49 = vector.broadcast %cst_12 : f32 to vector<8x128xf32>
    %50 = arith.maximumf %47, %49 : vector<8x128xf32>
    %51 = arith.divf %48, %50 : vector<8x128xf32>
    %cst_13 = arith.constant 0.414213568 : f32
    %52 = vector.broadcast %cst_13 : f32 to vector<8x128xf32>
    %53 = arith.cmpf ogt, %51, %52 : vector<8x128xf32>
    %cst_14 = arith.constant 1.000000e+00 : f32
    %54 = vector.broadcast %cst_14 : f32 to vector<8x128xf32>
    %55 = arith.subf %51, %54 : vector<8x128xf32>
    %cst_15 = arith.constant 1.000000e+00 : f32
    %56 = vector.broadcast %cst_15 : f32 to vector<8x128xf32>
    %57 = arith.addf %51, %56 : vector<8x128xf32>
    %58 = arith.divf %55, %57 : vector<8x128xf32>
    %59 = arith.select %53, %58, %51 : vector<8x128xi1>, vector<8x128xf32>
    %60 = arith.mulf %59, %59 : vector<8x128xf32>
    %cst_16 = arith.constant 0.0805374458 : f32
    %61 = vector.broadcast %cst_16 : f32 to vector<8x128xf32>
    %62 = arith.mulf %61, %60 : vector<8x128xf32>
    %cst_17 = arith.constant 0.138776854 : f32
    %63 = vector.broadcast %cst_17 : f32 to vector<8x128xf32>
    %64 = arith.subf %62, %63 : vector<8x128xf32>
    %65 = arith.mulf %64, %60 : vector<8x128xf32>
    %cst_18 = arith.constant 0.199777111 : f32
    %66 = vector.broadcast %cst_18 : f32 to vector<8x128xf32>
    %67 = arith.addf %65, %66 : vector<8x128xf32>
    %68 = arith.mulf %67, %60 : vector<8x128xf32>
    %cst_19 = arith.constant 0.333329499 : f32
    %69 = vector.broadcast %cst_19 : f32 to vector<8x128xf32>
    %70 = arith.subf %68, %69 : vector<8x128xf32>
    %71 = arith.mulf %70, %60 : vector<8x128xf32>
    %72 = arith.mulf %71, %59 : vector<8x128xf32>
    %73 = arith.addf %72, %59 : vector<8x128xf32>
    %cst_20 = arith.constant 0.785398185 : f32
    %74 = vector.broadcast %cst_20 : f32 to vector<8x128xf32>
    %75 = arith.addf %73, %74 : vector<8x128xf32>
    %76 = arith.select %53, %75, %73 : vector<8x128xi1>, vector<8x128xf32>
    %77 = arith.cmpf ogt, %46, %45 : vector<8x128xf32>
    %cst_21 = arith.constant 1.57079637 : f32
    %78 = vector.broadcast %cst_21 : f32 to vector<8x128xf32>
    %79 = arith.subf %78, %76 : vector<8x128xf32>
    %80 = arith.select %77, %79, %76 : vector<8x128xi1>, vector<8x128xf32>
    %cst_22 = arith.constant 0.000000e+00 : f32
    %81 = vector.broadcast %cst_22 : f32 to vector<8x128xf32>
    %82 = arith.cmpf olt, %27, %81 : vector<8x128xf32>
    %cst_23 = arith.constant 3.14159274 : f32
    %83 = vector.broadcast %cst_23 : f32 to vector<8x128xf32>
    %84 = arith.subf %83, %80 : vector<8x128xf32>
    %85 = arith.select %82, %84, %80 : vector<8x128xi1>, vector<8x128xf32>
    %cst_24 = arith.constant 0.000000e+00 : f32
    %86 = vector.broadcast %cst_24 : f32 to vector<8x128xf32>
    %87 = arith.cmpf olt, %44, %86 : vector<8x128xf32>
    %cst_25 = arith.constant 0.000000e+00 : f32
    %88 = vector.broadcast %cst_25 : f32 to vector<8x128xf32>
    %89 = arith.subf %88, %85 : vector<8x128xf32>
    %90 = arith.select %87, %89, %85 : vector<8x128xi1>, vector<8x128xf32>
    %cst_26 = arith.constant 1.000000e+30 : f32
    %91 = vector.broadcast %cst_26 : f32 to vector<8x128xf32>
    %92 = arith.select %10, %90, %91 : vector<8x128xi1>, vector<8x128xf32>
    %c0_27 = arith.constant 0 : index
    %c0_28 = arith.constant 0 : index
    %93 = vector.load %arg3[%c0_27, %c0_28] : memref<8x128xf32, #tpu.memory_space<vmem>>, vector<8x128xf32>
    tpu.vector_store %arg3[%c0_27, %c0_28], %92 {strides = array<i32>} : memref<8x128xf32, #tpu.memory_space<vmem>>, vector<8x128xf32>,
    return
  }
  func.func @transform_0(%arg0: i32) -> (i32, i32) {
    %c0_i32 = arith.constant 0 : i32
    %c0_i32_0 = arith.constant 0 : i32
    %c0_i32_1 = arith.constant 0 : i32
    return %c0_i32, %c0_i32_0 : i32, i32
  }
  func.func @transform_1(%arg0: i32) -> (i32, i32, i32) {
    %c0_i32 = arith.constant 0 : i32
    %c0_i32_0 = arith.constant 0 : i32
    %c0_i32_1 = arith.constant 0 : i32
    return %c0_i32, %arg0, %c0_i32_0 : i32, i32, i32
  }
  func.func @transform_2(%arg0: i32) -> (i32, i32) {
    %c0_i32 = arith.constant 0 : i32
    %c0_i32_0 = arith.constant 0 : i32
    return %arg0, %c0_i32 : i32, i32
  }
}

module attributes {stable_mosaic.version = 11 : i64} {
  func.func @kernel(%arg0: i32, %arg1: memref<2x3xf32, #tpu.memory_space<smem>>, %arg2: memref<3x8x128xf32, #tpu.memory_space<vmem>>, %arg3: memref<2x8x128xf32, #tpu.memory_space<vmem>>) attributes {dimension_semantics = [#tpu.dimension_semantics<parallel>], iteration_bounds = array<i64: 2>, scalar_prefetch = 0 : i64, scratch_operands = 0 : i64, tpu.core_type = #tpu.core_type<tc>, window_params = [{transform_indices = @transform_0, window_bounds = array<i64: 2, 3>}, {transform_indices = @transform_1, window_bounds = array<i64: 3, 8, 128>}, {transform_indices = @transform_2, window_bounds = array<i64: 2, 8, 128>}]} {
    %c0 = arith.constant 0 : index
    %c0_0 = arith.constant 0 : index
    %c0_1 = arith.constant 0 : index
    %0 = vector.load %arg2[%c0, %c0_0, %c0_1] : memref<3x8x128xf32, #tpu.memory_space<vmem>>, vector<3x8x128xf32>
    %1 = tpu.iota {dimensions = array<i32: 0>} : vector<8x128xi32>
    %c8_i32 = arith.constant 8 : i32
    %2 = arith.muli %arg0, %c8_i32 : i32
    %3 = vector.broadcast %2 : i32 to vector<8x128xi32>
    %4 = arith.addi %1, %3 : vector<8x128xi32>
    %5 = tpu.iota {dimensions = array<i32: 1>} : vector<8x128xi32>
    %c128_i32 = arith.constant 128 : i32
    %6 = vector.broadcast %c128_i32 : i32 to vector<8x128xi32>
    %7 = arith.muli %4, %6 : vector<8x128xi32>
    %8 = arith.addi %7, %5 : vector<8x128xi32>
    %c256_i32 = arith.constant 256 : i32
    %9 = vector.broadcast %c256_i32 : i32 to vector<8x128xi32>
    %10 = arith.cmpi slt, %8, %9 : vector<8x128xi32>
    %c0_2 = arith.constant 0 : index
    %c0_3 = arith.constant 0 : index
    %11 = memref.load %arg1[%c0_2, %c0_3] : memref<2x3xf32, #tpu.memory_space<smem>>
    %12 = vector.extract_strided_slice %0 {offsets = [0, 0, 0], sizes = [1, 8, 128], strides = [1, 1, 1]} : vector<3x8x128xf32> to vector<1x8x128xf32>
    %13 = vector.shape_cast %12 : vector<1x8x128xf32> to vector<8x128xf32>
    %14 = vector.broadcast %11 : f32 to vector<8x128xf32>
    %15 = arith.mulf %14, %13 : vector<8x128xf32>
    %c0_4 = arith.constant 0 : index
    %c1 = arith.constant 1 : index
    %16 = memref.load %arg1[%c0_4, %c1] : memref<2x3xf32, #tpu.memory_space<smem>>
    %17 = vector.extract_strided_slice %0 {offsets = [1, 0, 0], sizes = [1, 8, 128], strides = [1, 1, 1]} : vector<3x8x128xf32> to vector<1x8x128xf32>
    %18 = vector.shape_cast %17 : vector<1x8x128xf32> to vector<8x128xf32>
    %19 = vector.broadcast %16 : f32 to vector<8x128xf32>
    %20 = arith.mulf %19, %18 : vector<8x128xf32>
    %21 = arith.addf %15, %20 : vector<8x128xf32>
    %c0_5 = arith.constant 0 : index
    %c2 = arith.constant 2 : index
    %22 = memref.load %arg1[%c0_5, %c2] : memref<2x3xf32, #tpu.memory_space<smem>>
    %23 = vector.extract_strided_slice %0 {offsets = [2, 0, 0], sizes = [1, 8, 128], strides = [1, 1, 1]} : vector<3x8x128xf32> to vector<1x8x128xf32>
    %24 = vector.shape_cast %23 : vector<1x8x128xf32> to vector<8x128xf32>
    %25 = vector.broadcast %22 : f32 to vector<8x128xf32>
    %26 = arith.mulf %25, %24 : vector<8x128xf32>
    %27 = arith.addf %21, %26 : vector<8x128xf32>
    %cst = arith.constant -1.000000e+30 : f32
    %28 = vector.broadcast %cst : f32 to vector<8x128xf32>
    %29 = arith.select %10, %27, %28 : vector<8x128xi1>, vector<8x128xf32>
    %c0_6 = arith.constant 0 : index
    %c0_7 = arith.constant 0 : index
    %c0_8 = arith.constant 0 : index
    %30 = vector.load %arg3[%c0_6, %c0_7, %c0_8] : memref<2x8x128xf32, #tpu.memory_space<vmem>>, vector<1x8x128xf32>
    %31 = vector.shape_cast %30 : vector<1x8x128xf32> to vector<8x128xf32>
    %32 = vector.shape_cast %29 : vector<8x128xf32> to vector<1x8x128xf32>
    tpu.vector_store %arg3[%c0_6, %c0_7, %c0_8], %32 {strides = array<i32>} : memref<2x8x128xf32, #tpu.memory_space<vmem>>, vector<1x8x128xf32>,
    %c1_9 = arith.constant 1 : index
    %c0_10 = arith.constant 0 : index
    %33 = memref.load %arg1[%c1_9, %c0_10] : memref<2x3xf32, #tpu.memory_space<smem>>
    %34 = vector.extract_strided_slice %0 {offsets = [0, 0, 0], sizes = [1, 8, 128], strides = [1, 1, 1]} : vector<3x8x128xf32> to vector<1x8x128xf32>
    %35 = vector.shape_cast %34 : vector<1x8x128xf32> to vector<8x128xf32>
    %36 = vector.broadcast %33 : f32 to vector<8x128xf32>
    %37 = arith.mulf %36, %35 : vector<8x128xf32>
    %c1_11 = arith.constant 1 : index
    %c1_12 = arith.constant 1 : index
    %38 = memref.load %arg1[%c1_11, %c1_12] : memref<2x3xf32, #tpu.memory_space<smem>>
    %39 = vector.extract_strided_slice %0 {offsets = [1, 0, 0], sizes = [1, 8, 128], strides = [1, 1, 1]} : vector<3x8x128xf32> to vector<1x8x128xf32>
    %40 = vector.shape_cast %39 : vector<1x8x128xf32> to vector<8x128xf32>
    %41 = vector.broadcast %38 : f32 to vector<8x128xf32>
    %42 = arith.mulf %41, %40 : vector<8x128xf32>
    %43 = arith.addf %37, %42 : vector<8x128xf32>
    %c1_13 = arith.constant 1 : index
    %c2_14 = arith.constant 2 : index
    %44 = memref.load %arg1[%c1_13, %c2_14] : memref<2x3xf32, #tpu.memory_space<smem>>
    %45 = vector.extract_strided_slice %0 {offsets = [2, 0, 0], sizes = [1, 8, 128], strides = [1, 1, 1]} : vector<3x8x128xf32> to vector<1x8x128xf32>
    %46 = vector.shape_cast %45 : vector<1x8x128xf32> to vector<8x128xf32>
    %47 = vector.broadcast %44 : f32 to vector<8x128xf32>
    %48 = arith.mulf %47, %46 : vector<8x128xf32>
    %49 = arith.addf %43, %48 : vector<8x128xf32>
    %cst_15 = arith.constant -1.000000e+30 : f32
    %50 = vector.broadcast %cst_15 : f32 to vector<8x128xf32>
    %51 = arith.select %10, %49, %50 : vector<8x128xi1>, vector<8x128xf32>
    %c1_16 = arith.constant 1 : index
    %c0_17 = arith.constant 0 : index
    %c0_18 = arith.constant 0 : index
    %52 = vector.load %arg3[%c1_16, %c0_17, %c0_18] : memref<2x8x128xf32, #tpu.memory_space<vmem>>, vector<1x8x128xf32>
    %53 = vector.shape_cast %52 : vector<1x8x128xf32> to vector<8x128xf32>
    %54 = vector.shape_cast %51 : vector<8x128xf32> to vector<1x8x128xf32>
    tpu.vector_store %arg3[%c1_16, %c0_17, %c0_18], %54 {strides = array<i32>} : memref<2x8x128xf32, #tpu.memory_space<vmem>>, vector<1x8x128xf32>,
    return
  }
  func.func @transform_0(%arg0: i32) -> (i32, i32) {
    %c0_i32 = arith.constant 0 : i32
    %c0_i32_0 = arith.constant 0 : i32
    %c0_i32_1 = arith.constant 0 : i32
    return %c0_i32, %c0_i32_0 : i32, i32
  }
  func.func @transform_1(%arg0: i32) -> (i32, i32, i32) {
    %c0_i32 = arith.constant 0 : i32
    %c0_i32_0 = arith.constant 0 : i32
    %c0_i32_1 = arith.constant 0 : i32
    return %c0_i32, %arg0, %c0_i32_0 : i32, i32, i32
  }
  func.func @transform_2(%arg0: i32) -> (i32, i32, i32) {
    %c0_i32 = arith.constant 0 : i32
    %c0_i32_0 = arith.constant 0 : i32
    %c0_i32_1 = arith.constant 0 : i32
    return %c0_i32, %arg0, %c0_i32_0 : i32, i32, i32
  }
}

module attributes {stable_mosaic.version = 11 : i64} {
  func.func @_recon_pack_kernel(%arg0: i32, %arg1: memref<3x2xf32, #tpu.memory_space<smem>>, %arg2: memref<2x8x128xf32, #tpu.memory_space<vmem>>, %arg3: memref<8x128xi32, #tpu.memory_space<vmem>>) attributes {dimension_semantics = [#tpu.dimension_semantics<parallel>], iteration_bounds = array<i64: 2>, scalar_prefetch = 0 : i64, scratch_operands = 0 : i64, tpu.core_type = #tpu.core_type<tc>, window_params = [{transform_indices = @transform_0, window_bounds = array<i64: 3, 2>}, {transform_indices = @transform_1, window_bounds = array<i64: 2, 8, 128>}, {transform_indices = @transform_2, window_bounds = array<i64: 8, 128>}]} {
    %c0 = arith.constant 0 : index
    %c0_0 = arith.constant 0 : index
    %c0_1 = arith.constant 0 : index
    %0 = vector.load %arg2[%c0, %c0_0, %c0_1] : memref<2x8x128xf32, #tpu.memory_space<vmem>>, vector<2x8x128xf32>
    %c0_2 = arith.constant 0 : index
    %c0_3 = arith.constant 0 : index
    %1 = memref.load %arg1[%c0_2, %c0_3] : memref<3x2xf32, #tpu.memory_space<smem>>
    %2 = vector.extract_strided_slice %0 {offsets = [0, 0, 0], sizes = [1, 8, 128], strides = [1, 1, 1]} : vector<2x8x128xf32> to vector<1x8x128xf32>
    %3 = vector.shape_cast %2 : vector<1x8x128xf32> to vector<8x128xf32>
    %4 = vector.broadcast %1 : f32 to vector<8x128xf32>
    %5 = arith.mulf %4, %3 : vector<8x128xf32>
    %c0_4 = arith.constant 0 : index
    %c1 = arith.constant 1 : index
    %6 = memref.load %arg1[%c0_4, %c1] : memref<3x2xf32, #tpu.memory_space<smem>>
    %7 = vector.extract_strided_slice %0 {offsets = [1, 0, 0], sizes = [1, 8, 128], strides = [1, 1, 1]} : vector<2x8x128xf32> to vector<1x8x128xf32>
    %8 = vector.shape_cast %7 : vector<1x8x128xf32> to vector<8x128xf32>
    %9 = vector.broadcast %6 : f32 to vector<8x128xf32>
    %10 = arith.mulf %9, %8 : vector<8x128xf32>
    %11 = arith.addf %5, %10 : vector<8x128xf32>
    %cst = arith.constant 0.000000e+00 : f32
    %12 = vector.broadcast %cst : f32 to vector<8x128xf32>
    %13 = arith.subf %12, %11 : vector<8x128xf32>
    %14 = math.exp %13 : vector<8x128xf32>
    %cst_5 = arith.constant 2.400000e+02 : f32
    %15 = vector.broadcast %cst_5 : f32 to vector<8x128xf32>
    %16 = arith.mulf %15, %14 : vector<8x128xf32>
    %cst_6 = arith.constant 2.550000e+02 : f32
    %17 = vector.broadcast %cst_6 : f32 to vector<8x128xf32>
    %18 = arith.minimumf %16, %17 : vector<8x128xf32>
    %cst_7 = arith.constant 0.000000e+00 : f32
    %19 = vector.broadcast %cst_7 : f32 to vector<8x128xf32>
    %20 = arith.maximumf %18, %19 : vector<8x128xf32>
    %21 = arith.fptosi %20 : vector<8x128xf32> to vector<8x128xi32>
    %c1_i32 = arith.constant 1 : i32
    %22 = vector.broadcast %c1_i32 : i32 to vector<8x128xi32>
    %23 = arith.muli %21, %22 : vector<8x128xi32>
    %c1_8 = arith.constant 1 : index
    %c0_9 = arith.constant 0 : index
    %24 = memref.load %arg1[%c1_8, %c0_9] : memref<3x2xf32, #tpu.memory_space<smem>>
    %25 = vector.extract_strided_slice %0 {offsets = [0, 0, 0], sizes = [1, 8, 128], strides = [1, 1, 1]} : vector<2x8x128xf32> to vector<1x8x128xf32>
    %26 = vector.shape_cast %25 : vector<1x8x128xf32> to vector<8x128xf32>
    %27 = vector.broadcast %24 : f32 to vector<8x128xf32>
    %28 = arith.mulf %27, %26 : vector<8x128xf32>
    %c1_10 = arith.constant 1 : index
    %c1_11 = arith.constant 1 : index
    %29 = memref.load %arg1[%c1_10, %c1_11] : memref<3x2xf32, #tpu.memory_space<smem>>
    %30 = vector.extract_strided_slice %0 {offsets = [1, 0, 0], sizes = [1, 8, 128], strides = [1, 1, 1]} : vector<2x8x128xf32> to vector<1x8x128xf32>
    %31 = vector.shape_cast %30 : vector<1x8x128xf32> to vector<8x128xf32>
    %32 = vector.broadcast %29 : f32 to vector<8x128xf32>
    %33 = arith.mulf %32, %31 : vector<8x128xf32>
    %34 = arith.addf %28, %33 : vector<8x128xf32>
    %cst_12 = arith.constant 0.000000e+00 : f32
    %35 = vector.broadcast %cst_12 : f32 to vector<8x128xf32>
    %36 = arith.subf %35, %34 : vector<8x128xf32>
    %37 = math.exp %36 : vector<8x128xf32>
    %cst_13 = arith.constant 2.400000e+02 : f32
    %38 = vector.broadcast %cst_13 : f32 to vector<8x128xf32>
    %39 = arith.mulf %38, %37 : vector<8x128xf32>
    %cst_14 = arith.constant 2.550000e+02 : f32
    %40 = vector.broadcast %cst_14 : f32 to vector<8x128xf32>
    %41 = arith.minimumf %39, %40 : vector<8x128xf32>
    %cst_15 = arith.constant 0.000000e+00 : f32
    %42 = vector.broadcast %cst_15 : f32 to vector<8x128xf32>
    %43 = arith.maximumf %41, %42 : vector<8x128xf32>
    %44 = arith.fptosi %43 : vector<8x128xf32> to vector<8x128xi32>
    %c256_i32 = arith.constant 256 : i32
    %45 = vector.broadcast %c256_i32 : i32 to vector<8x128xi32>
    %46 = arith.muli %44, %45 : vector<8x128xi32>
    %47 = arith.addi %23, %46 : vector<8x128xi32>
    %c2 = arith.constant 2 : index
    %c0_16 = arith.constant 0 : index
    %48 = memref.load %arg1[%c2, %c0_16] : memref<3x2xf32, #tpu.memory_space<smem>>
    %49 = vector.extract_strided_slice %0 {offsets = [0, 0, 0], sizes = [1, 8, 128], strides = [1, 1, 1]} : vector<2x8x128xf32> to vector<1x8x128xf32>
    %50 = vector.shape_cast %49 : vector<1x8x128xf32> to vector<8x128xf32>
    %51 = vector.broadcast %48 : f32 to vector<8x128xf32>
    %52 = arith.mulf %51, %50 : vector<8x128xf32>
    %c2_17 = arith.constant 2 : index
    %c1_18 = arith.constant 1 : index
    %53 = memref.load %arg1[%c2_17, %c1_18] : memref<3x2xf32, #tpu.memory_space<smem>>
    %54 = vector.extract_strided_slice %0 {offsets = [1, 0, 0], sizes = [1, 8, 128], strides = [1, 1, 1]} : vector<2x8x128xf32> to vector<1x8x128xf32>
    %55 = vector.shape_cast %54 : vector<1x8x128xf32> to vector<8x128xf32>
    %56 = vector.broadcast %53 : f32 to vector<8x128xf32>
    %57 = arith.mulf %56, %55 : vector<8x128xf32>
    %58 = arith.addf %52, %57 : vector<8x128xf32>
    %cst_19 = arith.constant 0.000000e+00 : f32
    %59 = vector.broadcast %cst_19 : f32 to vector<8x128xf32>
    %60 = arith.subf %59, %58 : vector<8x128xf32>
    %61 = math.exp %60 : vector<8x128xf32>
    %cst_20 = arith.constant 2.400000e+02 : f32
    %62 = vector.broadcast %cst_20 : f32 to vector<8x128xf32>
    %63 = arith.mulf %62, %61 : vector<8x128xf32>
    %cst_21 = arith.constant 2.550000e+02 : f32
    %64 = vector.broadcast %cst_21 : f32 to vector<8x128xf32>
    %65 = arith.minimumf %63, %64 : vector<8x128xf32>
    %cst_22 = arith.constant 0.000000e+00 : f32
    %66 = vector.broadcast %cst_22 : f32 to vector<8x128xf32>
    %67 = arith.maximumf %65, %66 : vector<8x128xf32>
    %68 = arith.fptosi %67 : vector<8x128xf32> to vector<8x128xi32>
    %c65536_i32 = arith.constant 65536 : i32
    %69 = vector.broadcast %c65536_i32 : i32 to vector<8x128xi32>
    %70 = arith.muli %68, %69 : vector<8x128xi32>
    %71 = arith.addi %47, %70 : vector<8x128xi32>
    %c0_23 = arith.constant 0 : index
    %c0_24 = arith.constant 0 : index
    %72 = vector.load %arg3[%c0_23, %c0_24] : memref<8x128xi32, #tpu.memory_space<vmem>>, vector<8x128xi32>
    tpu.vector_store %arg3[%c0_23, %c0_24], %71 {strides = array<i32>} : memref<8x128xi32, #tpu.memory_space<vmem>>, vector<8x128xi32>,
    return
  }
  func.func @transform_0(%arg0: i32) -> (i32, i32) {
    %c0_i32 = arith.constant 0 : i32
    %c0_i32_0 = arith.constant 0 : i32
    %c0_i32_1 = arith.constant 0 : i32
    return %c0_i32, %c0_i32_0 : i32, i32
  }
  func.func @transform_1(%arg0: i32) -> (i32, i32, i32) {
    %c0_i32 = arith.constant 0 : i32
    %c0_i32_0 = arith.constant 0 : i32
    %c0_i32_1 = arith.constant 0 : i32
    return %c0_i32, %arg0, %c0_i32_0 : i32, i32, i32
  }
  func.func @transform_2(%arg0: i32) -> (i32, i32) {
    %c0_i32 = arith.constant 0 : i32
    %c0_i32_0 = arith.constant 0 : i32
    return %arg0, %c0_i32 : i32, i32
  }
}

</mosaic_0001>

<llo_original>
// kernel: custom-call.10
$region0: #{custom-call.10}
  %s0 = inlined_call_operand.vmem [shape: f32[2,2], index: 0, kind: input, shape index: {}]
  %s1 = inlined_call_operand.vmem [shape: f32[2,2], index: 1, kind: input, shape index: {}]
  %s2 = inlined_call_operand.vmem [shape: f32[2,2], index: 2, kind: input, shape index: {}]
  %s3 = inlined_call_operand.vmem [shape: f32[2,2], index: 3, kind: input, shape index: {}]
  %s4 = inlined_call_operand.vmem [shape: f32[2], index: 4, kind: output, shape index: {0}]
  %s5 = inlined_call_operand.vmem [shape: f32[2], index: 5, kind: output, shape index: {1}]
  %s6 = inlined_call_operand.vmem [shape: f32[2,2], index: 6, kind: output, shape index: {2}]
  %s7 = inlined_call_operand.vmem [shape: f32[2,2], index: 7, kind: output, shape index: {3}]
  %s8 = inlined_call_operand.vmem [shape: f32[2,2], index: 8, kind: output, shape index: {4}]
  %s9 = inlined_call_operand.vmem [shape: f32[2,2], index: 9, kind: output, shape index: {5}]
  %10 = xla_tuple %s4, %s5, %s6, %s7, %s8, %s9
  $region1: #{custom-call.10} parent=0
    #allocation0 [shape = 'u8[4096]{0}', space=vmem, size = 0x1000, scoped, tag = 'operand span for operand 0']
    #allocation1 [shape = 'u8[1024]{0}', space=vmem, size = 0x400, scoped, tag = 'packed  for operand 0']
    #allocation2 [shape = 'u8[4096]{0}', space=vmem, size = 0x1000, scoped, tag = 'operand span for operand 1']
    #allocation3 [shape = 'u8[1024]{0}', space=vmem, size = 0x400, scoped, tag = 'packed  for operand 1']
    #allocation4 [shape = 'u8[4096]{0}', space=vmem, size = 0x1000, scoped, tag = 'operand span for operand 2']
    #allocation5 [shape = 'u8[1024]{0}', space=vmem, size = 0x400, scoped, tag = 'packed  for operand 2']
    #allocation6 [shape = 'u8[4096]{0}', space=vmem, size = 0x1000, scoped, tag = 'operand span for operand 3']
    #allocation7 [shape = 'u8[1024]{0}', space=vmem, size = 0x400, scoped, tag = 'packed  for operand 3']
    #allocation8 [shape = 'u8[4096]{0}', space=vmem, size = 0x1000, scoped, tag = 'operand span for operand 4']
    #allocation9 [shape = 'u8[512]{0}', space=vmem, size = 0x400, scoped, tag = 'packed  for operand 4']
    #allocation10 [shape = 'u8[4096]{0}', space=vmem, size = 0x1000, scoped, tag = 'operand span for operand 5']
    #allocation11 [shape = 'u8[512]{0}', space=vmem, size = 0x400, scoped, tag = 'packed  for operand 5']
    #allocation12 [shape = 'u8[4096]{0}', space=vmem, size = 0x1000, scoped, tag = 'operand span for operand 6']
    #allocation13 [shape = 'u8[1024]{0}', space=vmem, size = 0x400, scoped, tag = 'packed  for operand 6']
    #allocation14 [shape = 'u8[4096]{0}', space=vmem, size = 0x1000, scoped, tag = 'operand span for operand 7']
    #allocation15 [shape = 'u8[1024]{0}', space=vmem, size = 0x400, scoped, tag = 'packed  for operand 7']
    #allocation16 [shape = 'u8[4096]{0}', space=vmem, size = 0x1000, scoped, tag = 'operand span for operand 8']
    #allocation17 [shape = 'u8[1024]{0}', space=vmem, size = 0x400, scoped, tag = 'packed  for operand 8']
    #allocation18 [shape = 'u8[4096]{0}', space=vmem, size = 0x1000, scoped, tag = 'operand span for operand 9']
    #allocation19 [shape = 'u8[1024]{0}', space=vmem, size = 0x400, scoped, tag = 'packed  for operand 9']
    #allocation20 [shape = 'f32[2,2]{1,0}', space=vmem, size = 0x1000, scoped, tag = 'a top-left matrix']
    #allocation21 [shape = 'f32[2,2]{1,0}', space=vmem, size = 0x1000, scoped, tag = 'a top-right matrix']
    #allocation22 [shape = 'f32[2,2]{1,0}', space=vmem, size = 0x1000, scoped, tag = 'a bottom-left matrix']
    #allocation23 [shape = 'f32[2,2]{1,0}', space=vmem, size = 0x1000, scoped, tag = 'a bottom-right matrix']
    %p12 = scmp.gt.s32.totalorder 2, 0
    // Predicated region
    $region2: #{custom-call.10} parent=1 // pred_check
      %p13 = pneg %p12
    $region3: #{custom-call.10} parent=1 // pred_check_branch
      %15 = sbr.rel (%p13) target = $region5
    $region4: #{custom-call.10} parent=1 // pred_region
      %s16 = sshra.s32 2, 3
      %p17 = scmp.gt.s32.totalorder %s16, 0
      // Predicated region
      $region6: #{custom-call.10} parent=4 // pred_check
        %p18 = pneg %p17
      $region7: #{custom-call.10} parent=4 // pred_check_branch
        %20 = sbr.rel (%p18) target = $region9
      $region8: #{custom-call.10} parent=4 // pred_region
        %s21 = ssub.s32 %s16, 1
        %s22 = smul.u32 %s21, 128
        %s23 = sshra.s32 %s22, 4
        %s24 = scalar_lea.vmem %s0, %s23
        %v25 = vld [vmem:[%s0] sm:$0xff]
        // While loop
        $region10: #{custom-call.10} parent=8 // loop_pre_header
          _
        $region11: #{custom-call.10} parent=8 // loop_header
          %s26 = sphi %s0, %s48
          %s27 = sphi [#allocation1], %s49
          %v28 = vphi %v25, %v50
          %s29 = ssub.s32 %s24, 64
          %p30 = scmp.gt.s32.totalorder %s26, %s29
        $region12: #{custom-call.10} parent=8 // loop_header_branch
          %32 = sbr.rel (%p30) target = $region16
        $region13: #{custom-call.10} parent=8 // loop_body
          %33 = vst [vmem:[%s27] sm:$0xff] %v28
          %v34 = vld [vmem:[%s26 + $0x8] sm:$0xff]
          %35 = vst [vmem:[%s27 + $0x8] sm:$0xff] %v34
          %v36 = vld [vmem:[%s26 + $0x10] sm:$0xff]
          %37 = vst [vmem:[%s27 + $0x10] sm:$0xff] %v36
          %v38 = vld [vmem:[%s26 + $0x18] sm:$0xff]
          %39 = vst [vmem:[%s27 + $0x18] sm:$0xff] %v38
          %v40 = vld [vmem:[%s26 + $0x20] sm:$0xff]
          %41 = vst [vmem:[%s27 + $0x20] sm:$0xff] %v40
          %v42 = vld [vmem:[%s26 + $0x28] sm:$0xff]
          %43 = vst [vmem:[%s27 + $0x28] sm:$0xff] %v42
          %v44 = vld [vmem:[%s26 + $0x30] sm:$0xff]
          %45 = vst [vmem:[%s27 + $0x30] sm:$0xff] %v44
          %v46 = vld [vmem:[%s26 + $0x38] sm:$0xff]
          %47 = vst [vmem:[%s27 + $0x38] sm:$0xff] %v46
        $region14: #{custom-call.10} parent=8 // loop_footer
          %s48 = scalar_lea.vmem %s26, 64
          %s49 = scalar_lea.vmem %s27, 64
          %v50 = vld [vmem:[%s26 + $0x40] sm:$0xff]
        $region15: #{custom-call.10} parent=8 // loop_footer_branch
          %51 = sbr.rel target = $region11
        $region16: #{custom-call.10} parent=8 // loop_exit
          _
        // While loop
        $region17: #{custom-call.10} parent=8 // loop_pre_header
          _
        $region18: #{custom-call.10} parent=8 // loop_header
          %s52 = sphi %s26, %s60
          %s53 = sphi %s27, %s61
          %v54 = vphi %v28, %v54
          %p55 = scmp.gt.s32.totalorder %s52, %s24
        $region19: #{custom-call.10} parent=8 // loop_header_branch
          %57 = sbr.rel (%p55) target = $region23
        $region20: #{custom-call.10} parent=8 // loop_body
          %v58 = vld [vmem:[%s52] sm:$0xff]
          %59 = vst [vmem:[%s53] sm:$0xff] %v58
        $region21: #{custom-call.10} parent=8 // loop_footer
          %s60 = scalar_lea.vmem %s52, 8
          %s61 = scalar_lea.vmem %s53, 8
        $region22: #{custom-call.10} parent=8 // loop_footer_branch
          %62 = sbr.rel target = $region18
        $region23: #{custom-call.10} parent=8 // loop_exit
          _
      $region9: #{custom-call.10} parent=4 // pred_fallthru
        _
      %s63 = sand.u32 2, 7
      %s64 = sshllo.u32 0, %s63
      %s65 = smul.u32 %s16, 128
      %s66 = sshra.s32 %s65, 4
      %s67 = scalar_lea.vmem [#allocation1], %s66
      %s68 = smul.u32 %s16, 128
      %s69 = sshra.s32 %s68, 4
      %s70 = scalar_lea.vmem %s0, %s69
      %v71 = vld [vmem:[%s70] sm:%s64]
      %72 = vst [vmem:[%s67] sm:%s64] %v71
    $region5: #{custom-call.10} parent=1 // pred_fallthru
      _
    %p74 = scmp.gt.s32.totalorder 2, 0
    // Predicated region
    $region24: #{custom-call.10} parent=1 // pred_check
      %p75 = pneg %p74
    $region25: #{custom-call.10} parent=1 // pred_check_branch
      %77 = sbr.rel (%p75) target = $region27
    $region26: #{custom-call.10} parent=1 // pred_region
      %s78 = sshra.s32 2, 3
      %p79 = scmp.gt.s32.totalorder %s78, 0
      // Predicated region
      $region28: #{custom-call.10} parent=26 // pred_check
        %p80 = pneg %p79
      $region29: #{custom-call.10} parent=26 // pred_check_branch
        %82 = sbr.rel (%p80) target = $region31
      $region30: #{custom-call.10} parent=26 // pred_region
        %s83 = ssub.s32 %s78, 1
        %s84 = smul.u32 %s83, 128
        %s85 = sshra.s32 %s84, 4
        %s86 = scalar_lea.vmem %s1, %s85
        %v87 = vld [vmem:[%s1] sm:$0xff]
        // While loop
        $region32: #{custom-call.10} parent=30 // loop_pre_header
          _
        $region33: #{custom-call.10} parent=30 // loop_header
          %s88 = sphi %s1, %s110
          %s89 = sphi [#allocation3], %s111
          %v90 = vphi %v87, %v112
          %s91 = ssub.s32 %s86, 64
          %p92 = scmp.gt.s32.totalorder %s88, %s91
        $region34: #{custom-call.10} parent=30 // loop_header_branch
          %94 = sbr.rel (%p92) target = $region38
        $region35: #{custom-call.10} parent=30 // loop_body
          %95 = vst [vmem:[%s89] sm:$0xff] %v90
          %v96 = vld [vmem:[%s88 + $0x8] sm:$0xff]
          %97 = vst [vmem:[%s89 + $0x8] sm:$0xff] %v96
          %v98 = vld [vmem:[%s88 + $0x10] sm:$0xff]
          %99 = vst [vmem:[%s89 + $0x10] sm:$0xff] %v98
          %v100 = vld [vmem:[%s88 + $0x18] sm:$0xff]
          %101 = vst [vmem:[%s89 + $0x18] sm:$0xff] %v100
          %v102 = vld [vmem:[%s88 + $0x20] sm:$0xff]
          %103 = vst [vmem:[%s89 + $0x20] sm:$0xff] %v102
          %v104 = vld [vmem:[%s88 + $0x28] sm:$0xff]
          %105 = vst [vmem:[%s89 + $0x28] sm:$0xff] %v104
          %v106 = vld [vmem:[%s88 + $0x30] sm:$0xff]
          %107 = vst [vmem:[%s89 + $0x30] sm:$0xff] %v106
          %v108 = vld [vmem:[%s88 + $0x38] sm:$0xff]
          %109 = vst [vmem:[%s89 + $0x38] sm:$0xff] %v108
        $region36: #{custom-call.10} parent=30 // loop_footer
          %s110 = scalar_lea.vmem %s88, 64
          %s111 = scalar_lea.vmem %s89, 64
          %v112 = vld [vmem:[%s88 + $0x40] sm:$0xff]
        $region37: #{custom-call.10} parent=30 // loop_footer_branch
          %113 = sbr.rel target = $region33
        $region38: #{custom-call.10} parent=30 // loop_exit
          _
        // While loop
        $region39: #{custom-call.10} parent=30 // loop_pre_header
          _
        $region40: #{custom-call.10} parent=30 // loop_header
          %s114 = sphi %s88, %s122
          %s115 = sphi %s89, %s123
          %v116 = vphi %v90, %v116
          %p117 = scmp.gt.s32.totalorder %s114, %s86
        $region41: #{custom-call.10} parent=30 // loop_header_branch
          %119 = sbr.rel (%p117) target = $region45
        $region42: #{custom-call.10} parent=30 // loop_body
          %v120 = vld [vmem:[%s114] sm:$0xff]
          %121 = vst [vmem:[%s115] sm:$0xff] %v120
        $region43: #{custom-call.10} parent=30 // loop_footer
          %s122 = scalar_lea.vmem %s114, 8
          %s123 = scalar_lea.vmem %s115, 8
        $region44: #{custom-call.10} parent=30 // loop_footer_branch
          %124 = sbr.rel target = $region40
        $region45: #{custom-call.10} parent=30 // loop_exit
          _
      $region31: #{custom-call.10} parent=26 // pred_fallthru
        _
      %s125 = sand.u32 2, 7
      %s126 = sshllo.u32 0, %s125
      %s127 = smul.u32 %s78, 128
      %s128 = sshra.s32 %s127, 4
      %s129 = scalar_lea.vmem [#allocation3], %s128
      %s130 = smul.u32 %s78, 128
      %s131 = sshra.s32 %s130, 4
      %s132 = scalar_lea.vmem %s1, %s131
      %v133 = vld [vmem:[%s132] sm:%s126]
      %134 = vst [vmem:[%s129] sm:%s126] %v133
    $region27: #{custom-call.10} parent=1 // pred_fallthru
      _
    %p136 = scmp.gt.s32.totalorder 2, 0
    // Predicated region
    $region46: #{custom-call.10} parent=1 // pred_check
      %p137 = pneg %p136
    $region47: #{custom-call.10} parent=1 // pred_check_branch
      %139 = sbr.rel (%p137) target = $region49
    $region48: #{custom-call.10} parent=1 // pred_region
      %s140 = sshra.s32 2, 3
      %p141 = scmp.gt.s32.totalorder %s140, 0
      // Predicated region
      $region50: #{custom-call.10} parent=48 // pred_check
        %p142 = pneg %p141
      $region51: #{custom-call.10} parent=48 // pred_check_branch
        %144 = sbr.rel (%p142) target = $region53
      $region52: #{custom-call.10} parent=48 // pred_region
        %s145 = ssub.s32 %s140, 1
        %s146 = smul.u32 %s145, 128
        %s147 = sshra.s32 %s146, 4
        %s148 = scalar_lea.vmem %s2, %s147
        %v149 = vld [vmem:[%s2] sm:$0xff]
        // While loop
        $region54: #{custom-call.10} parent=52 // loop_pre_header
          _
        $region55: #{custom-call.10} parent=52 // loop_header
          %s150 = sphi %s2, %s172
          %s151 = sphi [#allocation5], %s173
          %v152 = vphi %v149, %v174
          %s153 = ssub.s32 %s148, 64
          %p154 = scmp.gt.s32.totalorder %s150, %s153
        $region56: #{custom-call.10} parent=52 // loop_header_branch
          %156 = sbr.rel (%p154) target = $region60
        $region57: #{custom-call.10} parent=52 // loop_body
          %157 = vst [vmem:[%s151] sm:$0xff] %v152
          %v158 = vld [vmem:[%s150 + $0x8] sm:$0xff]
          %159 = vst [vmem:[%s151 + $0x8] sm:$0xff] %v158
          %v160 = vld [vmem:[%s150 + $0x10] sm:$0xff]
          %161 = vst [vmem:[%s151 + $0x10] sm:$0xff] %v160
          %v162 = vld [vmem:[%s150 + $0x18] sm:$0xff]
          %163 = vst [vmem:[%s151 + $0x18] sm:$0xff] %v162
          %v164 = vld [vmem:[%s150 + $0x20] sm:$0xff]
          %165 = vst [vmem:[%s151 + $0x20] sm:$0xff] %v164
          %v166 = vld [vmem:[%s150 + $0x28] sm:$0xff]
          %167 = vst [vmem:[%s151 + $0x28] sm:$0xff] %v166
          %v168 = vld [vmem:[%s150 + $0x30] sm:$0xff]
          %169 = vst [vmem:[%s151 + $0x30] sm:$0xff] %v168
          %v170 = vld [vmem:[%s150 + $0x38] sm:$0xff]
          %171 = vst [vmem:[%s151 + $0x38] sm:$0xff] %v170
        $region58: #{custom-call.10} parent=52 // loop_footer
          %s172 = scalar_lea.vmem %s150, 64
          %s173 = scalar_lea.vmem %s151, 64
          %v174 = vld [vmem:[%s150 + $0x40] sm:$0xff]
        $region59: #{custom-call.10} parent=52 // loop_footer_branch
          %175 = sbr.rel target = $region55
        $region60: #{custom-call.10} parent=52 // loop_exit
          _
        // While loop
        $region61: #{custom-call.10} parent=52 // loop_pre_header
          _
        $region62: #{custom-call.10} parent=52 // loop_header
          %s176 = sphi %s150, %s184
          %s177 = sphi %s151, %s185
          %v178 = vphi %v152, %v178
          %p179 = scmp.gt.s32.totalorder %s176, %s148
        $region63: #{custom-call.10} parent=52 // loop_header_branch
          %181 = sbr.rel (%p179) target = $region67
        $region64: #{custom-call.10} parent=52 // loop_body
          %v182 = vld [vmem:[%s176] sm:$0xff]
          %183 = vst [vmem:[%s177] sm:$0xff] %v182
        $region65: #{custom-call.10} parent=52 // loop_footer
          %s184 = scalar_lea.vmem %s176, 8
          %s185 = scalar_lea.vmem %s177, 8
        $region66: #{custom-call.10} parent=52 // loop_footer_branch
          %186 = sbr.rel target = $region62
        $region67: #{custom-call.10} parent=52 // loop_exit
          _
      $region53: #{custom-call.10} parent=48 // pred_fallthru
        _
      %s187 = sand.u32 2, 7
      %s188 = sshllo.u32 0, %s187
      %s189 = smul.u32 %s140, 128
      %s190 = sshra.s32 %s189, 4
      %s191 = scalar_lea.vmem [#allocation5], %s190
      %s192 = smul.u32 %s140, 128
      %s193 = sshra.s32 %s192, 4
      %s194 = scalar_lea.vmem %s2, %s193
      %v195 = vld [vmem:[%s194] sm:%s188]
      %196 = vst [vmem:[%s191] sm:%s188] %v195
    $region49: #{custom-call.10} parent=1 // pred_fallthru
      _
    %p198 = scmp.gt.s32.totalorder 2, 0
    // Predicated region
    $region68: #{custom-call.10} parent=1 // pred_check
      %p199 = pneg %p198
    $region69: #{custom-call.10} parent=1 // pred_check_branch
      %201 = sbr.rel (%p199) target = $region71
    $region70: #{custom-call.10} parent=1 // pred_region
      %s202 = sshra.s32 2, 3
      %p203 = scmp.gt.s32.totalorder %s202, 0
      // Predicated region
      $region72: #{custom-call.10} parent=70 // pred_check
        %p204 = pneg %p203
      $region73: #{custom-call.10} parent=70 // pred_check_branch
        %206 = sbr.rel (%p204) target = $region75
      $region74: #{custom-call.10} parent=70 // pred_region
        %s207 = ssub.s32 %s202, 1
        %s208 = smul.u32 %s207, 128
        %s209 = sshra.s32 %s208, 4
        %s210 = scalar_lea.vmem %s3, %s209
        %v211 = vld [vmem:[%s3] sm:$0xff]
        // While loop
        $region76: #{custom-call.10} parent=74 // loop_pre_header
          _
        $region77: #{custom-call.10} parent=74 // loop_header
          %s212 = sphi %s3, %s234
          %s213 = sphi [#allocation7], %s235
          %v214 = vphi %v211, %v236
          %s215 = ssub.s32 %s210, 64
          %p216 = scmp.gt.s32.totalorder %s212, %s215
        $region78: #{custom-call.10} parent=74 // loop_header_branch
          %218 = sbr.rel (%p216) target = $region82
        $region79: #{custom-call.10} parent=74 // loop_body
          %219 = vst [vmem:[%s213] sm:$0xff] %v214
          %v220 = vld [vmem:[%s212 + $0x8] sm:$0xff]
          %221 = vst [vmem:[%s213 + $0x8] sm:$0xff] %v220
          %v222 = vld [vmem:[%s212 + $0x10] sm:$0xff]
          %223 = vst [vmem:[%s213 + $0x10] sm:$0xff] %v222
          %v224 = vld [vmem:[%s212 + $0x18] sm:$0xff]
          %225 = vst [vmem:[%s213 + $0x18] sm:$0xff] %v224
          %v226 = vld [vmem:[%s212 + $0x20] sm:$0xff]
          %227 = vst [vmem:[%s213 + $0x20] sm:$0xff] %v226
          %v228 = vld [vmem:[%s212 + $0x28] sm:$0xff]
          %229 = vst [vmem:[%s213 + $0x28] sm:$0xff] %v228
          %v230 = vld [vmem:[%s212 + $0x30] sm:$0xff]
          %231 = vst [vmem:[%s213 + $0x30] sm:$0xff] %v230
          %v232 = vld [vmem:[%s212 + $0x38] sm:$0xff]
          %233 = vst [vmem:[%s213 + $0x38] sm:$0xff] %v232
        $region80: #{custom-call.10} parent=74 // loop_footer
          %s234 = scalar_lea.vmem %s212, 64
          %s235 = scalar_lea.vmem %s213, 64
          %v236 = vld [vmem:[%s212 + $0x40] sm:$0xff]
        $region81: #{custom-call.10} parent=74 // loop_footer_branch
          %237 = sbr.rel target = $region77
        $region82: #{custom-call.10} parent=74 // loop_exit
          _
        // While loop
        $region83: #{custom-call.10} parent=74 // loop_pre_header
          _
        $region84: #{custom-call.10} parent=74 // loop_header
          %s238 = sphi %s212, %s246
          %s239 = sphi %s213, %s247
          %v240 = vphi %v214, %v240
          %p241 = scmp.gt.s32.totalorder %s238, %s210
        $region85: #{custom-call.10} parent=74 // loop_header_branch
          %243 = sbr.rel (%p241) target = $region89
        $region86: #{custom-call.10} parent=74 // loop_body
          %v244 = vld [vmem:[%s238] sm:$0xff]
          %245 = vst [vmem:[%s239] sm:$0xff] %v244
        $region87: #{custom-call.10} parent=74 // loop_footer
          %s246 = scalar_lea.vmem %s238, 8
          %s247 = scalar_lea.vmem %s239, 8
        $region88: #{custom-call.10} parent=74 // loop_footer_branch
          %248 = sbr.rel target = $region84
        $region89: #{custom-call.10} parent=74 // loop_exit
          _
      $region75: #{custom-call.10} parent=70 // pred_fallthru
        _
      %s249 = sand.u32 2, 7
      %s250 = sshllo.u32 0, %s249
      %s251 = smul.u32 %s202, 128
      %s252 = sshra.s32 %s251, 4
      %s253 = scalar_lea.vmem [#allocation7], %s252
      %s254 = smul.u32 %s202, 128
      %s255 = sshra.s32 %s254, 4
      %s256 = scalar_lea.vmem %s3, %s255
      %v257 = vld [vmem:[%s256] sm:%s250]
      %258 = vst [vmem:[%s253] sm:%s250] %v257
    $region71: #{custom-call.10} parent=1 // pred_fallthru
      _
    %s260 = sshllo.u32 0, 2
    %v261 = vld [vmem:[#allocation1] sm:%s260]
    %262 = vst [vmem:[#allocation0] sm:%s260] %v261
    %s264 = sshllo.u32 0, 2
    %v265 = vld [vmem:[#allocation3] sm:%s264]
    %266 = vst [vmem:[#allocation2] sm:%s264] %v265
    %s268 = sshllo.u32 0, 2
    %v269 = vld [vmem:[#allocation5] sm:%s268]
    %270 = vst [vmem:[#allocation4] sm:%s268] %v269
    %s272 = sshllo.u32 0, 2
    %v273 = vld [vmem:[#allocation7] sm:%s272]
    %274 = vst [vmem:[#allocation6] sm:%s272] %v273
    %s275 = smov [#allocation20]
    %v276 = vld [vmem:[#allocation0] sm:$0xff]
    %277 = vst [vmem:[%s275] sm:$0xff] %v276
    %s278 = smov [#allocation21]
    %v279 = vld [vmem:[#allocation2] sm:$0xff]
    %280 = vst [vmem:[%s278] sm:$0xff] %v279
    %s281 = smov [#allocation22]
    %v282 = vld [vmem:[#allocation4] sm:$0xff]
    %283 = vst [vmem:[%s281] sm:$0xff] %v282
    %s284 = smov [#allocation23]
    %v285 = vld [vmem:[#allocation6] sm:$0xff]
    %286 = vst [vmem:[%s284] sm:$0xff] %v285
    %287 = vst [vmem:[#allocation12] sm:$0xff] 0.0
    %288 = vst [vmem:[#allocation14] sm:$0xff] 0.0
    %289 = vst [vmem:[#allocation16] sm:$0xff] 0.0
    %290 = vst [vmem:[#allocation18] sm:$0xff] 0.0
    %s291 = smov [#allocation12]
    %v292 = vlaneseq
    %v293 = vand.u32 %v292, 127
    %v294 = vmov %v293
    %v295 = vlaneseq
    %v296 = vshrl.u32 %v295, 7
    %v297 = vmov %v296
    %v298 = vld [vmem:[%s291] sm:$0x3]
    %vm301 = vcmp.eq.s32.totalorder %v297, %v294
    %v302 = vsel %vm301, 1.0, %v298
    %303 = vst [vmem:[%s291] sm:$0x3] %v302
    %s304 = smov [#allocation18]
    %v305 = vlaneseq
    %v306 = vand.u32 %v305, 127
    %v307 = vmov %v306
    %v308 = vlaneseq
    %v309 = vshrl.u32 %v308, 7
    %v310 = vmov %v309
    %v311 = vld [vmem:[%s304] sm:$0x3]
    %vm314 = vcmp.eq.s32.totalorder %v310, %v307
    %v315 = vsel %vm314, 1.0, %v311
    %316 = vst [vmem:[%s304] sm:$0x3] %v315
    // While loop
    $region90: #{custom-call.10} parent=1 // loop_pre_header
      _
    $region91: #{custom-call.10} parent=1 // loop_header
      %s318 = sphi 0, %s860
      %v319 = vlaneseq
      %v320 = vand.u32 %v319, 127
      %v321 = vmov %v320
      %v322 = vlaneseq
      %v323 = vshrl.u32 %v322, 7
      %v324 = vmov %v323
      %s325 = smov [#allocation20]
      %v326 = vlaneseq
      %v327 = vand.u32 %v326, 127
      %vm328 = vcmp.ge.s32.totalorder %v327, 0
      %vm329 = vcmp.lt.s32.totalorder %v327, 2
      %vm330 = vmand %vm328, %vm329
      %v331 = vld [vmem:[%s325] sm:$0x3]
      %v332 = vsel %vm330, %v331, 0.0
      %v333 = vmul.f32 %v332, %v332
      %vm336 = vcmp.eq.s32.totalorder %v324, %v321
      %v337 = vsel %vm336, 0.0, %v333
      %v338 = vlaneseq
      %v339 = vand.u32 %v338, 127
      %v340 = vmov %v339
      %v341 = vlaneseq
      %v342 = vshrl.u32 %v341, 7
      %v343 = vmov %v342
      %s344 = smov [#allocation21]
      %v345 = vlaneseq
      %v346 = vand.u32 %v345, 127
      %vm347 = vcmp.ge.s32.totalorder %v346, 0
      %vm348 = vcmp.lt.s32.totalorder %v346, 2
      %vm349 = vmand %vm347, %vm348
      %v350 = vld [vmem:[%s344] sm:$0x3]
      %v351 = vsel %vm349, %v350, 0.0
      %v352 = vmul.f32 %v351, %v351
      %v353 = vadd.f32 %v337, %v352
      %v354 = vadd.f32 %v333, %v352
      %v355 = vlaneseq
      %v356 = vand.u32 %v355, 127
      %v357 = vmov %v356
      %v358 = vlaneseq
      %v359 = vshrl.u32 %v358, 7
      %v360 = vmov %v359
      %s361 = smov [#allocation22]
      %v362 = vlaneseq
      %v363 = vand.u32 %v362, 127
      %vm364 = vcmp.ge.s32.totalorder %v363, 0
      %vm365 = vcmp.lt.s32.totalorder %v363, 2
      %vm366 = vmand %vm364, %vm365
      %v367 = vld [vmem:[%s361] sm:$0x3]
      %v368 = vsel %vm366, %v367, 0.0
      %v369 = vmul.f32 %v368, %v368
      %v370 = vadd.f32 %v353, %v369
      %v371 = vadd.f32 %v354, %v369
      %v372 = vlaneseq
      %v373 = vand.u32 %v372, 127
      %v374 = vmov %v373
      %v375 = vlaneseq
      %v376 = vshrl.u32 %v375, 7
      %v377 = vmov %v376
      %s378 = smov [#allocation23]
      %v379 = vlaneseq
      %v380 = vand.u32 %v379, 127
      %vm381 = vcmp.ge.s32.totalorder %v380, 0
      %vm382 = vcmp.lt.s32.totalorder %v380, 2
      %vm383 = vmand %vm381, %vm382
      %v384 = vld [vmem:[%s378] sm:$0x3]
      %v385 = vsel %vm383, %v384, 0.0
      %v386 = vmul.f32 %v385, %v385
      %vm389 = vcmp.eq.s32.totalorder %v377, %v374
      %v390 = vsel %vm389, 0.0, %v386
      %v391 = vadd.f32 %v370, %v390
      %v392 = vadd.f32 %v371, %v386
      %393 = vadd.xlane.f32.xlu0 %v392
      %v394 = vpop.xlane.xlu0 %393
      %v395 = vrot.slane %v394, 4
      %v396 = vadd.f32 %v394, %v395
      %v397 = vrot.slane %v396, 2
      %v398 = vadd.f32 %v396, %v397
      %v399 = vrot.slane %v398, 1
      %v400 = vadd.f32 %v398, %v399
      %401 = vadd.xlane.f32.xlu0 %v391
      %v402 = vpop.xlane.xlu0 %401
      %v403 = vrot.slane %v402, 4
      %v404 = vadd.f32 %v402, %v403
      %v405 = vrot.slane %v404, 2
      %v406 = vadd.f32 %v404, %v405
      %v407 = vrot.slane %v406, 1
      %v408 = vadd.f32 %v406, %v407
      %s409 = vtos %v408
      %s410 = vtos %v400
      %s411 = smul.f32 1e-10, %s410
      %p412 = scmp.le.f32.partialorder %s409, %s411
      %p413 = scmp.ge.s32.totalorder %s318, 15
      %p414 = por %p412, %p413
    $region92: #{custom-call.10} parent=1 // loop_header_branch
      %862 = sbr.rel (%p414) target = $region96
    $region93: #{custom-call.10} parent=1 // loop_body
      loop: start=0, step=1, limit=3
      $region97: #{custom-call.10} parent=93 // loop_pre_header
        _
      $region98: #{custom-call.10} parent=93 // loop_header
        %s416 = sphi 0, %s420
        %p417 = scmp.ge.s32.totalorder %s416, 3
      $region99: #{custom-call.10} parent=93 // loop_header_branch
        %419 = sbr.rel (%p417) target = $region103
      $region100: #{custom-call.10} parent=93 // loop_body
        #allocation24 [shape = 'f32[1024]{0}', space=vmem, size = 0x1000, scoped, tag = 'a_tl_diag vmem']
        #allocation25 [shape = 'f32[1024]{0}', space=vmem, size = 0x1000, scoped, tag = 'a_tr_diag vmem']
        #allocation26 [shape = 'f32[1024]{0}', space=vmem, size = 0x1000, scoped, tag = 'a_br_diag vmem']
        #allocation27 [shape = 'f32[1024]{0}', space=vmem, size = 0x1000, scoped, tag = 'rt1 vmem']
        #allocation28 [shape = 'f32[1024]{0}', space=vmem, size = 0x1000, scoped, tag = 'rt2 vmem']
        #allocation29 [shape = 'f32[1024]{0}', space=vmem, size = 0x1000, scoped, tag = 'c vmem']
        #allocation30 [shape = 'f32[1024]{0}', space=vmem, size = 0x1000, scoped, tag = 's vmem']
        #allocation31 [shape = 'f32[4096]{0}', space=vmem, size = 0x4000, scoped, tag = 'c broadcast']
        #allocation32 [shape = 'f32[4096]{0}', space=vmem, size = 0x4000, scoped, tag = 's broadcast']
        %s421 = smov [#allocation20]
        %s422 = smov [#allocation24]
        %v423 = vlaneseq
        %v424 = vand.u32 %v423, 127
        %v425 = vmov %v424
        %v426 = vlaneseq
        %v427 = vshrl.u32 %v426, 7
        %v428 = vmov %v427
        %v429 = vld [vmem:[%s421] sm:$0x3]
        %vm432 = vcmp.eq.s32.totalorder %v428, %v425
        %v433 = vsel %vm432, %v429, 0.0
        %v434 = vrot.slane %v433, 4
        %v435 = vadd.f32 %v433, %v434
        %v436 = vrot.slane %v435, 2
        %v437 = vadd.f32 %v435, %v436
        %v438 = vrot.slane %v437, 1
        %v439 = vadd.f32 %v437, %v438
        %440 = vst [vmem:[%s422] sm:$0x1] %v439
        %s441 = smov [#allocation21]
        %s442 = smov [#allocation25]
        %v443 = vlaneseq
        %v444 = vand.u32 %v443, 127
        %v445 = vmov %v444
        %v446 = vlaneseq
        %v447 = vshrl.u32 %v446, 7
        %v448 = vmov %v447
        %v449 = vld [vmem:[%s441] sm:$0x3]
        %vm452 = vcmp.eq.s32.totalorder %v448, %v445
        %v453 = vsel %vm452, %v449, 0.0
        %v454 = vrot.slane %v453, 4
        %v455 = vadd.f32 %v453, %v454
        %v456 = vrot.slane %v455, 2
        %v457 = vadd.f32 %v455, %v456
        %v458 = vrot.slane %v457, 1
        %v459 = vadd.f32 %v457, %v458
        %460 = vst [vmem:[%s442] sm:$0x1] %v459
        %s461 = smov [#allocation23]
        %s462 = smov [#allocation26]
        %v463 = vlaneseq
        %v464 = vand.u32 %v463, 127
        %v465 = vmov %v464
        %v466 = vlaneseq
        %v467 = vshrl.u32 %v466, 7
        %v468 = vmov %v467
        %v469 = vld [vmem:[%s461] sm:$0x3]
        %vm472 = vcmp.eq.s32.totalorder %v468, %v465
        %v473 = vsel %vm472, %v469, 0.0
        %v474 = vrot.slane %v473, 4
        %v475 = vadd.f32 %v473, %v474
        %v476 = vrot.slane %v475, 2
        %v477 = vadd.f32 %v475, %v476
        %v478 = vrot.slane %v477, 1
        %v479 = vadd.f32 %v477, %v478
        %480 = vst [vmem:[%s462] sm:$0x1] %v479
        %s481 = smov [#allocation29]
        %s482 = smov [#allocation30]
        %s483 = smov [#allocation24]
        %v484 = vld [vmem:[%s483] sm:$0xff]
        %s485 = smov [#allocation25]
        %v486 = vld [vmem:[%s485] sm:$0xff]
        %s487 = smov [#allocation26]
        %v488 = vld [vmem:[%s487] sm:$0xff]
        %v489 = vsub.f32 %v488, %v484
        %v490 = vmul.f32 2.0, %v486
        %v491 = vrcp.pop %v490
        %v492 = vmul.f32 %v489, %v491
        %vm493 = vcmp.ge.f32.partialorder %v492, 0.0
        %v494 = vmul.f32 %v492, %v492
        %v495 = vadd.f32 1.0, %v494
        %v496 = vrsqrt.pop %v495
        %v497 = vmul.f32 %v495, %v496
        %vm498 = vcmp.eq.f32.partialorder %v495, inf
        %v499 = vsel %vm498, %v495, %v497
        %vm500 = vcmp.eq.f32.partialorder %v495, 0.0
        %v501 = vand.u32 %v495, 2147483648
        %v502 = vsel %vm500, %v501, %v499
        %v503 = vxor.u32 %v502, 2147483648
        %v504 = vsel %vm493, %v502, %v503
        %v505 = vadd.f32 %v492, %v504
        %v506 = vrcp.pop %v505
        %v507 = vand.u32 2147483647, %v484
        %v508 = vand.u32 2147483647, %v486
        %v509 = vand.u32 2147483647, %v488
        %v510 = vmin.f32 %v507, %v509
        %v511 = vmul.f32 1.1920929e-08, %v510
        %vm512 = vcmp.le.f32.partialorder %v508, %v511
        %v513 = vsel %vm512, 0.0, %v506
        %v514 = vmul.f32 %v513, %v513
        %v515 = vadd.f32 1.0, %v514
        %v516 = vrsqrt.pop %v515
        %v517 = vmul.f32 %v513, %v516
        %v518 = vmul.f32 %v513, %v486
        %v519 = vsub.f32 %v484, %v518
        %v520 = vmul.f32 %v513, %v486
        %v521 = vadd.f32 %v488, %v520
        %s522 = smov [#allocation27]
        %523 = vst [vmem:[%s522] sm:$0xff] %v519
        %s524 = smov [#allocation28]
        %525 = vst [vmem:[%s524] sm:$0xff] %v521
        %s526 = smov %s481
        %527 = vst [vmem:[%s526] sm:$0xff] %v516
        %s528 = smov %s482
        %529 = vst [vmem:[%s528] sm:$0xff] %v517
        %s530 = smov [#allocation29]
        %v531 = vld [vmem:[%s530] ss:$0 sm:$0xff]
        %v532 = vlaneseq
        %v533 = vand.u32 %v532, 127
        %v534 = vmov %v533
        %v535 = vlaneseq
        %v536 = vshrl.u32 %v535, 7
        %v537 = vmov %v536
        %vm539 = vcmp.eq.s32.totalorder %v537, %v534
        %v540 = vsel %vm539, %v531, 0.0
        %541 = vadd.xlane.f32.xlu0 %v540
        %v542 = vpop.xlane.xlu0 %541
        %s543 = smov [#allocation31]
        %544 = vst [vmem:[%s543] sm:$0xff] %v542
        %s545 = smov [#allocation30]
        %v546 = vld [vmem:[%s545] ss:$0 sm:$0xff]
        %v547 = vlaneseq
        %v548 = vand.u32 %v547, 127
        %v549 = vmov %v548
        %v550 = vlaneseq
        %v551 = vshrl.u32 %v550, 7
        %v552 = vmov %v551
        %vm554 = vcmp.eq.s32.totalorder %v552, %v549
        %v555 = vsel %vm554, %v546, 0.0
        %556 = vadd.xlane.f32.xlu0 %v555
        %v557 = vpop.xlane.xlu0 %556
        %s558 = smov [#allocation32]
        %559 = vst [vmem:[%s558] sm:$0xff] %v557
        %s560 = smov [#allocation31]
        %v561 = vld [vmem:[%s560] sm:$0xff]
        %s562 = smov [#allocation32]
        %v563 = vld [vmem:[%s562] sm:$0xff]
        %s564 = smov [#allocation20]
        %s565 = smov [#allocation21]
        %s566 = smov [#allocation22]
        %s567 = smov [#allocation23]
        %v568 = vld [vmem:[%s564] sm:$0x3]
        %v569 = vld [vmem:[%s565] sm:$0x3]
        %v570 = vld [vmem:[%s566] sm:$0x3]
        %v571 = vld [vmem:[%s567] sm:$0x3]
        %v572 = vmul.f32 %v561, %v568
        %v573 = vmul.f32 %v563, %v570
        %v574 = vsub.f32 %v572, %v573
        %v575 = vmul.f32 %v561, %v569
        %v576 = vmul.f32 %v563, %v571
        %v577 = vsub.f32 %v575, %v576
        %v578 = vmul.f32 %v563, %v568
        %v579 = vmul.f32 %v561, %v570
        %v580 = vadd.f32 %v578, %v579
        %v581 = vmul.f32 %v563, %v569
        %v582 = vmul.f32 %v561, %v571
        %v583 = vadd.f32 %v581, %v582
        %584 = vst [vmem:[%s564] sm:$0x3] %v574
        %585 = vst [vmem:[%s565] sm:$0x3] %v577
        %586 = vst [vmem:[%s566] sm:$0x3] %v580
        %587 = vst [vmem:[%s567] sm:$0x3] %v583
        %s588 = smov [#allocation29]
        %v589 = vld [vmem:[%s588] ss:$0 sm:$0xff]
        %s590 = smov [#allocation30]
        %v591 = vld [vmem:[%s590] ss:$0 sm:$0xff]
        %s592 = smov [#allocation20]
        %s593 = smov [#allocation21]
        %s594 = smov [#allocation22]
        %s595 = smov [#allocation23]
        %v596 = vld [vmem:[%s592] sm:$0x3]
        %v597 = vld [vmem:[%s593] sm:$0x3]
        %v598 = vld [vmem:[%s594] sm:$0x3]
        %v599 = vld [vmem:[%s595] sm:$0x3]
        %v600 = vmul.f32 %v589, %v596
        %v601 = vmul.f32 %v591, %v597
        %v602 = vsub.f32 %v600, %v601
        %v603 = vmul.f32 %v591, %v596
        %v604 = vmul.f32 %v589, %v597
        %v605 = vadd.f32 %v603, %v604
        %v606 = vmul.f32 %v589, %v598
        %v607 = vmul.f32 %v591, %v599
        %v608 = vsub.f32 %v606, %v607
        %v609 = vmul.f32 %v591, %v598
        %v610 = vmul.f32 %v589, %v599
        %v611 = vadd.f32 %v609, %v610
        %612 = vst [vmem:[%s592] sm:$0x3] %v602
        %613 = vst [vmem:[%s593] sm:$0x3] %v605
        %614 = vst [vmem:[%s594] sm:$0x3] %v608
        %615 = vst [vmem:[%s595] sm:$0x3] %v611
        %s616 = smov [#allocation20]
        %s617 = smov [#allocation27]
        %v618 = vlaneseq
        %v619 = vand.u32 %v618, 127
        %v620 = vmov %v619
        %v621 = vlaneseq
        %v622 = vshrl.u32 %v621, 7
        %v623 = vmov %v622
        %v624 = vld [vmem:[%s617] ss:$0 sm:$0xff]
        %v625 = vld [vmem:[%s616] sm:$0x3]
        %vm628 = vcmp.eq.s32.totalorder %v623, %v620
        %v629 = vsel %vm628, %v624, %v625
        %630 = vst [vmem:[%s616] sm:$0x3] %v629
        %s631 = smov [#allocation21]
        %v632 = vlaneseq
        %v633 = vand.u32 %v632, 127
        %v634 = vmov %v633
        %v635 = vlaneseq
        %v636 = vshrl.u32 %v635, 7
        %v637 = vmov %v636
        %v638 = vld [vmem:[%s631] sm:$0x3]
        %vm641 = vcmp.eq.s32.totalorder %v637, %v634
        %v642 = vsel %vm641, 0.0, %v638
        %643 = vst [vmem:[%s631] sm:$0x3] %v642
        %s644 = smov [#allocation22]
        %v645 = vlaneseq
        %v646 = vand.u32 %v645, 127
        %v647 = vmov %v646
        %v648 = vlaneseq
        %v649 = vshrl.u32 %v648, 7
        %v650 = vmov %v649
        %v651 = vld [vmem:[%s644] sm:$0x3]
        %vm654 = vcmp.eq.s32.totalorder %v650, %v647
        %v655 = vsel %vm654, 0.0, %v651
        %656 = vst [vmem:[%s644] sm:$0x3] %v655
        %s657 = smov [#allocation23]
        %s658 = smov [#allocation28]
        %v659 = vlaneseq
        %v660 = vand.u32 %v659, 127
        %v661 = vmov %v660
        %v662 = vlaneseq
        %v663 = vshrl.u32 %v662, 7
        %v664 = vmov %v663
        %v665 = vld [vmem:[%s658] ss:$0 sm:$0xff]
        %v666 = vld [vmem:[%s657] sm:$0x3]
        %vm669 = vcmp.eq.s32.totalorder %v664, %v661
        %v670 = vsel %vm669, %v665, %v666
        %671 = vst [vmem:[%s657] sm:$0x3] %v670
        %s672 = smov [#allocation20]
        %s673 = smov [#allocation21]
        %v674 = vld [vmem:[%s673] sm:$0x3]
        %675 = vrot.lane.b32.xlu0 %v674, 1
        %v676 = vpop.permute.xlu0 %675
        %v677 = vld [vmem:[%s672] sm:$0x3]
        %v678 = vld [vmem:[%s672] sm:$0x3]
        %679 = vrot.lane.b32.xlu0 %v678, 1
        %v680 = vpop.permute.xlu0 %679
        %v681 = vlaneseq
        %v682 = vand.u32 %v681, 127
        %vm683 = vcmp.eq.s32.totalorder %v682, 0
        %v684 = vsel %vm683, %v678, %v680
        %v685 = vlaneseq
        %v686 = vand.u32 %v685, 127
        %vm687 = vcmp.eq.s32.totalorder %v686, 1
        %v688 = vsel %vm687, %v676, %v684
        %v689 = vlaneseq
        %v690 = vand.u32 %v689, 127
        %vm691 = vcmp.ge.s32.totalorder %v690, 0
        %vm692 = vcmp.lt.s32.totalorder %v690, 2
        %vm693 = vmand %vm691, %vm692
        %v694 = vsel %vm693, %v688, 0.0
        %v695 = vld [vmem:[%s673] sm:$0x3]
        %696 = vrot.lane.b32.xlu0 %v695, 127
        %v697 = vpop.permute.xlu0 %696
        %v698 = vlaneseq
        %v699 = vand.u32 %v698, 127
        %vm700 = vcmp.eq.s32.totalorder %v699, 1
        %v701 = vsel %vm700, %v677, %v697
        %702 = vst [vmem:[%s672] sm:$0x3] %v694
        %703 = vst [vmem:[%s673] sm:$0x3] %v701
        %s704 = smov [#allocation22]
        %s705 = smov [#allocation23]
        %v706 = vld [vmem:[%s705] sm:$0x3]
        %707 = vrot.lane.b32.xlu0 %v706, 1
        %v708 = vpop.permute.xlu0 %707
        %v709 = vld [vmem:[%s704] sm:$0x3]
        %v710 = vld [vmem:[%s704] sm:$0x3]
        %711 = vrot.lane.b32.xlu0 %v710, 1
        %v712 = vpop.permute.xlu0 %711
        %v713 = vlaneseq
        %v714 = vand.u32 %v713, 127
        %vm715 = vcmp.eq.s32.totalorder %v714, 0
        %v716 = vsel %vm715, %v710, %v712
        %v717 = vlaneseq
        %v718 = vand.u32 %v717, 127
        %vm719 = vcmp.eq.s32.totalorder %v718, 1
        %v720 = vsel %vm719, %v708, %v716
        %v721 = vlaneseq
        %v722 = vand.u32 %v721, 127
        %vm723 = vcmp.ge.s32.totalorder %v722, 0
        %vm724 = vcmp.lt.s32.totalorder %v722, 2
        %vm725 = vmand %vm723, %vm724
        %v726 = vsel %vm725, %v720, 0.0
        %v727 = vld [vmem:[%s705] sm:$0x3]
        %728 = vrot.lane.b32.xlu0 %v727, 127
        %v729 = vpop.permute.xlu0 %728
        %v730 = vlaneseq
        %v731 = vand.u32 %v730, 127
        %vm732 = vcmp.eq.s32.totalorder %v731, 1
        %v733 = vsel %vm732, %v709, %v729
        %734 = vst [vmem:[%s704] sm:$0x3] %v726
        %735 = vst [vmem:[%s705] sm:$0x3] %v733
        %s736 = smov [#allocation20]
        %s737 = smov [#allocation22]
        %v738 = vld [vmem:[%s736] ss:$0 sm:$0xff]
        %s740 = scalar_lea.vmem %s736, 4294967295
        %v741 = vld [vmem:[%s740] sm:$0x2]
        %v742 = vlaneseq
        %v743 = vshrl.u32 %v742, 7
        %vm744 = vcmp.eq.s32.totalorder %v743, 0
        %v745 = vsel %vm744, %v738, %v741
        %s746 = scalar_lea.vmem %s736, 1
        %v747 = vld [vmem:[%s746] ss:$0 sm:$0xff]
        %748 = vst [vmem:[%s736] sm:$0x3] %v745
        %v749 = vld [vmem:[%s737] ss:$0 sm:$0xff]
        %s750 = scalar_lea.vmem %s736, 1
        %751 = vst [vmem:[%s750] sm:$0x1] %v749
        %s752 = scalar_lea.vmem %s737, 1
        %v753 = vld [vmem:[%s752] sm:$0x1]
        %v754 = vlaneseq
        %v755 = vshrl.u32 %v754, 7
        %vm756 = vcmp.eq.s32.totalorder %v755, 1
        %v757 = vsel %vm756, %v747, %v753
        %v758 = vld [vmem:[%s737] ss:$0 sm:$0xff]
        %759 = vst [vmem:[%s737] sm:$0x3] %v757
        %s760 = smov [#allocation21]
        %s761 = smov [#allocation23]
        %v762 = vld [vmem:[%s760] ss:$0 sm:$0xff]
        %s764 = scalar_lea.vmem %s760, 4294967295
        %v765 = vld [vmem:[%s764] sm:$0x2]
        %v766 = vlaneseq
        %v767 = vshrl.u32 %v766, 7
        %vm768 = vcmp.eq.s32.totalorder %v767, 0
        %v769 = vsel %vm768, %v762, %v765
        %s770 = scalar_lea.vmem %s760, 1
        %v771 = vld [vmem:[%s770] ss:$0 sm:$0xff]
        %772 = vst [vmem:[%s760] sm:$0x3] %v769
        %v773 = vld [vmem:[%s761] ss:$0 sm:$0xff]
        %s774 = scalar_lea.vmem %s760, 1
        %775 = vst [vmem:[%s774] sm:$0x1] %v773
        %s776 = scalar_lea.vmem %s761, 1
        %v777 = vld [vmem:[%s776] sm:$0x1]
        %v778 = vlaneseq
        %v779 = vshrl.u32 %v778, 7
        %vm780 = vcmp.eq.s32.totalorder %v779, 1
        %v781 = vsel %vm780, %v771, %v777
        %v782 = vld [vmem:[%s761] ss:$0 sm:$0xff]
        %783 = vst [vmem:[%s761] sm:$0x3] %v781
        %s784 = smov [#allocation31]
        %v785 = vld [vmem:[%s784] sm:$0xff]
        %s786 = smov [#allocation32]
        %v787 = vld [vmem:[%s786] sm:$0xff]
        %s788 = smov [#allocation12]
        %s789 = smov [#allocation14]
        %s790 = smov [#allocation16]
        %s791 = smov [#allocation18]
        %v792 = vld [vmem:[%s788] sm:$0x3]
        %v793 = vld [vmem:[%s789] sm:$0x3]
        %v794 = vld [vmem:[%s790] sm:$0x3]
        %v795 = vld [vmem:[%s791] sm:$0x3]
        %v796 = vmul.f32 %v785, %v792
        %v797 = vmul.f32 %v787, %v794
        %v798 = vsub.f32 %v796, %v797
        %v799 = vmul.f32 %v785, %v793
        %v800 = vmul.f32 %v787, %v795
        %v801 = vsub.f32 %v799, %v800
        %v802 = vmul.f32 %v787, %v792
        %v803 = vmul.f32 %v785, %v794
        %v804 = vadd.f32 %v802, %v803
        %v805 = vmul.f32 %v787, %v793
        %v806 = vmul.f32 %v785, %v795
        %v807 = vadd.f32 %v805, %v806
        %808 = vst [vmem:[%s788] sm:$0x3] %v798
        %809 = vst [vmem:[%s789] sm:$0x3] %v801
        %810 = vst [vmem:[%s790] sm:$0x3] %v804
        %811 = vst [vmem:[%s791] sm:$0x3] %v807
        %s812 = smov [#allocation12]
        %s813 = smov [#allocation16]
        %v814 = vld [vmem:[%s812] ss:$0 sm:$0xff]
        %s816 = scalar_lea.vmem %s812, 4294967295
        %v817 = vld [vmem:[%s816] sm:$0x2]
        %v818 = vlaneseq
        %v819 = vshrl.u32 %v818, 7
        %vm820 = vcmp.eq.s32.totalorder %v819, 0
        %v821 = vsel %vm820, %v814, %v817
        %s822 = scalar_lea.vmem %s812, 1
        %v823 = vld [vmem:[%s822] ss:$0 sm:$0xff]
        %824 = vst [vmem:[%s812] sm:$0x3] %v821
        %v825 = vld [vmem:[%s813] ss:$0 sm:$0xff]
        %s826 = scalar_lea.vmem %s812, 1
        %827 = vst [vmem:[%s826] sm:$0x1] %v825
        %s828 = scalar_lea.vmem %s813, 1
        %v829 = vld [vmem:[%s828] sm:$0x1]
        %v830 = vlaneseq
        %v831 = vshrl.u32 %v830, 7
        %vm832 = vcmp.eq.s32.totalorder %v831, 1
        %v833 = vsel %vm832, %v823, %v829
        %v834 = vld [vmem:[%s813] ss:$0 sm:$0xff]
        %835 = vst [vmem:[%s813] sm:$0x3] %v833
        %s836 = smov [#allocation14]
        %s837 = smov [#allocation18]
        %v838 = vld [vmem:[%s836] ss:$0 sm:$0xff]
        %s840 = scalar_lea.vmem %s836, 4294967295
        %v841 = vld [vmem:[%s840] sm:$0x2]
        %v842 = vlaneseq
        %v843 = vshrl.u32 %v842, 7
        %vm844 = vcmp.eq.s32.totalorder %v843, 0
        %v845 = vsel %vm844, %v838, %v841
        %s846 = scalar_lea.vmem %s836, 1
        %v847 = vld [vmem:[%s846] ss:$0 sm:$0xff]
        %848 = vst [vmem:[%s836] sm:$0x3] %v845
        %v849 = vld [vmem:[%s837] ss:$0 sm:$0xff]
        %s850 = scalar_lea.vmem %s836, 1
        %851 = vst [vmem:[%s850] sm:$0x1] %v849
        %s852 = scalar_lea.vmem %s837, 1
        %v853 = vld [vmem:[%s852] sm:$0x1]
        %v854 = vlaneseq
        %v855 = vshrl.u32 %v854, 7
        %vm856 = vcmp.eq.s32.totalorder %v855, 1
        %v857 = vsel %vm856, %v847, %v853
        %v858 = vld [vmem:[%s837] ss:$0 sm:$0xff]
        %859 = vst [vmem:[%s837] sm:$0x3] %v857
      $region101: #{custom-call.10} parent=93 // loop_footer
        %s420 = sadd.s32 1, %s416
      $region102: #{custom-call.10} parent=93 // loop_footer_branch
        %415 = sbr.rel target = $region98
      $region103: #{custom-call.10} parent=93 // loop_exit
        _
      %s860 = sadd.s32 %s318, 1
    $region94: #{custom-call.10} parent=1 // loop_footer
      _
    $region95: #{custom-call.10} parent=1 // loop_footer_branch
      %317 = sbr.rel target = $region91
    $region96: #{custom-call.10} parent=1 // loop_exit
      _
    %s863 = smov [#allocation20]
    %s864 = smov [#allocation8]
    %v865 = vlaneseq
    %v866 = vand.u32 %v865, 127
    %v867 = vmov %v866
    %v868 = vlaneseq
    %v869 = vshrl.u32 %v868, 7
    %v870 = vmov %v869
    %v871 = vld [vmem:[%s863] sm:$0x3]
    %vm874 = vcmp.eq.s32.totalorder %v870, %v867
    %v875 = vsel %vm874, %v871, 0.0
    %v876 = vrot.slane %v875, 4
    %v877 = vadd.f32 %v875, %v876
    %v878 = vrot.slane %v877, 2
    %v879 = vadd.f32 %v877, %v878
    %v880 = vrot.slane %v879, 1
    %v881 = vadd.f32 %v879, %v880
    %882 = vst [vmem:[%s864] sm:$0x1] %v881
    %s883 = smov [#allocation23]
    %s884 = smov [#allocation10]
    %v885 = vlaneseq
    %v886 = vand.u32 %v885, 127
    %v887 = vmov %v886
    %v888 = vlaneseq
    %v889 = vshrl.u32 %v888, 7
    %v890 = vmov %v889
    %v891 = vld [vmem:[%s883] sm:$0x3]
    %vm894 = vcmp.eq.s32.totalorder %v890, %v887
    %v895 = vsel %vm894, %v891, 0.0
    %v896 = vrot.slane %v895, 4
    %v897 = vadd.f32 %v895, %v896
    %v898 = vrot.slane %v897, 2
    %v899 = vadd.f32 %v897, %v898
    %v900 = vrot.slane %v899, 1
    %v901 = vadd.f32 %v899, %v900
    %902 = vst [vmem:[%s884] sm:$0x1] %v901
    %s904 = sshllo.u32 0, 1
    %v906 = vld [vmem:[#allocation8] sm:%s904]
    %s907 = sshllo.u32 0, 1
    %908 = vst [vmem:[#allocation9] sm:%s907] %v906
    %s910 = sshllo.u32 0, 1
    %v912 = vld [vmem:[#allocation10] sm:%s910]
    %s913 = sshllo.u32 0, 1
    %914 = vst [vmem:[#allocation11] sm:%s913] %v912
    %s916 = sshllo.u32 0, 2
    %v918 = vld [vmem:[#allocation12] sm:%s916]
    %s919 = sshllo.u32 0, 2
    %920 = vst [vmem:[#allocation13] sm:%s919] %v918
    %s922 = sshllo.u32 0, 2
    %v924 = vld [vmem:[#allocation14] sm:%s922]
    %s925 = sshllo.u32 0, 2
    %926 = vst [vmem:[#allocation15] sm:%s925] %v924
    %s928 = sshllo.u32 0, 2
    %v930 = vld [vmem:[#allocation16] sm:%s928]
    %s931 = sshllo.u32 0, 2
    %932 = vst [vmem:[#allocation17] sm:%s931] %v930
    %s934 = sshllo.u32 0, 2
    %v936 = vld [vmem:[#allocation18] sm:%s934]
    %s937 = sshllo.u32 0, 2
    %938 = vst [vmem:[#allocation19] sm:%s937] %v936
    // Predicated region
    $region104: #{custom-call.10} parent=1 // pred_check
      _
    $region105: #{custom-call.10} parent=1 // pred_check_branch
      %940 = sbr.rel (0) target = $region107
    $region106: #{custom-call.10} parent=1 // pred_region
      %p942 = scmp.gt.s32.totalorder 1, 0
      // Predicated region
      $region108: #{custom-call.10} parent=106 // pred_check
        %p943 = pneg %p942
      $region109: #{custom-call.10} parent=106 // pred_check_branch
        %945 = sbr.rel (%p943) target = $region111
      $region110: #{custom-call.10} parent=106 // pred_region
        %s946 = sshra.s32 1, 3
        %p947 = scmp.gt.s32.totalorder %s946, 0
        // Predicated region
        $region112: #{custom-call.10} parent=110 // pred_check
          %p948 = pneg %p947
        $region113: #{custom-call.10} parent=110 // pred_check_branch
          %950 = sbr.rel (%p948) target = $region115
        $region114: #{custom-call.10} parent=110 // pred_region
          %s951 = ssub.s32 %s946, 1
          %s952 = smul.u32 %s951, 128
          %s953 = sshra.s32 %s952, 4
          %s954 = scalar_lea.vmem [#allocation9], %s953
          %v955 = vld [vmem:[#allocation9] sm:$0xff]
          // While loop
          $region116: #{custom-call.10} parent=114 // loop_pre_header
            _
          $region117: #{custom-call.10} parent=114 // loop_header
            %s956 = sphi [#allocation9], %s978
            %s957 = sphi %s4, %s979
            %v958 = vphi %v955, %v980
            %s959 = ssub.s32 %s954, 64
            %p960 = scmp.gt.s32.totalorder %s956, %s959
          $region118: #{custom-call.10} parent=114 // loop_header_branch
            %962 = sbr.rel (%p960) target = $region122
          $region119: #{custom-call.10} parent=114 // loop_body
            %963 = vst [vmem:[%s957] sm:$0xff] %v958
            %v964 = vld [vmem:[%s956 + $0x8] sm:$0xff]
            %965 = vst [vmem:[%s957 + $0x8] sm:$0xff] %v964
            %v966 = vld [vmem:[%s956 + $0x10] sm:$0xff]
            %967 = vst [vmem:[%s957 + $0x10] sm:$0xff] %v966
            %v968 = vld [vmem:[%s956 + $0x18] sm:$0xff]
            %969 = vst [vmem:[%s957 + $0x18] sm:$0xff] %v968
            %v970 = vld [vmem:[%s956 + $0x20] sm:$0xff]
            %971 = vst [vmem:[%s957 + $0x20] sm:$0xff] %v970
            %v972 = vld [vmem:[%s956 + $0x28] sm:$0xff]
            %973 = vst [vmem:[%s957 + $0x28] sm:$0xff] %v972
            %v974 = vld [vmem:[%s956 + $0x30] sm:$0xff]
            %975 = vst [vmem:[%s957 + $0x30] sm:$0xff] %v974
            %v976 = vld [vmem:[%s956 + $0x38] sm:$0xff]
            %977 = vst [vmem:[%s957 + $0x38] sm:$0xff] %v976
          $region120: #{custom-call.10} parent=114 // loop_footer
            %s978 = scalar_lea.vmem %s956, 64
            %s979 = scalar_lea.vmem %s957, 64
            %v980 = vld [vmem:[%s956 + $0x40] sm:$0xff]
          $region121: #{custom-call.10} parent=114 // loop_footer_branch
            %981 = sbr.rel target = $region117
          $region122: #{custom-call.10} parent=114 // loop_exit
            _
          // While loop
          $region123: #{custom-call.10} parent=114 // loop_pre_header
            _
          $region124: #{custom-call.10} parent=114 // loop_header
            %s982 = sphi %s956, %s990
            %s983 = sphi %s957, %s991
            %v984 = vphi %v958, %v984
            %p985 = scmp.gt.s32.totalorder %s982, %s954
          $region125: #{custom-call.10} parent=114 // loop_header_branch
            %987 = sbr.rel (%p985) target = $region129
          $region126: #{custom-call.10} parent=114 // loop_body
            %v988 = vld [vmem:[%s982] sm:$0xff]
            %989 = vst [vmem:[%s983] sm:$0xff] %v988
          $region127: #{custom-call.10} parent=114 // loop_footer
            %s990 = scalar_lea.vmem %s982, 8
            %s991 = scalar_lea.vmem %s983, 8
          $region128: #{custom-call.10} parent=114 // loop_footer_branch
            %992 = sbr.rel target = $region124
          $region129: #{custom-call.10} parent=114 // loop_exit
            _
        $region115: #{custom-call.10} parent=110 // pred_fallthru
          _
        %s993 = sand.u32 1, 7
        %s994 = sshllo.u32 0, %s993
        %s995 = smul.u32 %s946, 128
        %s996 = sshra.s32 %s995, 4
        %s997 = scalar_lea.vmem %s4, %s996
        %s998 = smul.u32 %s946, 128
        %s999 = sshra.s32 %s998, 4
        %s1000 = scalar_lea.vmem [#allocation9], %s999
        %v1001 = vld [vmem:[%s1000] sm:%s994]
        %1002 = vst [vmem:[%s997] sm:%s994] %v1001
      $region111: #{custom-call.10} parent=106 // pred_fallthru
        _
    $region107: #{custom-call.10} parent=1 // pred_fallthru
      _
    // Predicated region
    $region130: #{custom-call.10} parent=1 // pred_check
      _
    $region131: #{custom-call.10} parent=1 // pred_check_branch
      %1004 = sbr.rel (0) target = $region133
    $region132: #{custom-call.10} parent=1 // pred_region
      %p1006 = scmp.gt.s32.totalorder 1, 0
      // Predicated region
      $region134: #{custom-call.10} parent=132 // pred_check
        %p1007 = pneg %p1006
      $region135: #{custom-call.10} parent=132 // pred_check_branch
        %1009 = sbr.rel (%p1007) target = $region137
      $region136: #{custom-call.10} parent=132 // pred_region
        %s1010 = sshra.s32 1, 3
        %p1011 = scmp.gt.s32.totalorder %s1010, 0
        // Predicated region
        $region138: #{custom-call.10} parent=136 // pred_check
          %p1012 = pneg %p1011
        $region139: #{custom-call.10} parent=136 // pred_check_branch
          %1014 = sbr.rel (%p1012) target = $region141
        $region140: #{custom-call.10} parent=136 // pred_region
          %s1015 = ssub.s32 %s1010, 1
          %s1016 = smul.u32 %s1015, 128
          %s1017 = sshra.s32 %s1016, 4
          %s1018 = scalar_lea.vmem [#allocation11], %s1017
          %v1019 = vld [vmem:[#allocation11] sm:$0xff]
          // While loop
          $region142: #{custom-call.10} parent=140 // loop_pre_header
            _
          $region143: #{custom-call.10} parent=140 // loop_header
            %s1020 = sphi [#allocation11], %s1042
            %s1021 = sphi %s5, %s1043
            %v1022 = vphi %v1019, %v1044
            %s1023 = ssub.s32 %s1018, 64
            %p1024 = scmp.gt.s32.totalorder %s1020, %s1023
          $region144: #{custom-call.10} parent=140 // loop_header_branch
            %1026 = sbr.rel (%p1024) target = $region148
          $region145: #{custom-call.10} parent=140 // loop_body
            %1027 = vst [vmem:[%s1021] sm:$0xff] %v1022
            %v1028 = vld [vmem:[%s1020 + $0x8] sm:$0xff]
            %1029 = vst [vmem:[%s1021 + $0x8] sm:$0xff] %v1028
            %v1030 = vld [vmem:[%s1020 + $0x10] sm:$0xff]
            %1031 = vst [vmem:[%s1021 + $0x10] sm:$0xff] %v1030
            %v1032 = vld [vmem:[%s1020 + $0x18] sm:$0xff]
            %1033 = vst [vmem:[%s1021 + $0x18] sm:$0xff] %v1032
            %v1034 = vld [vmem:[%s1020 + $0x20] sm:$0xff]
            %1035 = vst [vmem:[%s1021 + $0x20] sm:$0xff] %v1034
            %v1036 = vld [vmem:[%s1020 + $0x28] sm:$0xff]
            %1037 = vst [vmem:[%s1021 + $0x28] sm:$0xff] %v1036
            %v1038 = vld [vmem:[%s1020 + $0x30] sm:$0xff]
            %1039 = vst [vmem:[%s1021 + $0x30] sm:$0xff] %v1038
            %v1040 = vld [vmem:[%s1020 + $0x38] sm:$0xff]
            %1041 = vst [vmem:[%s1021 + $0x38] sm:$0xff] %v1040
          $region146: #{custom-call.10} parent=140 // loop_footer
            %s1042 = scalar_lea.vmem %s1020, 64
            %s1043 = scalar_lea.vmem %s1021, 64
            %v1044 = vld [vmem:[%s1020 + $0x40] sm:$0xff]
          $region147: #{custom-call.10} parent=140 // loop_footer_branch
            %1045 = sbr.rel target = $region143
          $region148: #{custom-call.10} parent=140 // loop_exit
            _
          // While loop
          $region149: #{custom-call.10} parent=140 // loop_pre_header
            _
          $region150: #{custom-call.10} parent=140 // loop_header
            %s1046 = sphi %s1020, %s1054
            %s1047 = sphi %s1021, %s1055
            %v1048 = vphi %v1022, %v1048
            %p1049 = scmp.gt.s32.totalorder %s1046, %s1018
          $region151: #{custom-call.10} parent=140 // loop_header_branch
            %1051 = sbr.rel (%p1049) target = $region155
          $region152: #{custom-call.10} parent=140 // loop_body
            %v1052 = vld [vmem:[%s1046] sm:$0xff]
            %1053 = vst [vmem:[%s1047] sm:$0xff] %v1052
          $region153: #{custom-call.10} parent=140 // loop_footer
            %s1054 = scalar_lea.vmem %s1046, 8
            %s1055 = scalar_lea.vmem %s1047, 8
          $region154: #{custom-call.10} parent=140 // loop_footer_branch
            %1056 = sbr.rel target = $region150
          $region155: #{custom-call.10} parent=140 // loop_exit
            _
        $region141: #{custom-call.10} parent=136 // pred_fallthru
          _
        %s1057 = sand.u32 1, 7
        %s1058 = sshllo.u32 0, %s1057
        %s1059 = smul.u32 %s1010, 128
        %s1060 = sshra.s32 %s1059, 4
        %s1061 = scalar_lea.vmem %s5, %s1060
        %s1062 = smul.u32 %s1010, 128
        %s1063 = sshra.s32 %s1062, 4
        %s1064 = scalar_lea.vmem [#allocation11], %s1063
        %v1065 = vld [vmem:[%s1064] sm:%s1058]
        %1066 = vst [vmem:[%s1061] sm:%s1058] %v1065
      $region137: #{custom-call.10} parent=132 // pred_fallthru
        _
    $region133: #{custom-call.10} parent=1 // pred_fallthru
      _
    %p1068 = scmp.gt.s32.totalorder 2, 0
    // Predicated region
    $region156: #{custom-call.10} parent=1 // pred_check
      %p1069 = pneg %p1068
    $region157: #{custom-call.10} parent=1 // pred_check_branch
      %1071 = sbr.rel (%p1069) target = $region159
    $region158: #{custom-call.10} parent=1 // pred_region
      %s1072 = sshra.s32 2, 3
      %p1073 = scmp.gt.s32.totalorder %s1072, 0
      // Predicated region
      $region160: #{custom-call.10} parent=158 // pred_check
        %p1074 = pneg %p1073
      $region161: #{custom-call.10} parent=158 // pred_check_branch
        %1076 = sbr.rel (%p1074) target = $region163
      $region162: #{custom-call.10} parent=158 // pred_region
        %s1077 = ssub.s32 %s1072, 1
        %s1078 = smul.u32 %s1077, 128
        %s1079 = sshra.s32 %s1078, 4
        %s1080 = scalar_lea.vmem [#allocation13], %s1079
        %v1081 = vld [vmem:[#allocation13] sm:$0xff]
        // While loop
        $region164: #{custom-call.10} parent=162 // loop_pre_header
          _
        $region165: #{custom-call.10} parent=162 // loop_header
          %s1082 = sphi [#allocation13], %s1104
          %s1083 = sphi %s6, %s1105
          %v1084 = vphi %v1081, %v1106
          %s1085 = ssub.s32 %s1080, 64
          %p1086 = scmp.gt.s32.totalorder %s1082, %s1085
        $region166: #{custom-call.10} parent=162 // loop_header_branch
          %1088 = sbr.rel (%p1086) target = $region170
        $region167: #{custom-call.10} parent=162 // loop_body
          %1089 = vst [vmem:[%s1083] sm:$0xff] %v1084
          %v1090 = vld [vmem:[%s1082 + $0x8] sm:$0xff]
          %1091 = vst [vmem:[%s1083 + $0x8] sm:$0xff] %v1090
          %v1092 = vld [vmem:[%s1082 + $0x10] sm:$0xff]
          %1093 = vst [vmem:[%s1083 + $0x10] sm:$0xff] %v1092
          %v1094 = vld [vmem:[%s1082 + $0x18] sm:$0xff]
          %1095 = vst [vmem:[%s1083 + $0x18] sm:$0xff] %v1094
          %v1096 = vld [vmem:[%s1082 + $0x20] sm:$0xff]
          %1097 = vst [vmem:[%s1083 + $0x20] sm:$0xff] %v1096
          %v1098 = vld [vmem:[%s1082 + $0x28] sm:$0xff]
          %1099 = vst [vmem:[%s1083 + $0x28] sm:$0xff] %v1098
          %v1100 = vld [vmem:[%s1082 + $0x30] sm:$0xff]
          %1101 = vst [vmem:[%s1083 + $0x30] sm:$0xff] %v1100
          %v1102 = vld [vmem:[%s1082 + $0x38] sm:$0xff]
          %1103 = vst [vmem:[%s1083 + $0x38] sm:$0xff] %v1102
        $region168: #{custom-call.10} parent=162 // loop_footer
          %s1104 = scalar_lea.vmem %s1082, 64
          %s1105 = scalar_lea.vmem %s1083, 64
          %v1106 = vld [vmem:[%s1082 + $0x40] sm:$0xff]
        $region169: #{custom-call.10} parent=162 // loop_footer_branch
          %1107 = sbr.rel target = $region165
        $region170: #{custom-call.10} parent=162 // loop_exit
          _
        // While loop
        $region171: #{custom-call.10} parent=162 // loop_pre_header
          _
        $region172: #{custom-call.10} parent=162 // loop_header
          %s1108 = sphi %s1082, %s1116
          %s1109 = sphi %s1083, %s1117
          %v1110 = vphi %v1084, %v1110
          %p1111 = scmp.gt.s32.totalorder %s1108, %s1080
        $region173: #{custom-call.10} parent=162 // loop_header_branch
          %1113 = sbr.rel (%p1111) target = $region177
        $region174: #{custom-call.10} parent=162 // loop_body
          %v1114 = vld [vmem:[%s1108] sm:$0xff]
          %1115 = vst [vmem:[%s1109] sm:$0xff] %v1114
        $region175: #{custom-call.10} parent=162 // loop_footer
          %s1116 = scalar_lea.vmem %s1108, 8
          %s1117 = scalar_lea.vmem %s1109, 8
        $region176: #{custom-call.10} parent=162 // loop_footer_branch
          %1118 = sbr.rel target = $region172
        $region177: #{custom-call.10} parent=162 // loop_exit
          _
      $region163: #{custom-call.10} parent=158 // pred_fallthru
        _
      %s1119 = sand.u32 2, 7
      %s1120 = sshllo.u32 0, %s1119
      %s1121 = smul.u32 %s1072, 128
      %s1122 = sshra.s32 %s1121, 4
      %s1123 = scalar_lea.vmem %s6, %s1122
      %s1124 = smul.u32 %s1072, 128
      %s1125 = sshra.s32 %s1124, 4
      %s1126 = scalar_lea.vmem [#allocation13], %s1125
      %v1127 = vld [vmem:[%s1126] sm:%s1120]
      %1128 = vst [vmem:[%s1123] sm:%s1120] %v1127
    $region159: #{custom-call.10} parent=1 // pred_fallthru
      _
    %p1130 = scmp.gt.s32.totalorder 2, 0
    // Predicated region
    $region178: #{custom-call.10} parent=1 // pred_check
      %p1131 = pneg %p1130
    $region179: #{custom-call.10} parent=1 // pred_check_branch
      %1133 = sbr.rel (%p1131) target = $region181
    $region180: #{custom-call.10} parent=1 // pred_region
      %s1134 = sshra.s32 2, 3
      %p1135 = scmp.gt.s32.totalorder %s1134, 0
      // Predicated region
      $region182: #{custom-call.10} parent=180 // pred_check
        %p1136 = pneg %p1135
      $region183: #{custom-call.10} parent=180 // pred_check_branch
        %1138 = sbr.rel (%p1136) target = $region185
      $region184: #{custom-call.10} parent=180 // pred_region
        %s1139 = ssub.s32 %s1134, 1
        %s1140 = smul.u32 %s1139, 128
        %s1141 = sshra.s32 %s1140, 4
        %s1142 = scalar_lea.vmem [#allocation15], %s1141
        %v1143 = vld [vmem:[#allocation15] sm:$0xff]
        // While loop
        $region186: #{custom-call.10} parent=184 // loop_pre_header
          _
        $region187: #{custom-call.10} parent=184 // loop_header
          %s1144 = sphi [#allocation15], %s1166
          %s1145 = sphi %s7, %s1167
          %v1146 = vphi %v1143, %v1168
          %s1147 = ssub.s32 %s1142, 64
          %p1148 = scmp.gt.s32.totalorder %s1144, %s1147
        $region188: #{custom-call.10} parent=184 // loop_header_branch
          %1150 = sbr.rel (%p1148) target = $region192
        $region189: #{custom-call.10} parent=184 // loop_body
          %1151 = vst [vmem:[%s1145] sm:$0xff] %v1146
          %v1152 = vld [vmem:[%s1144 + $0x8] sm:$0xff]
          %1153 = vst [vmem:[%s1145 + $0x8] sm:$0xff] %v1152
          %v1154 = vld [vmem:[%s1144 + $0x10] sm:$0xff]
          %1155 = vst [vmem:[%s1145 + $0x10] sm:$0xff] %v1154
          %v1156 = vld [vmem:[%s1144 + $0x18] sm:$0xff]
          %1157 = vst [vmem:[%s1145 + $0x18] sm:$0xff] %v1156
          %v1158 = vld [vmem:[%s1144 + $0x20] sm:$0xff]
          %1159 = vst [vmem:[%s1145 + $0x20] sm:$0xff] %v1158
          %v1160 = vld [vmem:[%s1144 + $0x28] sm:$0xff]
          %1161 = vst [vmem:[%s1145 + $0x28] sm:$0xff] %v1160
          %v1162 = vld [vmem:[%s1144 + $0x30] sm:$0xff]
          %1163 = vst [vmem:[%s1145 + $0x30] sm:$0xff] %v1162
          %v1164 = vld [vmem:[%s1144 + $0x38] sm:$0xff]
          %1165 = vst [vmem:[%s1145 + $0x38] sm:$0xff] %v1164
        $region190: #{custom-call.10} parent=184 // loop_footer
          %s1166 = scalar_lea.vmem %s1144, 64
          %s1167 = scalar_lea.vmem %s1145, 64
          %v1168 = vld [vmem:[%s1144 + $0x40] sm:$0xff]
        $region191: #{custom-call.10} parent=184 // loop_footer_branch
          %1169 = sbr.rel target = $region187
        $region192: #{custom-call.10} parent=184 // loop_exit
          _
        // While loop
        $region193: #{custom-call.10} parent=184 // loop_pre_header
          _
        $region194: #{custom-call.10} parent=184 // loop_header
          %s1170 = sphi %s1144, %s1178
          %s1171 = sphi %s1145, %s1179
          %v1172 = vphi %v1146, %v1172
          %p1173 = scmp.gt.s32.totalorder %s1170, %s1142
        $region195: #{custom-call.10} parent=184 // loop_header_branch
          %1175 = sbr.rel (%p1173) target = $region199
        $region196: #{custom-call.10} parent=184 // loop_body
          %v1176 = vld [vmem:[%s1170] sm:$0xff]
          %1177 = vst [vmem:[%s1171] sm:$0xff] %v1176
        $region197: #{custom-call.10} parent=184 // loop_footer
          %s1178 = scalar_lea.vmem %s1170, 8
          %s1179 = scalar_lea.vmem %s1171, 8
        $region198: #{custom-call.10} parent=184 // loop_footer_branch
          %1180 = sbr.rel target = $region194
        $region199: #{custom-call.10} parent=184 // loop_exit
          _
      $region185: #{custom-call.10} parent=180 // pred_fallthru
        _
      %s1181 = sand.u32 2, 7
      %s1182 = sshllo.u32 0, %s1181
      %s1183 = smul.u32 %s1134, 128
      %s1184 = sshra.s32 %s1183, 4
      %s1185 = scalar_lea.vmem %s7, %s1184
      %s1186 = smul.u32 %s1134, 128
      %s1187 = sshra.s32 %s1186, 4
      %s1188 = scalar_lea.vmem [#allocation15], %s1187
      %v1189 = vld [vmem:[%s1188] sm:%s1182]
      %1190 = vst [vmem:[%s1185] sm:%s1182] %v1189
    $region181: #{custom-call.10} parent=1 // pred_fallthru
      _
    %p1192 = scmp.gt.s32.totalorder 2, 0
    // Predicated region
    $region200: #{custom-call.10} parent=1 // pred_check
      %p1193 = pneg %p1192
    $region201: #{custom-call.10} parent=1 // pred_check_branch
      %1195 = sbr.rel (%p1193) target = $region203
    $region202: #{custom-call.10} parent=1 // pred_region
      %s1196 = sshra.s32 2, 3
      %p1197 = scmp.gt.s32.totalorder %s1196, 0
      // Predicated region
      $region204: #{custom-call.10} parent=202 // pred_check
        %p1198 = pneg %p1197
      $region205: #{custom-call.10} parent=202 // pred_check_branch
        %1200 = sbr.rel (%p1198) target = $region207
      $region206: #{custom-call.10} parent=202 // pred_region
        %s1201 = ssub.s32 %s1196, 1
        %s1202 = smul.u32 %s1201, 128
        %s1203 = sshra.s32 %s1202, 4
        %s1204 = scalar_lea.vmem [#allocation17], %s1203
        %v1205 = vld [vmem:[#allocation17] sm:$0xff]
        // While loop
        $region208: #{custom-call.10} parent=206 // loop_pre_header
          _
        $region209: #{custom-call.10} parent=206 // loop_header
          %s1206 = sphi [#allocation17], %s1228
          %s1207 = sphi %s8, %s1229
          %v1208 = vphi %v1205, %v1230
          %s1209 = ssub.s32 %s1204, 64
          %p1210 = scmp.gt.s32.totalorder %s1206, %s1209
        $region210: #{custom-call.10} parent=206 // loop_header_branch
          %1212 = sbr.rel (%p1210) target = $region214
        $region211: #{custom-call.10} parent=206 // loop_body
          %1213 = vst [vmem:[%s1207] sm:$0xff] %v1208
          %v1214 = vld [vmem:[%s1206 + $0x8] sm:$0xff]
          %1215 = vst [vmem:[%s1207 + $0x8] sm:$0xff] %v1214
          %v1216 = vld [vmem:[%s1206 + $0x10] sm:$0xff]
          %1217 = vst [vmem:[%s1207 + $0x10] sm:$0xff] %v1216
          %v1218 = vld [vmem:[%s1206 + $0x18] sm:$0xff]
          %1219 = vst [vmem:[%s1207 + $0x18] sm:$0xff] %v1218
          %v1220 = vld [vmem:[%s1206 + $0x20] sm:$0xff]
          %1221 = vst [vmem:[%s1207 + $0x20] sm:$0xff] %v1220
          %v1222 = vld [vmem:[%s1206 + $0x28] sm:$0xff]
          %1223 = vst [vmem:[%s1207 + $0x28] sm:$0xff] %v1222
          %v1224 = vld [vmem:[%s1206 + $0x30] sm:$0xff]
          %1225 = vst [vmem:[%s1207 + $0x30] sm:$0xff] %v1224
          %v1226 = vld [vmem:[%s1206 + $0x38] sm:$0xff]
          %1227 = vst [vmem:[%s1207 + $0x38] sm:$0xff] %v1226
        $region212: #{custom-call.10} parent=206 // loop_footer
          %s1228 = scalar_lea.vmem %s1206, 64
          %s1229 = scalar_lea.vmem %s1207, 64
          %v1230 = vld [vmem:[%s1206 + $0x40] sm:$0xff]
        $region213: #{custom-call.10} parent=206 // loop_footer_branch
          %1231 = sbr.rel target = $region209
        $region214: #{custom-call.10} parent=206 // loop_exit
          _
        // While loop
        $region215: #{custom-call.10} parent=206 // loop_pre_header
          _
        $region216: #{custom-call.10} parent=206 // loop_header
          %s1232 = sphi %s1206, %s1240
          %s1233 = sphi %s1207, %s1241
          %v1234 = vphi %v1208, %v1234
          %p1235 = scmp.gt.s32.totalorder %s1232, %s1204
        $region217: #{custom-call.10} parent=206 // loop_header_branch
          %1237 = sbr.rel (%p1235) target = $region221
        $region218: #{custom-call.10} parent=206 // loop_body
          %v1238 = vld [vmem:[%s1232] sm:$0xff]
          %1239 = vst [vmem:[%s1233] sm:$0xff] %v1238
        $region219: #{custom-call.10} parent=206 // loop_footer
          %s1240 = scalar_lea.vmem %s1232, 8
          %s1241 = scalar_lea.vmem %s1233, 8
        $region220: #{custom-call.10} parent=206 // loop_footer_branch
          %1242 = sbr.rel target = $region216
        $region221: #{custom-call.10} parent=206 // loop_exit
          _
      $region207: #{custom-call.10} parent=202 // pred_fallthru
        _
      %s1243 = sand.u32 2, 7
      %s1244 = sshllo.u32 0, %s1243
      %s1245 = smul.u32 %s1196, 128
      %s1246 = sshra.s32 %s1245, 4
      %s1247 = scalar_lea.vmem %s8, %s1246
      %s1248 = smul.u32 %s1196, 128
      %s1249 = sshra.s32 %s1248, 4
      %s1250 = scalar_lea.vmem [#allocation17], %s1249
      %v1251 = vld [vmem:[%s1250] sm:%s1244]
      %1252 = vst [vmem:[%s1247] sm:%s1244] %v1251
    $region203: #{custom-call.10} parent=1 // pred_fallthru
      _
    %p1254 = scmp.gt.s32.totalorder 2, 0
    // Predicated region
    $region222: #{custom-call.10} parent=1 // pred_check
      %p1255 = pneg %p1254
    $region223: #{custom-call.10} parent=1 // pred_check_branch
      %1257 = sbr.rel (%p1255) target = $region225
    $region224: #{custom-call.10} parent=1 // pred_region
      %s1258 = sshra.s32 2, 3
      %p1259 = scmp.gt.s32.totalorder %s1258, 0
      // Predicated region
      $region226: #{custom-call.10} parent=224 // pred_check
        %p1260 = pneg %p1259
      $region227: #{custom-call.10} parent=224 // pred_check_branch
        %1262 = sbr.rel (%p1260) target = $region229
      $region228: #{custom-call.10} parent=224 // pred_region
        %s1263 = ssub.s32 %s1258, 1
        %s1264 = smul.u32 %s1263, 128
        %s1265 = sshra.s32 %s1264, 4
        %s1266 = scalar_lea.vmem [#allocation19], %s1265
        %v1267 = vld [vmem:[#allocation19] sm:$0xff]
        // While loop
        $region230: #{custom-call.10} parent=228 // loop_pre_header
          _
        $region231: #{custom-call.10} parent=228 // loop_header
          %s1268 = sphi [#allocation19], %s1290
          %s1269 = sphi %s9, %s1291
          %v1270 = vphi %v1267, %v1292
          %s1271 = ssub.s32 %s1266, 64
          %p1272 = scmp.gt.s32.totalorder %s1268, %s1271
        $region232: #{custom-call.10} parent=228 // loop_header_branch
          %1274 = sbr.rel (%p1272) target = $region236
        $region233: #{custom-call.10} parent=228 // loop_body
          %1275 = vst [vmem:[%s1269] sm:$0xff] %v1270
          %v1276 = vld [vmem:[%s1268 + $0x8] sm:$0xff]
          %1277 = vst [vmem:[%s1269 + $0x8] sm:$0xff] %v1276
          %v1278 = vld [vmem:[%s1268 + $0x10] sm:$0xff]
          %1279 = vst [vmem:[%s1269 + $0x10] sm:$0xff] %v1278
          %v1280 = vld [vmem:[%s1268 + $0x18] sm:$0xff]
          %1281 = vst [vmem:[%s1269 + $0x18] sm:$0xff] %v1280
          %v1282 = vld [vmem:[%s1268 + $0x20] sm:$0xff]
          %1283 = vst [vmem:[%s1269 + $0x20] sm:$0xff] %v1282
          %v1284 = vld [vmem:[%s1268 + $0x28] sm:$0xff]
          %1285 = vst [vmem:[%s1269 + $0x28] sm:$0xff] %v1284
          %v1286 = vld [vmem:[%s1268 + $0x30] sm:$0xff]
          %1287 = vst [vmem:[%s1269 + $0x30] sm:$0xff] %v1286
          %v1288 = vld [vmem:[%s1268 + $0x38] sm:$0xff]
          %1289 = vst [vmem:[%s1269 + $0x38] sm:$0xff] %v1288
        $region234: #{custom-call.10} parent=228 // loop_footer
          %s1290 = scalar_lea.vmem %s1268, 64
          %s1291 = scalar_lea.vmem %s1269, 64
          %v1292 = vld [vmem:[%s1268 + $0x40] sm:$0xff]
        $region235: #{custom-call.10} parent=228 // loop_footer_branch
          %1293 = sbr.rel target = $region231
        $region236: #{custom-call.10} parent=228 // loop_exit
          _
        // While loop
        $region237: #{custom-call.10} parent=228 // loop_pre_header
          _
        $region238: #{custom-call.10} parent=228 // loop_header
          %s1294 = sphi %s1268, %s1302
          %s1295 = sphi %s1269, %s1303
          %v1296 = vphi %v1270, %v1296
          %p1297 = scmp.gt.s32.totalorder %s1294, %s1266
        $region239: #{custom-call.10} parent=228 // loop_header_branch
          %1299 = sbr.rel (%p1297) target = $region243
        $region240: #{custom-call.10} parent=228 // loop_body
          %v1300 = vld [vmem:[%s1294] sm:$0xff]
          %1301 = vst [vmem:[%s1295] sm:$0xff] %v1300
        $region241: #{custom-call.10} parent=228 // loop_footer
          %s1302 = scalar_lea.vmem %s1294, 8
          %s1303 = scalar_lea.vmem %s1295, 8
        $region242: #{custom-call.10} parent=228 // loop_footer_branch
          %1304 = sbr.rel target = $region238
        $region243: #{custom-call.10} parent=228 // loop_exit
          _
      $region229: #{custom-call.10} parent=224 // pred_fallthru
        _
      %s1305 = sand.u32 2, 7
      %s1306 = sshllo.u32 0, %s1305
      %s1307 = smul.u32 %s1258, 128
      %s1308 = sshra.s32 %s1307, 4
      %s1309 = scalar_lea.vmem %s9, %s1308
      %s1310 = smul.u32 %s1258, 128
      %s1311 = sshra.s32 %s1310, 4
      %s1312 = scalar_lea.vmem [#allocation19], %s1311
      %v1313 = vld [vmem:[%s1312] sm:%s1306]
      %1314 = vst [vmem:[%s1309] sm:%s1306] %v1313
    $region225: #{custom-call.10} parent=1 // pred_fallthru
      _
    // Predicated region
    $region244: #{custom-call.10} parent=1 // pred_check
      _
    $region245: #{custom-call.10} parent=1 // pred_check_branch
      %1316 = sbr.rel (0) target = $region247
    $region246: #{custom-call.10} parent=1 // pred_region
      _
    $region247: #{custom-call.10} parent=1 // pred_fallthru
      _
    // Predicated region
    $region248: #{custom-call.10} parent=1 // pred_check
      _
    $region249: #{custom-call.10} parent=1 // pred_check_branch
      %1318 = sbr.rel (0) target = $region251
    $region250: #{custom-call.10} parent=1 // pred_region
      _
    $region251: #{custom-call.10} parent=1 // pred_fallthru
      _

// kernel: _normalize.4
$region0: #{_normalize.4}
  #allocation0 [shape = 'u32[]', space=smem, size = 0x4, offset = 0x4, fixed_abs, tag = 'smem constant byte address 0x4 - core index']
  #allocation1 [shape = 'u32[144,128]{1,0:T(1,128)}', space=vmem, size = 0x12000, scoped, tag = 'internal scratch']
  %s0 = inlined_call_operand.vmem [shape: f32[3,16,128], index: 0, kind: input, shape index: {}]
  %s1 = inlined_call_operand.vmem [shape: f32[3,16,128], index: 1, kind: output, shape index: {0}]
  %s2 = inlined_call_operand.vmem [shape: f32[2,10,8,128], index: 2, kind: output, shape index: {1}]
  %3 = xla_tuple %s1, %s2
  %s4 = sld [smem:[#allocation0]]
  $region121: #{_normalize.4} parent=0
    _
  %s6 = ssub.s32 1, %s4
  %s7 = scalar_select 0, %s6, %s4
  $region1: #{_normalize.4} parent=0
    #allocation2 [shape = 'u8[24576]{0}', space=vmem, size = 0x6000, scoped, tag = 'input window, operand 0']
    #allocation3 [shape = 'u8[24576]{0}', space=vmem, size = 0x6000, scoped, tag = 'output window, operand 0']
    loop: start=0, step=1, limit=4
    $region2: #{_normalize.4} parent=1 // loop_pre_header
      _
    $region3: #{_normalize.4} parent=1 // loop_header
      %s9 = sphi 0, %s13
      %p10 = scmp.ge.s32.totalorder %s9, 4
      %s16 = sphi 0, %s28
      %s17 = sphi 0, %s24
      %s18 = sphi 0, %s16
      %s19 = sphi 0, %s17
      %s20 = sphi 0, %s18
      %s21 = sphi 0, %s19
      %s33 = sphi 0, %s35
      %s36 = sphi 0, %s33
      %s37 = sphi 0, %s36
      %s53 = sphi 0, %s37
      %s61 = sphi 0, %s63
      %s64 = sphi 0, %s61
      %s65 = sphi 0, %s64
      %s81 = sphi 0, %s65
      %s87 = sphi 0, %s89
      %s90 = sphi 0, %s87
      %s91 = sphi 0, %s90
      %s107 = sphi 0, %s91
    $region4: #{_normalize.4} parent=1 // loop_header_branch
      %12 = sbr.rel (%p10) target = $region8
    $region5: #{_normalize.4} parent=1 // loop_body
      %s14 = ssub.s32 %s9, 1
      %s15 = ssub.s32 %s9, 2
      %s22 = sadd.s32 1, %s17
      %p23 = scmp.ge.s32.totalorder %s22, 1
      %s24 = scalar_select %p23, 0, %s22
      %s25 = sadd.s32 1, %s16
      %s26 = scalar_select %p23, %s25, %s16
      %p27 = scmp.ge.s32.totalorder %s26, 2
      %s28 = scalar_select %p27, 0, %s26
      %s29 = sadd.s32 %s16, %s17
      %s30 = sadd.s32 %s28, %s24
      %s31 = ssub.s32 %s29, %s30
      %p32 = scmp.eq.s32.totalorder %s31, 0
      %s34 = sadd.s32 %s33, 1
      %s35 = scalar_select %p32, %s33, %s34
      %p38 = pneg %p32
      %p39 = scmp.eq.s32.totalorder %s9, 1
      %p40 = por %p38, %p39
      %p41 = scmp.ne.s32.totalorder %s33, %s36
      %p42 = scmp.eq.s32.totalorder %s9, 0
      %p43 = por %p41, %p42
      %p44 = scmp.ne.s32.totalorder %s33, %s36
      %p45 = scmp.eq.s32.totalorder %s14, 1
      %p46 = por %p44, %p45
      %p47 = scmp.ne.s32.totalorder %s36, %s37
      %p48 = scmp.eq.s32.totalorder %s14, 0
      %p49 = por %p47, %p48
      %p50 = scmp.ne.s32.totalorder %s36, %s37
      %p51 = scmp.eq.s32.totalorder %s15, 1
      %p52 = por %p50, %p51
      %p54 = scmp.ne.s32.totalorder %s37, %s53
      %p55 = scmp.eq.s32.totalorder %s15, 0
      %p56 = por %p54, %p55
      %s57 = sadd.s32 %s16, %s17
      %s58 = sadd.s32 %s28, %s24
      %s59 = ssub.s32 %s57, %s58
      %p60 = scmp.eq.s32.totalorder %s59, 0
      %s62 = sadd.s32 %s61, 1
      %s63 = scalar_select %p60, %s61, %s62
      %p66 = pneg %p60
      %p67 = scmp.eq.s32.totalorder %s9, 1
      %p68 = por %p66, %p67
      %p69 = scmp.ne.s32.totalorder %s61, %s64
      %p70 = scmp.eq.s32.totalorder %s9, 0
      %p71 = por %p69, %p70
      %p72 = scmp.ne.s32.totalorder %s61, %s64
      %p73 = scmp.eq.s32.totalorder %s14, 1
      %p74 = por %p72, %p73
      %p75 = scmp.ne.s32.totalorder %s64, %s65
      %p76 = scmp.eq.s32.totalorder %s14, 0
      %p77 = por %p75, %p76
      %p78 = scmp.ne.s32.totalorder %s64, %s65
      %p79 = scmp.eq.s32.totalorder %s15, 1
      %p80 = por %p78, %p79
      %p82 = scmp.ne.s32.totalorder %s65, %s81
      %p83 = scmp.eq.s32.totalorder %s15, 0
      %p84 = por %p82, %p83
      %s85 = ssub.s32 %s16, %s28
      %p86 = scmp.eq.s32.totalorder %s85, 0
      %s88 = sadd.s32 %s87, 1
      %s89 = scalar_select %p86, %s87, %s88
      %p92 = pneg %p86
      %p93 = scmp.eq.s32.totalorder %s9, 1
      %p94 = por %p92, %p93
      %p95 = scmp.ne.s32.totalorder %s87, %s90
      %p96 = scmp.eq.s32.totalorder %s9, 0
      %p97 = por %p95, %p96
      %p98 = scmp.ne.s32.totalorder %s87, %s90
      %p99 = scmp.eq.s32.totalorder %s14, 1
      %p100 = por %p98, %p99
      %p101 = scmp.ne.s32.totalorder %s90, %s91
      %p102 = scmp.eq.s32.totalorder %s14, 0
      %p103 = por %p101, %p102
      %p104 = scmp.ne.s32.totalorder %s90, %s91
      %p105 = scmp.eq.s32.totalorder %s15, 1
      %p106 = por %p104, %p105
      %p108 = scmp.ne.s32.totalorder %s91, %s107
      %p109 = scmp.eq.s32.totalorder %s15, 0
      %p110 = por %p108, %p109
      %p111 = scmp.le.s32.totalorder 1, %s9
      %p112 = scmp.lt.s32.totalorder %s9, 3
      %p113 = pnand %p111, %p112
      %p114 = pneg %p113
      // Predicated region
      $region9: #{_normalize.4} parent=5 // pred_check
        _
      $region10: #{_normalize.4} parent=5 // pred_check_branch
        %116 = sbr.rel (%p113) target = $region12
      $region11: #{_normalize.4} parent=5 // pred_region
        %s117 = ssub.s32 %s9, 1
      $region12: #{_normalize.4} parent=5 // pred_fallthru
        _
      %p118 = scmp.lt.s32.totalorder %s9, 2
      // Predicated region
      $region13: #{_normalize.4} parent=5 // pred_check
        %p119 = pneg %p118
      $region14: #{_normalize.4} parent=5 // pred_check_branch
        %121 = sbr.rel (%p119) target = $region16
      $region15: #{_normalize.4} parent=5 // pred_region
        // Predicated region
        $region17: #{_normalize.4} parent=15 // pred_check
          %p122 = pneg %p43
        $region18: #{_normalize.4} parent=15 // pred_check_branch
          %124 = sbr.rel (%p122) target = $region20
        $region19: #{_normalize.4} parent=15 // pred_region
          %s125 = sand.u32 %s33, 1
          %s126 = sand.u32 %s33, 1
          %s127 = smul.addr %s126, 24
          %s128 = scalar_lea.vmem [#allocation2], %s127
          %s129 = sadd.s32 %s16, %s17
          %s130 = smul.addr %s129, 8
          %s131 = scalar_lea.vmem %s0, %s130
          // Predicated region
          $region21: #{_normalize.4} parent=19 // pred_check
            _
          $region22: #{_normalize.4} parent=19 // pred_check_branch
            %133 = sbr.rel (0) target = $region24
          $region23: #{_normalize.4} parent=19 // pred_region
            // Predicated region
            $region25: #{_normalize.4} parent=23 // pred_check
              _
            $region26: #{_normalize.4} parent=23 // pred_check_branch
              %135 = sbr.rel (0) target = $region28
            $region27: #{_normalize.4} parent=23 // pred_region
              // Predicated region
              $region40: #{_normalize.4} parent=27 // pred_check
                _
              $region41: #{_normalize.4} parent=27 // pred_check_branch
                %154 = sbr.rel (0) target = $region43
              $region42: #{_normalize.4} parent=27 // pred_region
                loop: start=0, step=1, limit=1
                $region44: #{_normalize.4} parent=42 // loop_pre_header
                  _
                $region45: #{_normalize.4} parent=42 // loop_header
                  %s156 = sphi 0, %s160
                  %p157 = scmp.ge.s32.totalorder %s156, 1
                  %s161 = sphi %s131, %s131
                  %s162 = sphi %s128, %s128
                $region46: #{_normalize.4} parent=42 // loop_header_branch
                  %159 = sbr.rel (%p157) target = $region50
                $region47: #{_normalize.4} parent=42 // loop_body
                  %v163 = vld [vmem:[%s161] sm:$0xff]
                  %164 = vst [vmem:[%s162] sm:$0xff] %v163
                  %v165 = vld [vmem:[%s161 + $0x10] sm:$0xff]
                  %166 = vst [vmem:[%s162 + $0x8] sm:$0xff] %v165
                  %v167 = vld [vmem:[%s161 + $0x20] sm:$0xff]
                  %168 = vst [vmem:[%s162 + $0x10] sm:$0xff] %v167
                $region48: #{_normalize.4} parent=42 // loop_footer
                  %s160 = sadd.s32 1, %s156
                $region49: #{_normalize.4} parent=42 // loop_footer_branch
                  %155 = sbr.rel target = $region45
                $region50: #{_normalize.4} parent=42 // loop_exit
                  _
              $region43: #{_normalize.4} parent=27 // pred_fallthru
                _
              // Predicated region
              $region51: #{_normalize.4} parent=27 // pred_check
                _
              $region52: #{_normalize.4} parent=27 // pred_check_branch
                %170 = sbr.rel target = $region54
              $region53: #{_normalize.4} parent=27 // pred_region
                _
              $region54: #{_normalize.4} parent=27 // pred_fallthru
                _
            $region28: #{_normalize.4} parent=23 // pred_fallthru
              _
            // Predicated region
            $region29: #{_normalize.4} parent=23 // pred_check
              _
            $region30: #{_normalize.4} parent=23 // pred_check_branch
              %137 = sbr.rel target = $region32
            $region31: #{_normalize.4} parent=23 // pred_region
              loop: start=0, step=1, limit=1
              $region33: #{_normalize.4} parent=31 // loop_pre_header
                _
              $region34: #{_normalize.4} parent=31 // loop_header
                %s140 = sphi 0, %s144
                %p141 = scmp.ge.s32.totalorder %s140, 1
                %s145 = sphi %s131, %s131
                %s146 = sphi %s128, %s128
              $region35: #{_normalize.4} parent=31 // loop_header_branch
                %143 = sbr.rel (%p141) target = $region39
              $region36: #{_normalize.4} parent=31 // loop_body
                %v147 = vld [vmem:[%s145] sm:$0xff]
                %148 = vst [vmem:[%s146] sm:$0xff] %v147
                %v149 = vld [vmem:[%s145 + $0x10] sm:$0xff]
                %150 = vst [vmem:[%s146 + $0x8] sm:$0xff] %v149
                %v151 = vld [vmem:[%s145 + $0x20] sm:$0xff]
                %152 = vst [vmem:[%s146 + $0x10] sm:$0xff] %v151
              $region37: #{_normalize.4} parent=31 // loop_footer
                %s144 = sadd.s32 1, %s140
              $region38: #{_normalize.4} parent=31 // loop_footer_branch
                %139 = sbr.rel target = $region34
              $region39: #{_normalize.4} parent=31 // loop_exit
                _
            $region32: #{_normalize.4} parent=23 // pred_fallthru
              _
          $region24: #{_normalize.4} parent=19 // pred_fallthru
            _
          %171 = vnop
        $region20: #{_normalize.4} parent=15 // pred_fallthru
          _
      $region16: #{_normalize.4} parent=5 // pred_fallthru
        _
      %p172 = scmp.le.s32.totalorder 1, %s9
      %p173 = scmp.lt.s32.totalorder %s9, 3
      %p174 = pnand %p172, %p173
      %p175 = pneg %p174
      // Predicated region
      $region55: #{_normalize.4} parent=5 // pred_check
        _
      $region56: #{_normalize.4} parent=5 // pred_check_branch
        %177 = sbr.rel (%p174) target = $region58
      $region57: #{_normalize.4} parent=5 // pred_region
        %s178 = ssub.s32 %s9, 1
        %s179 = sand.u32 %s36, 1
        %s180 = sand.u32 %s36, 1
        %s181 = smul.addr %s180, 24
        %s182 = scalar_lea.vmem [#allocation2], %s181
        // Predicated region
        $region59: #{_normalize.4} parent=57 // pred_check
          %p183 = pneg %p49
        $region60: #{_normalize.4} parent=57 // pred_check_branch
          %185 = sbr.rel (%p183) target = $region62
        $region61: #{_normalize.4} parent=57 // pred_region
          _
        $region62: #{_normalize.4} parent=57 // pred_fallthru
          _
        %s186 = sand.u32 %s36, 1
        %s187 = sand.u32 %s36, 1
        %s188 = smul.addr %s187, 24
        %s189 = scalar_lea.vmem [#allocation2], %s188
        %p190 = pneg %p49
        %p191 = pneg %p46
        %p192 = pneg %p77
        %p193 = pneg %p74
        %s194 = sand.u32 %s64, 1
        %s195 = sand.u32 %s64, 1
        %s196 = smul.addr %s195, 24
        %s197 = scalar_lea.vmem [#allocation3], %s196
        %p198 = pneg %p103
        %p199 = pneg %p100
        %p200 = scmp.lt.s32.totalorder %s18, 1
        %s201 = scalar_select %p200, %s18, 1
        %s202 = smul.addr %s201, 10
        %s203 = smul.addr %s202, 8
        %s204 = scalar_lea.vmem %s2, %s203
        %s205 = sadd.s32 %s18, %s19
        %s206 = sadd.s32 %s18, %s19
        %p207 = scmp.lt.s32.totalorder %s18, 1
        %s208 = scalar_select %p207, %s18, 1
        %s209 = smul.addr %s208, 10
        %s210 = smul.addr %s209, 8
        %s211 = scalar_lea.vmem %s2, %s210
        %p212 = scmp.eq.s32.totalorder %s19, 0
        // Predicated region
        $region63: #{_normalize.4} parent=57 // pred_check
          %p213 = pneg %p212
        $region64: #{_normalize.4} parent=57 // pred_check_branch
          %215 = sbr.rel (%p213) target = $region66
        $region65: #{_normalize.4} parent=57 // pred_region
          %216 = vst [vmem:[%s211] sm:$0xff] 0.0
          %217 = vst [vmem:[%s211 + $0x8] sm:$0xff] 0.0
          %218 = vst [vmem:[%s211 + $0x10] sm:$0xff] 0.0
          %219 = vst [vmem:[%s211 + $0x18] sm:$0xff] 0.0
          %220 = vst [vmem:[%s211 + $0x20] sm:$0xff] 0.0
          %221 = vst [vmem:[%s211 + $0x28] sm:$0xff] 0.0
          %222 = vst [vmem:[%s211 + $0x30] sm:$0xff] 0.0
          %223 = vst [vmem:[%s211 + $0x38] sm:$0xff] 0.0
          %224 = vst [vmem:[%s211 + $0x40] sm:$0xff] 0.0
          %225 = vst [vmem:[%s211 + $0x48] sm:$0xff] 0.0
        $region66: #{_normalize.4} parent=57 // pred_fallthru
          _
        %v226 = vld [vmem:[%s182] sm:$0xff]
        %v227 = vld [vmem:[%s182 + $0x8] sm:$0xff]
        %v228 = vld [vmem:[%s182 + $0x10] sm:$0xff]
        %v229 = vadd.f32 %v226, 1.0
        %v230 = vadd.f32 %v227, 1.0
        %v231 = vadd.f32 %v228, 1.0
        %v232 = vmul.f32 %v229, 0.004166667
        %v233 = vmul.f32 %v230, 0.004166667
        %v234 = vmul.f32 %v231, 0.004166667
        %v235 = vlog2.pop %v232
        %v236 = vmul.f32 %v235, 0.6931472
        %v237 = vlog2.pop %v233
        %v238 = vmul.f32 %v237, 0.6931472
        %v239 = vlog2.pop %v234
        %v240 = vmul.f32 %v239, 0.6931472
        %v241 = vsub.f32 0.0, %v236
        %v242 = vsub.f32 0.0, %v238
        %v243 = vsub.f32 0.0, %v240
        %244 = vst [vmem:[%s197] sm:$0xff] %v241
        %245 = vst [vmem:[%s197 + $0x8] sm:$0xff] %v242
        %246 = vst [vmem:[%s197 + $0x10] sm:$0xff] %v243
        %v247 = vmin.f32 %v241, %v242
        %v248 = vmin.f32 %v247, %v243
        %vm249 = vcmp.ge.f32.partialorder %v248, 0.15
        %v250 = vsel %vm249, 1, 0
        %v251 = vcvt.s32.f32 %v250
        %v252 = vmul.f32 %v251, %v241
        %v253 = vmul.f32 %v251, %v242
        %v254 = vmul.f32 %v251, %v243
        %v255 = vld [vmem:[%s211] sm:$0xff]
        %v256 = vmul.f32 %v252, %v241
        %v257 = vadd.f32 %v255, %v256
        %258 = vst [vmem:[%s211] sm:$0xff] %v257
        %s259 = scalar_lea.vmem %s211, 8
        %v260 = vld [vmem:[%s259] sm:$0xff]
        %v261 = vmul.f32 %v252, %v242
        %v262 = vadd.f32 %v260, %v261
        %263 = vst [vmem:[%s259] sm:$0xff] %v262
        %s264 = scalar_lea.vmem %s211, 16
        %v265 = vld [vmem:[%s264] sm:$0xff]
        %v266 = vmul.f32 %v252, %v243
        %v267 = vadd.f32 %v265, %v266
        %268 = vst [vmem:[%s264] sm:$0xff] %v267
        %s269 = scalar_lea.vmem %s211, 24
        %v270 = vld [vmem:[%s269] sm:$0xff]
        %v271 = vmul.f32 %v253, %v242
        %v272 = vadd.f32 %v270, %v271
        %273 = vst [vmem:[%s269] sm:$0xff] %v272
        %s274 = scalar_lea.vmem %s211, 32
        %v275 = vld [vmem:[%s274] sm:$0xff]
        %v276 = vmul.f32 %v253, %v243
        %v277 = vadd.f32 %v275, %v276
        %278 = vst [vmem:[%s274] sm:$0xff] %v277
        %s279 = scalar_lea.vmem %s211, 40
        %v280 = vld [vmem:[%s279] sm:$0xff]
        %v281 = vmul.f32 %v254, %v243
        %v282 = vadd.f32 %v280, %v281
        %283 = vst [vmem:[%s279] sm:$0xff] %v282
        %s284 = scalar_lea.vmem %s211, 48
        %v285 = vld [vmem:[%s284] sm:$0xff]
        %v286 = vadd.f32 %v285, %v252
        %287 = vst [vmem:[%s284] sm:$0xff] %v286
        %s288 = scalar_lea.vmem %s211, 56
        %v289 = vld [vmem:[%s288] sm:$0xff]
        %v290 = vadd.f32 %v289, %v253
        %291 = vst [vmem:[%s288] sm:$0xff] %v290
        %s292 = scalar_lea.vmem %s211, 64
        %v293 = vld [vmem:[%s292] sm:$0xff]
        %v294 = vadd.f32 %v293, %v254
        %295 = vst [vmem:[%s292] sm:$0xff] %v294
        %s296 = scalar_lea.vmem %s211, 72
        %v297 = vld [vmem:[%s296] sm:$0xff]
        %v298 = vadd.f32 %v297, %v251
        %299 = vst [vmem:[%s296] sm:$0xff] %v298
        %s300 = sand.u32 %s64, 1
        %s301 = sand.u32 %s64, 1
        %s302 = smul.addr %s301, 24
        %s303 = scalar_lea.vmem [#allocation3], %s302
        %p304 = scmp.lt.s32.totalorder %s18, 1
        %s305 = scalar_select %p304, %s18, 1
        %s306 = smul.addr %s305, 10
        %s307 = smul.addr %s306, 8
        %s308 = scalar_lea.vmem %s2, %s307
        // Predicated region
        $region67: #{_normalize.4} parent=57 // pred_check
          %p309 = pneg %p74
        $region68: #{_normalize.4} parent=57 // pred_check_branch
          %311 = sbr.rel (%p309) target = $region70
        $region69: #{_normalize.4} parent=57 // pred_region
          %s312 = sadd.s32 %s18, %s19
          %s313 = smul.addr %s312, 8
          %s314 = scalar_lea.vmem %s1, %s313
          // Predicated region
          $region71: #{_normalize.4} parent=69 // pred_check
            _
          $region72: #{_normalize.4} parent=69 // pred_check_branch
            %316 = sbr.rel (0) target = $region74
          $region73: #{_normalize.4} parent=69 // pred_region
            // Predicated region
            $region75: #{_normalize.4} parent=73 // pred_check
              _
            $region76: #{_normalize.4} parent=73 // pred_check_branch
              %318 = sbr.rel (0) target = $region78
            $region77: #{_normalize.4} parent=73 // pred_region
              // Predicated region
              $region90: #{_normalize.4} parent=77 // pred_check
                _
              $region91: #{_normalize.4} parent=77 // pred_check_branch
                %337 = sbr.rel (0) target = $region93
              $region92: #{_normalize.4} parent=77 // pred_region
                loop: start=0, step=1, limit=1
                $region94: #{_normalize.4} parent=92 // loop_pre_header
                  _
                $region95: #{_normalize.4} parent=92 // loop_header
                  %s339 = sphi 0, %s343
                  %p340 = scmp.ge.s32.totalorder %s339, 1
                  %s344 = sphi %s303, %s303
                  %s345 = sphi %s314, %s314
                $region96: #{_normalize.4} parent=92 // loop_header_branch
                  %342 = sbr.rel (%p340) target = $region100
                $region97: #{_normalize.4} parent=92 // loop_body
                  %v346 = vld [vmem:[%s344] sm:$0xff]
                  %347 = vst [vmem:[%s345] sm:$0xff] %v346
                  %v348 = vld [vmem:[%s344 + $0x8] sm:$0xff]
                  %349 = vst [vmem:[%s345 + $0x10] sm:$0xff] %v348
                  %v350 = vld [vmem:[%s344 + $0x10] sm:$0xff]
                  %351 = vst [vmem:[%s345 + $0x20] sm:$0xff] %v350
                $region98: #{_normalize.4} parent=92 // loop_footer
                  %s343 = sadd.s32 1, %s339
                $region99: #{_normalize.4} parent=92 // loop_footer_branch
                  %338 = sbr.rel target = $region95
                $region100: #{_normalize.4} parent=92 // loop_exit
                  _
              $region93: #{_normalize.4} parent=77 // pred_fallthru
                _
              // Predicated region
              $region101: #{_normalize.4} parent=77 // pred_check
                _
              $region102: #{_normalize.4} parent=77 // pred_check_branch
                %353 = sbr.rel target = $region104
              $region103: #{_normalize.4} parent=77 // pred_region
                _
              $region104: #{_normalize.4} parent=77 // pred_fallthru
                _
            $region78: #{_normalize.4} parent=73 // pred_fallthru
              _
            // Predicated region
            $region79: #{_normalize.4} parent=73 // pred_check
              _
            $region80: #{_normalize.4} parent=73 // pred_check_branch
              %320 = sbr.rel target = $region82
            $region81: #{_normalize.4} parent=73 // pred_region
              loop: start=0, step=1, limit=1
              $region83: #{_normalize.4} parent=81 // loop_pre_header
                _
              $region84: #{_normalize.4} parent=81 // loop_header
                %s323 = sphi 0, %s327
                %p324 = scmp.ge.s32.totalorder %s323, 1
                %s328 = sphi %s303, %s303
                %s329 = sphi %s314, %s314
              $region85: #{_normalize.4} parent=81 // loop_header_branch
                %326 = sbr.rel (%p324) target = $region89
              $region86: #{_normalize.4} parent=81 // loop_body
                %v330 = vld [vmem:[%s328] sm:$0xff]
                %331 = vst [vmem:[%s329] sm:$0xff] %v330
                %v332 = vld [vmem:[%s328 + $0x8] sm:$0xff]
                %333 = vst [vmem:[%s329 + $0x10] sm:$0xff] %v332
                %v334 = vld [vmem:[%s328 + $0x10] sm:$0xff]
                %335 = vst [vmem:[%s329 + $0x20] sm:$0xff] %v334
              $region87: #{_normalize.4} parent=81 // loop_footer
                %s327 = sadd.s32 1, %s323
              $region88: #{_normalize.4} parent=81 // loop_footer_branch
                %322 = sbr.rel target = $region84
              $region89: #{_normalize.4} parent=81 // loop_exit
                _
            $region82: #{_normalize.4} parent=73 // pred_fallthru
              _
          $region74: #{_normalize.4} parent=69 // pred_fallthru
            _
          %354 = vnop
        $region70: #{_normalize.4} parent=57 // pred_fallthru
          _
        // Predicated region
        $region105: #{_normalize.4} parent=57 // pred_check
          %p355 = pneg %p100
        $region106: #{_normalize.4} parent=57 // pred_check_branch
          %357 = sbr.rel (%p355) target = $region108
        $region107: #{_normalize.4} parent=57 // pred_region
          _
        $region108: #{_normalize.4} parent=57 // pred_fallthru
          _
      $region58: #{_normalize.4} parent=5 // pred_fallthru
        _
      %p358 = scmp.le.s32.totalorder 2, %s9
      // Predicated region
      $region109: #{_normalize.4} parent=5 // pred_check
        %p359 = pneg %p358
      $region110: #{_normalize.4} parent=5 // pred_check_branch
        %361 = sbr.rel (%p359) target = $region112
      $region111: #{_normalize.4} parent=5 // pred_region
        %s362 = ssub.s32 %s9, 2
        // Predicated region
        $region113: #{_normalize.4} parent=111 // pred_check
          %p363 = pneg %p80
        $region114: #{_normalize.4} parent=111 // pred_check_branch
          %365 = sbr.rel (%p363) target = $region116
        $region115: #{_normalize.4} parent=111 // pred_region
          %s366 = sand.u32 %s65, 1
          %s367 = sand.u32 %s65, 1
          %s368 = smul.addr %s367, 24
          %s369 = scalar_lea.vmem [#allocation3], %s368
        $region116: #{_normalize.4} parent=111 // pred_fallthru
          _
        // Predicated region
        $region117: #{_normalize.4} parent=111 // pred_check
          %p370 = pneg %p106
        $region118: #{_normalize.4} parent=111 // pred_check_branch
          %372 = sbr.rel (%p370) target = $region120
        $region119: #{_normalize.4} parent=111 // pred_region
          %p373 = scmp.lt.s32.totalorder %s20, 1
          %s374 = scalar_select %p373, %s20, 1
          %s375 = smul.addr %s374, 10
          %s376 = smul.addr %s375, 8
          %s377 = scalar_lea.vmem %s2, %s376
        $region120: #{_normalize.4} parent=111 // pred_fallthru
          _
      $region112: #{_normalize.4} parent=5 // pred_fallthru
        _
    $region6: #{_normalize.4} parent=1 // loop_footer
      %s13 = sadd.s32 1, %s9
    $region7: #{_normalize.4} parent=1 // loop_footer_branch
      %8 = sbr.rel target = $region3
    $region8: #{_normalize.4} parent=1 // loop_exit
      _

// kernel: _normalize.5
$region0: #{_normalize.5}
  #allocation0 [shape = 'u32[]', space=smem, size = 0x4, offset = 0x4, fixed_abs, tag = 'smem constant byte address 0x4 - core index']
  #allocation1 [shape = 'u32[144,128]{1,0:T(1,128)}', space=vmem, size = 0x12000, scoped, tag = 'internal scratch']
  %s0 = inlined_call_operand.vmem [shape: f32[2,3], index: 0, kind: input, shape index: {}]
  %s1 = inlined_call_operand.vmem [shape: f32[3,16,128], index: 1, kind: input, shape index: {}]
  %s2 = inlined_call_operand.vmem [shape: f32[16,128], index: 2, kind: output, shape index: {}]
  %s3 = sld [smem:[#allocation0]]
  $region83: #{_normalize.5} parent=0
    _
  %s5 = ssub.s32 1, %s3
  %s6 = scalar_select 0, %s5, %s3
  $region1: #{_normalize.5} parent=0
    #allocation2 [shape = 'u8[1024]{0}', space=smem, size = 0x400, scoped, tag = 'input window, operand 0, single buffered']
    #allocation3 [shape = 's32[2]{0}', space=sflag, size = 0x8, scoped, tag = 'scoped memory for _normalize.5']
    #allocation4 [shape = 'u8[24576]{0}', space=vmem, size = 0x6000, scoped, tag = 'input window, operand 1']
    %7 = vsyncpa [#allocation3], 0
    loop: start=0, step=1, limit=4
    $region2: #{_normalize.5} parent=1 // loop_pre_header
      _
    $region3: #{_normalize.5} parent=1 // loop_header
      %s9 = sphi 0, %s13
      %p10 = scmp.ge.s32.totalorder %s9, 4
      %s17 = sphi 0, %s17
      %s19 = sphi 0, %s17
      %s20 = sphi 0, %s19
      %s34 = sphi 0, %s20
      %s40 = sphi 0, %s42
      %s43 = sphi 0, %s40
      %s44 = sphi 0, %s43
      %s60 = sphi 0, %s44
      %s66 = sphi 0, %s68
      %s69 = sphi 0, %s66
      %s70 = sphi 0, %s69
      %s86 = sphi 0, %s70
    $region4: #{_normalize.5} parent=1 // loop_header_branch
      %12 = sbr.rel (%p10) target = $region8
    $region5: #{_normalize.5} parent=1 // loop_body
      %s14 = ssub.s32 %s9, 1
      %s15 = ssub.s32 %s9, 2
      %s16 = sadd.s32 %s9, 1
      %s18 = sadd.s32 %s17, 1
      %p21 = scmp.eq.s32.totalorder %s9, 1
      %p22 = scmp.ne.s32.totalorder %s17, %s19
      %p23 = scmp.eq.s32.totalorder %s9, 0
      %p24 = por %p22, %p23
      %p25 = scmp.ne.s32.totalorder %s17, %s19
      %p26 = scmp.eq.s32.totalorder %s14, 1
      %p27 = por %p25, %p26
      %p28 = scmp.ne.s32.totalorder %s19, %s20
      %p29 = scmp.eq.s32.totalorder %s14, 0
      %p30 = por %p28, %p29
      %p31 = scmp.ne.s32.totalorder %s19, %s20
      %p32 = scmp.eq.s32.totalorder %s15, 1
      %p33 = por %p31, %p32
      %p35 = scmp.ne.s32.totalorder %s20, %s34
      %p36 = scmp.eq.s32.totalorder %s15, 0
      %p37 = por %p35, %p36
      %s38 = ssub.s32 %s9, %s16
      %p39 = scmp.eq.s32.totalorder %s38, 0
      %s41 = sadd.s32 %s40, 1
      %s42 = scalar_select %p39, %s40, %s41
      %p45 = pneg %p39
      %p46 = scmp.eq.s32.totalorder %s9, 1
      %p47 = por %p45, %p46
      %p48 = scmp.ne.s32.totalorder %s40, %s43
      %p49 = scmp.eq.s32.totalorder %s9, 0
      %p50 = por %p48, %p49
      %p51 = scmp.ne.s32.totalorder %s40, %s43
      %p52 = scmp.eq.s32.totalorder %s14, 1
      %p53 = por %p51, %p52
      %p54 = scmp.ne.s32.totalorder %s43, %s44
      %p55 = scmp.eq.s32.totalorder %s14, 0
      %p56 = por %p54, %p55
      %p57 = scmp.ne.s32.totalorder %s43, %s44
      %p58 = scmp.eq.s32.totalorder %s15, 1
      %p59 = por %p57, %p58
      %p61 = scmp.ne.s32.totalorder %s44, %s60
      %p62 = scmp.eq.s32.totalorder %s15, 0
      %p63 = por %p61, %p62
      %s64 = ssub.s32 %s9, %s16
      %p65 = scmp.eq.s32.totalorder %s64, 0
      %s67 = sadd.s32 %s66, 1
      %s68 = scalar_select %p65, %s66, %s67
      %p71 = pneg %p65
      %p72 = scmp.eq.s32.totalorder %s9, 1
      %p73 = por %p71, %p72
      %p74 = scmp.ne.s32.totalorder %s66, %s69
      %p75 = scmp.eq.s32.totalorder %s9, 0
      %p76 = por %p74, %p75
      %p77 = scmp.ne.s32.totalorder %s66, %s69
      %p78 = scmp.eq.s32.totalorder %s14, 1
      %p79 = por %p77, %p78
      %p80 = scmp.ne.s32.totalorder %s69, %s70
      %p81 = scmp.eq.s32.totalorder %s14, 0
      %p82 = por %p80, %p81
      %p83 = scmp.ne.s32.totalorder %s69, %s70
      %p84 = scmp.eq.s32.totalorder %s15, 1
      %p85 = por %p83, %p84
      %p87 = scmp.ne.s32.totalorder %s70, %s86
      %p88 = scmp.eq.s32.totalorder %s15, 0
      %p89 = por %p87, %p88
      %p90 = scmp.le.s32.totalorder 1, %s9
      %p91 = scmp.lt.s32.totalorder %s9, 3
      %p92 = pnand %p90, %p91
      %p93 = pneg %p92
      // Predicated region
      $region9: #{_normalize.5} parent=5 // pred_check
        _
      $region10: #{_normalize.5} parent=5 // pred_check_branch
        %95 = sbr.rel (%p92) target = $region12
      $region11: #{_normalize.5} parent=5 // pred_region
        %s96 = ssub.s32 %s9, 1
        // Predicated region
        $region13: #{_normalize.5} parent=11 // pred_check
          %p97 = pneg %p30
        $region14: #{_normalize.5} parent=11 // pred_check_branch
          %99 = sbr.rel (%p97) target = $region16
        $region15: #{_normalize.5} parent=11 // pred_region
          %s101 = ssub.s32 32, 32
          %102 = vsyncadd [#allocation3], %s101
          %s104 = sshll.u32 %s0, 4
          %s105 = int_to_ptr.vmem [resolvable:$true] %s104
          %107 = dma.vmem_to_smem %s105, 32, [#allocation2], [#allocation3]
        $region16: #{_normalize.5} parent=11 // pred_fallthru
          _
      $region12: #{_normalize.5} parent=5 // pred_fallthru
        _
      %p108 = scmp.lt.s32.totalorder %s9, 2
      // Predicated region
      $region17: #{_normalize.5} parent=5 // pred_check
        %p109 = pneg %p108
      $region18: #{_normalize.5} parent=5 // pred_check_branch
        %111 = sbr.rel (%p109) target = $region20
      $region19: #{_normalize.5} parent=5 // pred_region
        // Predicated region
        $region21: #{_normalize.5} parent=19 // pred_check
          %p112 = pneg %p50
        $region22: #{_normalize.5} parent=19 // pred_check_branch
          %114 = sbr.rel (%p112) target = $region24
        $region23: #{_normalize.5} parent=19 // pred_region
          %s115 = sand.u32 %s40, 1
          %s116 = sand.u32 %s40, 1
          %s117 = smul.addr %s116, 24
          %s118 = scalar_lea.vmem [#allocation4], %s117
          %s119 = smul.addr %s9, 8
          %s120 = scalar_lea.vmem %s1, %s119
          // Predicated region
          $region25: #{_normalize.5} parent=23 // pred_check
            _
          $region26: #{_normalize.5} parent=23 // pred_check_branch
            %122 = sbr.rel (0) target = $region28
          $region27: #{_normalize.5} parent=23 // pred_region
            // Predicated region
            $region29: #{_normalize.5} parent=27 // pred_check
              _
            $region30: #{_normalize.5} parent=27 // pred_check_branch
              %124 = sbr.rel (0) target = $region32
            $region31: #{_normalize.5} parent=27 // pred_region
              // Predicated region
              $region44: #{_normalize.5} parent=31 // pred_check
                _
              $region45: #{_normalize.5} parent=31 // pred_check_branch
                %143 = sbr.rel (0) target = $region47
              $region46: #{_normalize.5} parent=31 // pred_region
                loop: start=0, step=1, limit=1
                $region48: #{_normalize.5} parent=46 // loop_pre_header
                  _
                $region49: #{_normalize.5} parent=46 // loop_header
                  %s145 = sphi 0, %s149
                  %p146 = scmp.ge.s32.totalorder %s145, 1
                  %s150 = sphi %s120, %s120
                  %s151 = sphi %s118, %s118
                $region50: #{_normalize.5} parent=46 // loop_header_branch
                  %148 = sbr.rel (%p146) target = $region54
                $region51: #{_normalize.5} parent=46 // loop_body
                  %v152 = vld [vmem:[%s150] sm:$0xff]
                  %153 = vst [vmem:[%s151] sm:$0xff] %v152
                  %v154 = vld [vmem:[%s150 + $0x10] sm:$0xff]
                  %155 = vst [vmem:[%s151 + $0x8] sm:$0xff] %v154
                  %v156 = vld [vmem:[%s150 + $0x20] sm:$0xff]
                  %157 = vst [vmem:[%s151 + $0x10] sm:$0xff] %v156
                $region52: #{_normalize.5} parent=46 // loop_footer
                  %s149 = sadd.s32 1, %s145
                $region53: #{_normalize.5} parent=46 // loop_footer_branch
                  %144 = sbr.rel target = $region49
                $region54: #{_normalize.5} parent=46 // loop_exit
                  _
              $region47: #{_normalize.5} parent=31 // pred_fallthru
                _
              // Predicated region
              $region55: #{_normalize.5} parent=31 // pred_check
                _
              $region56: #{_normalize.5} parent=31 // pred_check_branch
                %159 = sbr.rel target = $region58
              $region57: #{_normalize.5} parent=31 // pred_region
                _
              $region58: #{_normalize.5} parent=31 // pred_fallthru
                _
            $region32: #{_normalize.5} parent=27 // pred_fallthru
              _
            // Predicated region
            $region33: #{_normalize.5} parent=27 // pred_check
              _
            $region34: #{_normalize.5} parent=27 // pred_check_branch
              %126 = sbr.rel target = $region36
            $region35: #{_normalize.5} parent=27 // pred_region
              loop: start=0, step=1, limit=1
              $region37: #{_normalize.5} parent=35 // loop_pre_header
                _
              $region38: #{_normalize.5} parent=35 // loop_header
                %s129 = sphi 0, %s133
                %p130 = scmp.ge.s32.totalorder %s129, 1
                %s134 = sphi %s120, %s120
                %s135 = sphi %s118, %s118
              $region39: #{_normalize.5} parent=35 // loop_header_branch
                %132 = sbr.rel (%p130) target = $region43
              $region40: #{_normalize.5} parent=35 // loop_body
                %v136 = vld [vmem:[%s134] sm:$0xff]
                %137 = vst [vmem:[%s135] sm:$0xff] %v136
                %v138 = vld [vmem:[%s134 + $0x10] sm:$0xff]
                %139 = vst [vmem:[%s135 + $0x8] sm:$0xff] %v138
                %v140 = vld [vmem:[%s134 + $0x20] sm:$0xff]
                %141 = vst [vmem:[%s135 + $0x10] sm:$0xff] %v140
              $region41: #{_normalize.5} parent=35 // loop_footer
                %s133 = sadd.s32 1, %s129
              $region42: #{_normalize.5} parent=35 // loop_footer_branch
                %128 = sbr.rel target = $region38
              $region43: #{_normalize.5} parent=35 // loop_exit
                _
            $region36: #{_normalize.5} parent=27 // pred_fallthru
              _
          $region28: #{_normalize.5} parent=23 // pred_fallthru
            _
          %160 = vnop
        $region24: #{_normalize.5} parent=19 // pred_fallthru
          _
      $region20: #{_normalize.5} parent=5 // pred_fallthru
        _
      %p161 = scmp.le.s32.totalorder 1, %s9
      %p162 = scmp.lt.s32.totalorder %s9, 3
      %p163 = pnand %p161, %p162
      %p164 = pneg %p163
      // Predicated region
      $region59: #{_normalize.5} parent=5 // pred_check
        _
      $region60: #{_normalize.5} parent=5 // pred_check_branch
        %166 = sbr.rel (%p163) target = $region62
      $region61: #{_normalize.5} parent=5 // pred_region
        %s167 = ssub.s32 %s9, 1
        // Predicated region
        $region63: #{_normalize.5} parent=61 // pred_check
          %p168 = pneg %p30
        $region64: #{_normalize.5} parent=61 // pred_check_branch
          %170 = sbr.rel (%p168) target = $region66
        $region65: #{_normalize.5} parent=61 // pred_region
          %171 = dma.done [#allocation3], 32
        $region66: #{_normalize.5} parent=61 // pred_fallthru
          _
        %s172 = sand.u32 %s43, 1
        %s173 = sand.u32 %s43, 1
        %s174 = smul.addr %s173, 24
        %s175 = scalar_lea.vmem [#allocation4], %s174
        // Predicated region
        $region67: #{_normalize.5} parent=61 // pred_check
          %p176 = pneg %p56
        $region68: #{_normalize.5} parent=61 // pred_check_branch
          %178 = sbr.rel (%p176) target = $region70
        $region69: #{_normalize.5} parent=61 // pred_region
          _
        $region70: #{_normalize.5} parent=61 // pred_fallthru
          _
        %179 = sfence
        %p180 = pneg %p30
        %p181 = pneg %p27
        %s182 = sand.u32 %s43, 1
        %s183 = sand.u32 %s43, 1
        %s184 = smul.addr %s183, 24
        %s185 = scalar_lea.vmem [#allocation4], %s184
        %p186 = pneg %p56
        %p187 = pneg %p53
        %p188 = pneg %p82
        %p189 = pneg %p79
        %p190 = scmp.lt.s32.totalorder %s14, 1
        %s191 = scalar_select %p190, %s14, 1
        %s192 = smul.addr %s191, 8
        %s193 = scalar_lea.vmem %s2, %s192
        %p194 = scmp.lt.s32.totalorder %s14, 1
        %s195 = scalar_select %p194, %s14, 1
        %s196 = smul.addr %s195, 8
        %s197 = scalar_lea.vmem %s2, %s196
        %v198 = vld [vmem:[%s175] sm:$0xff]
        %v199 = vld [vmem:[%s175 + $0x8] sm:$0xff]
        %v200 = vld [vmem:[%s175 + $0x10] sm:$0xff]
        %v201 = vmin.f32 %v198, %v199
        %v202 = vmin.f32 %v201, %v200
        %vm203 = vcmp.ge.f32.partialorder %v202, 0.15
        %s204 = sld [smem:[#allocation2]]
        %v205 = vstv %s204
        %v206 = vmul.f32 %v205, %v198
        %s207 = sld [smem:[#allocation2 + $0x1]]
        %v208 = vstv %s207
        %v209 = vmul.f32 %v208, %v199
        %v210 = vadd.f32 %v206, %v209
        %s211 = sld [smem:[#allocation2 + $0x2]]
        %v212 = vstv %s211
        %v213 = vmul.f32 %v212, %v200
        %v214 = vadd.f32 %v210, %v213
        %s215 = sld [smem:[#allocation2 + $0x80]]
        %v216 = vstv %s215
        %v217 = vmul.f32 %v216, %v198
        %s218 = sld [smem:[#allocation2 + $0x81]]
        %v219 = vstv %s218
        %v220 = vmul.f32 %v219, %v199
        %v221 = vadd.f32 %v217, %v220
        %s222 = sld [smem:[#allocation2 + $0x82]]
        %v223 = vstv %s222
        %v224 = vmul.f32 %v223, %v200
        %v225 = vadd.f32 %v221, %v224
        %v226 = vand.u32 2147483647, %v214
        %v227 = vand.u32 2147483647, %v225
        %v228 = vmax.f32 %v226, %v227
        %v229 = vmin.f32 %v226, %v227
        %v230 = vmax.f32 %v228, 1e-30
        %v231 = vrcp.pop %v230
        %v232 = vmul.f32 %v229, %v231
        %vm233 = vcmp.gt.f32.partialorder %v232, 0.41421357
        %v234 = vsub.f32 %v232, 1.0
        %v235 = vadd.f32 %v232, 1.0
        %v236 = vrcp.pop %v235
        %v237 = vmul.f32 %v234, %v236
        %v238 = vsel %vm233, %v237, %v232
        %v239 = vmul.f32 %v238, %v238
        %v240 = vmul.f32 %v239, 0.080537446
        %v241 = vsub.f32 %v240, 0.13877685
        %v242 = vmul.f32 %v241, %v239
        %v243 = vadd.f32 %v242, 0.19977711
        %v244 = vmul.f32 %v243, %v239
        %v245 = vsub.f32 %v244, 0.3333295
        %v246 = vmul.f32 %v245, %v239
        %v247 = vmul.f32 %v246, %v238
        %v248 = vadd.f32 %v247, %v238
        %v249 = vadd.f32 %v248, 0.7853982
        %v250 = vsel %vm233, %v249, %v248
        %vm251 = vcmp.gt.f32.partialorder %v227, %v226
        %v252 = vsub.f32 1.5707964, %v250
        %v253 = vsel %vm251, %v252, %v250
        %vm254 = vcmp.lt.f32.partialorder %v214, 0.0
        %v255 = vsub.f32 3.1415927, %v253
        %v256 = vsel %vm254, %v255, %v253
        %vm257 = vcmp.lt.f32.partialorder %v225, 0.0
        %v258 = vsub.f32 0.0, %v256
        %v259 = vsel %vm257, %v258, %v256
        %v260 = vsel %vm203, %v259, 1e+30
        %261 = vst [vmem:[%s197] sm:$0xff] %v260
        %p262 = scmp.lt.s32.totalorder %s14, 1
        %s263 = scalar_select %p262, %s14, 1
        %s264 = smul.addr %s263, 8
        %s265 = scalar_lea.vmem %s2, %s264
        // Predicated region
        $region71: #{_normalize.5} parent=61 // pred_check
          %p266 = pneg %p79
        $region72: #{_normalize.5} parent=61 // pred_check_branch
          %268 = sbr.rel (%p266) target = $region74
        $region73: #{_normalize.5} parent=61 // pred_region
          _
        $region74: #{_normalize.5} parent=61 // pred_fallthru
          _
      $region62: #{_normalize.5} parent=5 // pred_fallthru
        _
      %p269 = scmp.le.s32.totalorder 2, %s9
      // Predicated region
      $region75: #{_normalize.5} parent=5 // pred_check
        %p270 = pneg %p269
      $region76: #{_normalize.5} parent=5 // pred_check_branch
        %272 = sbr.rel (%p270) target = $region78
      $region77: #{_normalize.5} parent=5 // pred_region
        %s273 = ssub.s32 %s9, 2
        // Predicated region
        $region79: #{_normalize.5} parent=77 // pred_check
          %p274 = pneg %p85
        $region80: #{_normalize.5} parent=77 // pred_check_branch
          %276 = sbr.rel (%p274) target = $region82
        $region81: #{_normalize.5} parent=77 // pred_region
          %p277 = scmp.lt.s32.totalorder %s15, 1
          %s278 = scalar_select %p277, %s15, 1
          %s279 = smul.addr %s278, 8
          %s280 = scalar_lea.vmem %s2, %s279
        $region82: #{_normalize.5} parent=77 // pred_fallthru
          _
      $region78: #{_normalize.5} parent=5 // pred_fallthru
        _
    $region6: #{_normalize.5} parent=1 // loop_footer
      %s13 = sadd.s32 1, %s9
    $region7: #{_normalize.5} parent=1 // loop_footer_branch
      %8 = sbr.rel target = $region3
    $region8: #{_normalize.5} parent=1 // loop_exit
      _
    %281 = vsyncpa [#allocation3], 1
    %s282 = scalar_lea.sflag [#allocation3], 1
    %283 = vsyncpa %s282, 1

// kernel: custom-call.11
$region0: #{custom-call.11}
  %s0 = inlined_call_operand.vmem [shape: f32[2,2], index: 0, kind: input, shape index: {}]
  %s1 = inlined_call_operand.vmem [shape: f32[2,2], index: 1, kind: output, shape index: {0}]
  %s2 = inlined_call_operand.hbm [shape: s32[2], index: 2, kind: output, shape index: {1}]
  %s3 = inlined_call_operand.vmem [shape: s32[2], index: 3, kind: output, shape index: {2}]
  %4 = xla_tuple %s1, %s2, %s3
  $region1: #{custom-call.11} parent=0
    #allocation0 [shape = 'u8[4096]{0}', space=vmem, size = 0x1000, scoped, tag = 'operand span for operand 0']
    #allocation1 [shape = 'u8[1024]{0}', space=vmem, size = 0x400, scoped, tag = 'packed  for operand 0']
    #allocation2 [shape = 'u8[4096]{0}', space=vmem, size = 0x1000, scoped, tag = 'operand span for operand 1']
    #allocation3 [shape = 'u8[1024]{0}', space=vmem, size = 0x400, scoped, tag = 'packed  for operand 1']
    #allocation4 [shape = 'u8[4096]{0}', space=vmem, size = 0x1000, scoped, tag = 'operand span for operand 2']
    #allocation5 [shape = 'u8[512]{0}', space=vmem, size = 0x400, scoped, tag = 'packed  for operand 2']
    #allocation6 [shape = 's32[1]{0}', space=sflag, size = 0x4, scoped, tag = 'scoped memory for custom-call.11']
    #allocation7 [shape = 'u8[4096]{0}', space=vmem, size = 0x1000, scoped, tag = 'operand span for operand 3']
    #allocation8 [shape = 'u8[512]{0}', space=vmem, size = 0x400, scoped, tag = 'packed  for operand 3']
    #allocation9 [shape = 's32[2,128]{1,0}', space=vmem, size = 0x1000, scoped, tag = 'scratch for permutations']
    %5 = vsyncpa [#allocation6], 0
    %p7 = scmp.gt.s32.totalorder 2, 0
    // Predicated region
    $region2: #{custom-call.11} parent=1 // pred_check
      %p8 = pneg %p7
    $region3: #{custom-call.11} parent=1 // pred_check_branch
      %10 = sbr.rel (%p8) target = $region5
    $region4: #{custom-call.11} parent=1 // pred_region
      %s11 = sshra.s32 2, 3
      %p12 = scmp.gt.s32.totalorder %s11, 0
      // Predicated region
      $region6: #{custom-call.11} parent=4 // pred_check
        %p13 = pneg %p12
      $region7: #{custom-call.11} parent=4 // pred_check_branch
        %15 = sbr.rel (%p13) target = $region9
      $region8: #{custom-call.11} parent=4 // pred_region
        %s16 = ssub.s32 %s11, 1
        %s17 = smul.u32 %s16, 128
        %s18 = sshra.s32 %s17, 4
        %s19 = scalar_lea.vmem %s0, %s18
        %v20 = vld [vmem:[%s0] sm:$0xff]
        // While loop
        $region10: #{custom-call.11} parent=8 // loop_pre_header
          _
        $region11: #{custom-call.11} parent=8 // loop_header
          %s21 = sphi %s0, %s43
          %s22 = sphi [#allocation1], %s44
          %v23 = vphi %v20, %v45
          %s24 = ssub.s32 %s19, 64
          %p25 = scmp.gt.s32.totalorder %s21, %s24
        $region12: #{custom-call.11} parent=8 // loop_header_branch
          %27 = sbr.rel (%p25) target = $region16
        $region13: #{custom-call.11} parent=8 // loop_body
          %28 = vst [vmem:[%s22] sm:$0xff] %v23
          %v29 = vld [vmem:[%s21 + $0x8] sm:$0xff]
          %30 = vst [vmem:[%s22 + $0x8] sm:$0xff] %v29
          %v31 = vld [vmem:[%s21 + $0x10] sm:$0xff]
          %32 = vst [vmem:[%s22 + $0x10] sm:$0xff] %v31
          %v33 = vld [vmem:[%s21 + $0x18] sm:$0xff]
          %34 = vst [vmem:[%s22 + $0x18] sm:$0xff] %v33
          %v35 = vld [vmem:[%s21 + $0x20] sm:$0xff]
          %36 = vst [vmem:[%s22 + $0x20] sm:$0xff] %v35
          %v37 = vld [vmem:[%s21 + $0x28] sm:$0xff]
          %38 = vst [vmem:[%s22 + $0x28] sm:$0xff] %v37
          %v39 = vld [vmem:[%s21 + $0x30] sm:$0xff]
          %40 = vst [vmem:[%s22 + $0x30] sm:$0xff] %v39
          %v41 = vld [vmem:[%s21 + $0x38] sm:$0xff]
          %42 = vst [vmem:[%s22 + $0x38] sm:$0xff] %v41
        $region14: #{custom-call.11} parent=8 // loop_footer
          %s43 = scalar_lea.vmem %s21, 64
          %s44 = scalar_lea.vmem %s22, 64
          %v45 = vld [vmem:[%s21 + $0x40] sm:$0xff]
        $region15: #{custom-call.11} parent=8 // loop_footer_branch
          %46 = sbr.rel target = $region11
        $region16: #{custom-call.11} parent=8 // loop_exit
          _
        // While loop
        $region17: #{custom-call.11} parent=8 // loop_pre_header
          _
        $region18: #{custom-call.11} parent=8 // loop_header
          %s47 = sphi %s21, %s55
          %s48 = sphi %s22, %s56
          %v49 = vphi %v23, %v49
          %p50 = scmp.gt.s32.totalorder %s47, %s19
        $region19: #{custom-call.11} parent=8 // loop_header_branch
          %52 = sbr.rel (%p50) target = $region23
        $region20: #{custom-call.11} parent=8 // loop_body
          %v53 = vld [vmem:[%s47] sm:$0xff]
          %54 = vst [vmem:[%s48] sm:$0xff] %v53
        $region21: #{custom-call.11} parent=8 // loop_footer
          %s55 = scalar_lea.vmem %s47, 8
          %s56 = scalar_lea.vmem %s48, 8
        $region22: #{custom-call.11} parent=8 // loop_footer_branch
          %57 = sbr.rel target = $region18
        $region23: #{custom-call.11} parent=8 // loop_exit
          _
      $region9: #{custom-call.11} parent=4 // pred_fallthru
        _
      %s58 = sand.u32 2, 7
      %s59 = sshllo.u32 0, %s58
      %s60 = smul.u32 %s11, 128
      %s61 = sshra.s32 %s60, 4
      %s62 = scalar_lea.vmem [#allocation1], %s61
      %s63 = smul.u32 %s11, 128
      %s64 = sshra.s32 %s63, 4
      %s65 = scalar_lea.vmem %s0, %s64
      %v66 = vld [vmem:[%s65] sm:%s59]
      %67 = vst [vmem:[%s62] sm:%s59] %v66
    $region5: #{custom-call.11} parent=1 // pred_fallthru
      _
    %s69 = sshllo.u32 0, 2
    %v70 = vld [vmem:[#allocation1] sm:%s69]
    %71 = vst [vmem:[#allocation0] sm:%s69] %v70
    %v72 = vld [vmem:[#allocation0] sm:$0xff]
    %73 = vst [vmem:[#allocation2] sm:$0xff] %v72
    %74 = vst [vmem:[#allocation4] sm:$0x1] 0
    %v75 = vlaneseq
    %v76 = vshrl.u32 %v75, 7
    %v77 = vmov %v76
    %79 = vst [vmem:[#allocation9] sm:$0xff] %v77
    loop: start=0, step=1, limit=2
    $region25: #{custom-call.11} parent=1 // loop_pre_header
      _
    $region26: #{custom-call.11} parent=1 // loop_header
      %s81 = sphi 0, %s85
      %p82 = scmp.ge.s32.totalorder %s81, 2
    $region27: #{custom-call.11} parent=1 // loop_header_branch
      %84 = sbr.rel (%p82) target = $region31
    $region28: #{custom-call.11} parent=1 // loop_body
      %v86 = vstv %s81
      %v87 = vlaneseq
      %v88 = vshrl.u32 %v87, 7
      %v89 = vmov %v88
      %v90 = vld [vmem:[#allocation2] sm:$0xff]
      %v91 = vand.u32 2147483647, %v90
      %v93 = vstv %s81
      %vm94 = vcmp.ge.s32.totalorder %v89, %v93
      %vm95 = vcmp.lt.s32.totalorder %v89, 2
      %vm96 = vmand %vm94, %vm95
      %vm97 = vcmp.lt.f32.partialorder -inf, %v91
      %vm98 = vmand %vm96, %vm97
      %v99 = vsel %vm98, %v89, %v86
      %v100 = vsel %vm98, %v91, -inf
      %v101 = vrot.slane %v100, 1
      %v102 = vrot.slane %v99, 1
      %vm103 = vcmp.ge.f32.partialorder %v101, %v100
      %v104 = vsel %vm103, %v101, %v100
      %v105 = vsel %vm103, %v102, %v99
      %v106 = vrot.slane %v101, 1
      %v107 = vrot.slane %v102, 1
      %vm108 = vcmp.ge.f32.partialorder %v106, %v104
      %v109 = vsel %vm108, %v106, %v104
      %v110 = vsel %vm108, %v107, %v105
      %v111 = vrot.slane %v106, 1
      %v112 = vrot.slane %v107, 1
      %vm113 = vcmp.ge.f32.partialorder %v111, %v109
      %v114 = vsel %vm113, %v111, %v109
      %v115 = vsel %vm113, %v112, %v110
      %v116 = vrot.slane %v111, 1
      %v117 = vrot.slane %v112, 1
      %vm118 = vcmp.ge.f32.partialorder %v116, %v114
      %v119 = vsel %vm118, %v116, %v114
      %v120 = vsel %vm118, %v117, %v115
      %v121 = vrot.slane %v116, 1
      %v122 = vrot.slane %v117, 1
      %vm123 = vcmp.ge.f32.partialorder %v121, %v119
      %v124 = vsel %vm123, %v121, %v119
      %v125 = vsel %vm123, %v122, %v120
      %v126 = vrot.slane %v121, 1
      %v127 = vrot.slane %v122, 1
      %vm128 = vcmp.ge.f32.partialorder %v126, %v124
      %v129 = vsel %vm128, %v126, %v124
      %v130 = vsel %vm128, %v127, %v125
      %v131 = vrot.slane %v126, 1
      %v132 = vrot.slane %v127, 1
      %vm133 = vcmp.ge.f32.partialorder %v131, %v129
      %v134 = vsel %vm133, %v131, %v129
      %v135 = vsel %vm133, %v132, %v130
      %s136 = ssub.s32 128, %s81
      %137 = vrot.lane.b32.xlu0 %v135, %s136
      %v138 = vpop.permute.xlu0 %137
      %s139 = vtos %v138
      %v140 = vstv %s81
      %v141 = vlaneseq
      %v142 = vand.u32 %v141, 127
      %vm143 = vcmp.eq.s32.totalorder %v142, %v140
      %v144 = vstv %s139
      %v145 = vld [vmem:[#allocation4] ss:$0 sm:$0xff]
      %v146 = vsel %vm143, %v144, %v145
      %147 = vst [vmem:[#allocation4] sm:$0x1] %v146
      %s148 = scalar_lea.vmem [#allocation2], %s81
      %s149 = scalar_lea.vmem [#allocation2], %s139
      %v150 = vld [vmem:[%s148] ss:$0 sm:$0xff]
      %v151 = vld [vmem:[%s149] ss:$0 sm:$0xff]
      %152 = vst [vmem:[%s149] sm:$0x1] %v150
      %153 = vst [vmem:[%s148] sm:$0x1] %v151
      %s154 = scalar_lea.vmem [#allocation9], %s81
      %s155 = scalar_lea.vmem [#allocation9], %s139
      %v156 = vld [vmem:[%s154] ss:$0 sm:$0xff]
      %v157 = vld [vmem:[%s155] ss:$0 sm:$0xff]
      %158 = vst [vmem:[%s155] sm:$0x1] %v156
      %159 = vst [vmem:[%s154] sm:$0x1] %v157
      %vm160 = vcmp.ne.f32.partialorder %v151, 0.0
      %vm161 = vmand %vm143, %vm160
      %v162 = vsel %vm161, %v151, 1.0
      %v163 = vlaneseq
      %v164 = vand.u32 %v163, 127
      %v165 = vstv %s81
      %vm166 = vcmp.gt.s32.totalorder %v164, %v165
      %v167 = vsel %vm166, %v151, 0.0
      %v168 = vlaneseq
      %v169 = vshrl.u32 %v168, 7
      %v170 = vmov %v169
      %v171 = vld [vmem:[#allocation2] sm:$0xff]
      %v173 = vstv %s81
      %vm174 = vcmp.gt.s32.totalorder %v170, %v173
      %v175 = vsel %vm174, %v162, 1.0
      %v176 = vrcp.pop %v175
      %v177 = vmul.f32 %v171, %v176
      %vm178 = vmand %vm174, %vm143
      %v179 = vsel %vm178, %v177, 0.0
      %180 = vadd.xlane.f32.xlu0 %v179
      %v181 = vpop.xlane.xlu0 %180
      %v182 = vmul.f32 %v181, %v167
      %v183 = vsub.f32 %v177, %v182
      %184 = vst [vmem:[#allocation2] sm:$0xff] %v183
    $region29: #{custom-call.11} parent=1 // loop_footer
      %s85 = sadd.s32 1, %s81
    $region30: #{custom-call.11} parent=1 // loop_footer_branch
      %80 = sbr.rel target = $region26
    $region31: #{custom-call.11} parent=1 // loop_exit
      _
    %v185 = vld [vmem:[#allocation9] sm:$0xff]
    %s186 = scalar_lea.vmem [#allocation9], 8
    %s187 = scalar_lea.vmem [#allocation9], 16
    %s188 = scalar_lea.vmem [#allocation9], 24
    %s189 = scalar_lea.vmem [#allocation9], 32
    %s190 = scalar_lea.vmem [#allocation9], 40
    %s191 = scalar_lea.vmem [#allocation9], 48
    %s192 = scalar_lea.vmem [#allocation9], 56
    %s193 = scalar_lea.vmem [#allocation9], 64
    %s194 = scalar_lea.vmem [#allocation9], 72
    %s195 = scalar_lea.vmem [#allocation9], 80
    %s196 = scalar_lea.vmem [#allocation9], 88
    %s197 = scalar_lea.vmem [#allocation9], 96
    %s198 = scalar_lea.vmem [#allocation9], 104
    %s199 = scalar_lea.vmem [#allocation9], 112
    %s200 = scalar_lea.vmem [#allocation9], 120
    %201 = vxpose.xlu0.b32.start [1/16] %v185, 128
    %202 = vxpose.xlu0.b32.cont [2/16] 0, 128
    %203 = vxpose.xlu0.b32.cont [3/16] 0, 128
    %204 = vxpose.xlu0.b32.cont [4/16] 0, 128
    %205 = vxpose.xlu0.b32.cont [5/16] 0, 128
    %206 = vxpose.xlu0.b32.cont [6/16] 0, 128
    %207 = vxpose.xlu0.b32.cont [7/16] 0, 128
    %208 = vxpose.xlu0.b32.cont [8/16] 0, 128
    %209 = vxpose.xlu0.b32.cont [9/16] 0, 128
    %210 = vxpose.xlu0.b32.cont [10/16] 0, 128
    %211 = vxpose.xlu0.b32.cont [11/16] 0, 128
    %212 = vxpose.xlu0.b32.cont [12/16] 0, 128
    %213 = vxpose.xlu0.b32.cont [13/16] 0, 128
    %214 = vxpose.xlu0.b32.cont [14/16] 0, 128
    %215 = vxpose.xlu0.b32.cont [15/16] 0, 128
    %216 = vxpose.xlu0.b32.end [16/16] 0, 128
    %v217 = vpop.trf.xlu0
    %v218 = vpop.trf.xlu0
    %v219 = vpop.trf.xlu0
    %v220 = vpop.trf.xlu0
    %v221 = vpop.trf.xlu0
    %v222 = vpop.trf.xlu0
    %v223 = vpop.trf.xlu0
    %v224 = vpop.trf.xlu0
    %v225 = vpop.trf.xlu0
    %v226 = vpop.trf.xlu0
    %v227 = vpop.trf.xlu0
    %v228 = vpop.trf.xlu0
    %v229 = vpop.trf.xlu0
    %v230 = vpop.trf.xlu0
    %v231 = vpop.trf.xlu0
    %v232 = vpop.trf.xlu0
    %233 = vst [vmem:[#allocation7] sm:$0x1] %v217
    %s235 = sshllo.u32 0, 2
    %v237 = vld [vmem:[#allocation2] sm:%s235]
    %s238 = sshllo.u32 0, 2
    %239 = vst [vmem:[#allocation3] sm:%s238] %v237
    %s241 = sshllo.u32 0, 1
    %v243 = vld [vmem:[#allocation4] sm:%s241]
    %s244 = sshllo.u32 0, 1
    %245 = vst [vmem:[#allocation5] sm:%s244] %v243
    %s247 = sshllo.u32 0, 1
    %v249 = vld [vmem:[#allocation7] sm:%s247]
    %s250 = sshllo.u32 0, 1
    %251 = vst [vmem:[#allocation8] sm:%s250] %v249
    %p253 = scmp.gt.s32.totalorder 2, 0
    // Predicated region
    $region32: #{custom-call.11} parent=1 // pred_check
      %p254 = pneg %p253
    $region33: #{custom-call.11} parent=1 // pred_check_branch
      %256 = sbr.rel (%p254) target = $region35
    $region34: #{custom-call.11} parent=1 // pred_region
      %s257 = sshra.s32 2, 3
      %p258 = scmp.gt.s32.totalorder %s257, 0
      // Predicated region
      $region36: #{custom-call.11} parent=34 // pred_check
        %p259 = pneg %p258
      $region37: #{custom-call.11} parent=34 // pred_check_branch
        %261 = sbr.rel (%p259) target = $region39
      $region38: #{custom-call.11} parent=34 // pred_region
        %s262 = ssub.s32 %s257, 1
        %s263 = smul.u32 %s262, 128
        %s264 = sshra.s32 %s263, 4
        %s265 = scalar_lea.vmem [#allocation3], %s264
        %v266 = vld [vmem:[#allocation3] sm:$0xff]
        // While loop
        $region40: #{custom-call.11} parent=38 // loop_pre_header
          _
        $region41: #{custom-call.11} parent=38 // loop_header
          %s267 = sphi [#allocation3], %s289
          %s268 = sphi %s1, %s290
          %v269 = vphi %v266, %v291
          %s270 = ssub.s32 %s265, 64
          %p271 = scmp.gt.s32.totalorder %s267, %s270
        $region42: #{custom-call.11} parent=38 // loop_header_branch
          %273 = sbr.rel (%p271) target = $region46
        $region43: #{custom-call.11} parent=38 // loop_body
          %274 = vst [vmem:[%s268] sm:$0xff] %v269
          %v275 = vld [vmem:[%s267 + $0x8] sm:$0xff]
          %276 = vst [vmem:[%s268 + $0x8] sm:$0xff] %v275
          %v277 = vld [vmem:[%s267 + $0x10] sm:$0xff]
          %278 = vst [vmem:[%s268 + $0x10] sm:$0xff] %v277
          %v279 = vld [vmem:[%s267 + $0x18] sm:$0xff]
          %280 = vst [vmem:[%s268 + $0x18] sm:$0xff] %v279
          %v281 = vld [vmem:[%s267 + $0x20] sm:$0xff]
          %282 = vst [vmem:[%s268 + $0x20] sm:$0xff] %v281
          %v283 = vld [vmem:[%s267 + $0x28] sm:$0xff]
          %284 = vst [vmem:[%s268 + $0x28] sm:$0xff] %v283
          %v285 = vld [vmem:[%s267 + $0x30] sm:$0xff]
          %286 = vst [vmem:[%s268 + $0x30] sm:$0xff] %v285
          %v287 = vld [vmem:[%s267 + $0x38] sm:$0xff]
          %288 = vst [vmem:[%s268 + $0x38] sm:$0xff] %v287
        $region44: #{custom-call.11} parent=38 // loop_footer
          %s289 = scalar_lea.vmem %s267, 64
          %s290 = scalar_lea.vmem %s268, 64
          %v291 = vld [vmem:[%s267 + $0x40] sm:$0xff]
        $region45: #{custom-call.11} parent=38 // loop_footer_branch
          %292 = sbr.rel target = $region41
        $region46: #{custom-call.11} parent=38 // loop_exit
          _
        // While loop
        $region47: #{custom-call.11} parent=38 // loop_pre_header
          _
        $region48: #{custom-call.11} parent=38 // loop_header
          %s293 = sphi %s267, %s301
          %s294 = sphi %s268, %s302
          %v295 = vphi %v269, %v295
          %p296 = scmp.gt.s32.totalorder %s293, %s265
        $region49: #{custom-call.11} parent=38 // loop_header_branch
          %298 = sbr.rel (%p296) target = $region53
        $region50: #{custom-call.11} parent=38 // loop_body
          %v299 = vld [vmem:[%s293] sm:$0xff]
          %300 = vst [vmem:[%s294] sm:$0xff] %v299
        $region51: #{custom-call.11} parent=38 // loop_footer
          %s301 = scalar_lea.vmem %s293, 8
          %s302 = scalar_lea.vmem %s294, 8
        $region52: #{custom-call.11} parent=38 // loop_footer_branch
          %303 = sbr.rel target = $region48
        $region53: #{custom-call.11} parent=38 // loop_exit
          _
      $region39: #{custom-call.11} parent=34 // pred_fallthru
        _
      %s304 = sand.u32 2, 7
      %s305 = sshllo.u32 0, %s304
      %s306 = smul.u32 %s257, 128
      %s307 = sshra.s32 %s306, 4
      %s308 = scalar_lea.vmem %s1, %s307
      %s309 = smul.u32 %s257, 128
      %s310 = sshra.s32 %s309, 4
      %s311 = scalar_lea.vmem [#allocation3], %s310
      %v312 = vld [vmem:[%s311] sm:%s305]
      %313 = vst [vmem:[%s308] sm:%s305] %v312
    $region35: #{custom-call.11} parent=1 // pred_fallthru
      _
    // Predicated region
    $region54: #{custom-call.11} parent=1 // pred_check
      _
    $region55: #{custom-call.11} parent=1 // pred_check_branch
      %315 = sbr.rel (0) target = $region57
    $region56: #{custom-call.11} parent=1 // pred_region
      %s317 = ssub.s32 16, 16
      %318 = vsyncadd [#allocation6], %s317
      %s319 = sshll.u32 [#allocation5], 4
      %s320 = int_to_ptr.vmem [resolvable:$true] %s319
      %322 = dma.vmem_to_hbm [thread:$0]  %s320, 16, %s2, [#allocation6]
    $region57: #{custom-call.11} parent=1 // pred_fallthru
      _
    // Predicated region
    $region58: #{custom-call.11} parent=1 // pred_check
      _
    $region59: #{custom-call.11} parent=1 // pred_check_branch
      %324 = sbr.rel (0) target = $region61
    $region60: #{custom-call.11} parent=1 // pred_region
      %p326 = scmp.gt.s32.totalorder 1, 0
      // Predicated region
      $region62: #{custom-call.11} parent=60 // pred_check
        %p327 = pneg %p326
      $region63: #{custom-call.11} parent=60 // pred_check_branch
        %329 = sbr.rel (%p327) target = $region65
      $region64: #{custom-call.11} parent=60 // pred_region
        %s330 = sshra.s32 1, 3
        %p331 = scmp.gt.s32.totalorder %s330, 0
        // Predicated region
        $region66: #{custom-call.11} parent=64 // pred_check
          %p332 = pneg %p331
        $region67: #{custom-call.11} parent=64 // pred_check_branch
          %334 = sbr.rel (%p332) target = $region69
        $region68: #{custom-call.11} parent=64 // pred_region
          %s335 = ssub.s32 %s330, 1
          %s336 = smul.u32 %s335, 128
          %s337 = sshra.s32 %s336, 4
          %s338 = scalar_lea.vmem [#allocation8], %s337
          %v339 = vld [vmem:[#allocation8] sm:$0xff]
          // While loop
          $region70: #{custom-call.11} parent=68 // loop_pre_header
            _
          $region71: #{custom-call.11} parent=68 // loop_header
            %s340 = sphi [#allocation8], %s362
            %s341 = sphi %s3, %s363
            %v342 = vphi %v339, %v364
            %s343 = ssub.s32 %s338, 64
            %p344 = scmp.gt.s32.totalorder %s340, %s343
          $region72: #{custom-call.11} parent=68 // loop_header_branch
            %346 = sbr.rel (%p344) target = $region76
          $region73: #{custom-call.11} parent=68 // loop_body
            %347 = vst [vmem:[%s341] sm:$0xff] %v342
            %v348 = vld [vmem:[%s340 + $0x8] sm:$0xff]
            %349 = vst [vmem:[%s341 + $0x8] sm:$0xff] %v348
            %v350 = vld [vmem:[%s340 + $0x10] sm:$0xff]
            %351 = vst [vmem:[%s341 + $0x10] sm:$0xff] %v350
            %v352 = vld [vmem:[%s340 + $0x18] sm:$0xff]
            %353 = vst [vmem:[%s341 + $0x18] sm:$0xff] %v352
            %v354 = vld [vmem:[%s340 + $0x20] sm:$0xff]
            %355 = vst [vmem:[%s341 + $0x20] sm:$0xff] %v354
            %v356 = vld [vmem:[%s340 + $0x28] sm:$0xff]
            %357 = vst [vmem:[%s341 + $0x28] sm:$0xff] %v356
            %v358 = vld [vmem:[%s340 + $0x30] sm:$0xff]
            %359 = vst [vmem:[%s341 + $0x30] sm:$0xff] %v358
            %v360 = vld [vmem:[%s340 + $0x38] sm:$0xff]
            %361 = vst [vmem:[%s341 + $0x38] sm:$0xff] %v360
          $region74: #{custom-call.11} parent=68 // loop_footer
            %s362 = scalar_lea.vmem %s340, 64
            %s363 = scalar_lea.vmem %s341, 64
            %v364 = vld [vmem:[%s340 + $0x40] sm:$0xff]
          $region75: #{custom-call.11} parent=68 // loop_footer_branch
            %365 = sbr.rel target = $region71
          $region76: #{custom-call.11} parent=68 // loop_exit
            _
          // While loop
          $region77: #{custom-call.11} parent=68 // loop_pre_header
            _
          $region78: #{custom-call.11} parent=68 // loop_header
            %s366 = sphi %s340, %s374
            %s367 = sphi %s341, %s375
            %v368 = vphi %v342, %v368
            %p369 = scmp.gt.s32.totalorder %s366, %s338
          $region79: #{custom-call.11} parent=68 // loop_header_branch
            %371 = sbr.rel (%p369) target = $region83
          $region80: #{custom-call.11} parent=68 // loop_body
            %v372 = vld [vmem:[%s366] sm:$0xff]
            %373 = vst [vmem:[%s367] sm:$0xff] %v372
          $region81: #{custom-call.11} parent=68 // loop_footer
            %s374 = scalar_lea.vmem %s366, 8
            %s375 = scalar_lea.vmem %s367, 8
          $region82: #{custom-call.11} parent=68 // loop_footer_branch
            %376 = sbr.rel target = $region78
          $region83: #{custom-call.11} parent=68 // loop_exit
            _
        $region69: #{custom-call.11} parent=64 // pred_fallthru
          _
        %s377 = sand.u32 1, 7
        %s378 = sshllo.u32 0, %s377
        %s379 = smul.u32 %s330, 128
        %s380 = sshra.s32 %s379, 4
        %s381 = scalar_lea.vmem %s3, %s380
        %s382 = smul.u32 %s330, 128
        %s383 = sshra.s32 %s382, 4
        %s384 = scalar_lea.vmem [#allocation8], %s383
        %v385 = vld [vmem:[%s384] sm:%s378]
        %386 = vst [vmem:[%s381] sm:%s378] %v385
      $region65: #{custom-call.11} parent=60 // pred_fallthru
        _
    $region61: #{custom-call.11} parent=1 // pred_fallthru
      _
    // Predicated region
    $region84: #{custom-call.11} parent=1 // pred_check
      _
    $region85: #{custom-call.11} parent=1 // pred_check_branch
      %388 = sbr.rel (0) target = $region87
    $region86: #{custom-call.11} parent=1 // pred_region
      %389 = dma.done [#allocation6], 16
    $region87: #{custom-call.11} parent=1 // pred_fallthru
      _
    // Predicated region
    $region88: #{custom-call.11} parent=1 // pred_check
      _
    $region89: #{custom-call.11} parent=1 // pred_check_branch
      %391 = sbr.rel (0) target = $region91
    $region90: #{custom-call.11} parent=1 // pred_region
      _
    $region91: #{custom-call.11} parent=1 // pred_fallthru
      _
    %392 = vsyncpa [#allocation6], 1

// kernel: custom-call.13
$region0: #{custom-call.13}
  %s0 = inlined_call_operand.vmem [shape: f32[1,2,2], index: 0, kind: input, shape index: {}]
  %s1 = inlined_call_operand.vmem [shape: f32[1,2,2], index: 1, kind: output, shape index: {}]
  $region1: #{custom-call.13} parent=0
    #allocation0 [shape = 'u8[4096]{0}', space=vmem, size = 0x1000, scoped, tag = 'operand span for operand 0']
    #allocation1 [shape = 'u8[1024]{0}', space=vmem, size = 0x400, scoped, tag = 'packed  for operand 0']
    #allocation2 [shape = 'u8[4096]{0}', space=vmem, size = 0x1000, scoped, tag = 'operand span for operand 1']
    #allocation3 [shape = 'u8[1024]{0}', space=vmem, size = 0x400, scoped, tag = 'packed  for operand 1']
    #allocation4 [shape = 'f32[2,2]{1,0}', space=vmem, size = 0x1000, scoped, tag = 'rescaled input a']
    // Predicated region
    $region2: #{custom-call.13} parent=1 // pred_check
      _
    $region3: #{custom-call.13} parent=1 // pred_check_branch
      %3 = sbr.rel (0) target = $region5
    $region4: #{custom-call.13} parent=1 // pred_region
      // Predicated region
      $region6: #{custom-call.13} parent=4 // pred_check
        _
      $region7: #{custom-call.13} parent=4 // pred_check_branch
        %5 = sbr.rel target = $region9
      $region8: #{custom-call.13} parent=4 // pred_region
        // Predicated region
        $region21: #{custom-call.13} parent=8 // pred_check
          _
        $region22: #{custom-call.13} parent=8 // pred_check_branch
          %20 = sbr.rel (0) target = $region24
        $region23: #{custom-call.13} parent=8 // pred_region
          loop: start=0, step=1, limit=1
          $region25: #{custom-call.13} parent=23 // loop_pre_header
            _
          $region26: #{custom-call.13} parent=23 // loop_header
            %s23 = sphi 0, %s27
            %p24 = scmp.ge.s32.totalorder %s23, 1
            %s28 = sphi %s0, %s0
            %s29 = sphi [#allocation1], [#allocation1]
          $region27: #{custom-call.13} parent=23 // loop_header_branch
            %26 = sbr.rel (%p24) target = $region31
          $region28: #{custom-call.13} parent=23 // loop_body
            %v30 = vld [vmem:[%s28] sm:$0x3]
            %31 = vst [vmem:[%s29] sm:$0x3] %v30
          $region29: #{custom-call.13} parent=23 // loop_footer
            %s27 = sadd.s32 1, %s23
          $region30: #{custom-call.13} parent=23 // loop_footer_branch
            %22 = sbr.rel target = $region26
          $region31: #{custom-call.13} parent=23 // loop_exit
            _
        $region24: #{custom-call.13} parent=8 // pred_fallthru
          _
      $region9: #{custom-call.13} parent=4 // pred_fallthru
        _
      // Predicated region
      $region10: #{custom-call.13} parent=4 // pred_check
        _
      $region11: #{custom-call.13} parent=4 // pred_check_branch
        %7 = sbr.rel (0) target = $region13
      $region12: #{custom-call.13} parent=4 // pred_region
        loop: start=0, step=1, limit=1
        $region14: #{custom-call.13} parent=12 // loop_pre_header
          _
        $region15: #{custom-call.13} parent=12 // loop_header
          %s10 = sphi 0, %s14
          %p11 = scmp.ge.s32.totalorder %s10, 1
          %s15 = sphi %s0, %s0
          %s16 = sphi [#allocation1], [#allocation1]
        $region16: #{custom-call.13} parent=12 // loop_header_branch
          %13 = sbr.rel (%p11) target = $region20
        $region17: #{custom-call.13} parent=12 // loop_body
          %v17 = vld [vmem:[%s15] sm:$0x3]
          %18 = vst [vmem:[%s16] sm:$0x3] %v17
        $region18: #{custom-call.13} parent=12 // loop_footer
          %s14 = sadd.s32 1, %s10
        $region19: #{custom-call.13} parent=12 // loop_footer_branch
          %9 = sbr.rel target = $region15
        $region20: #{custom-call.13} parent=12 // loop_exit
          _
      $region13: #{custom-call.13} parent=4 // pred_fallthru
        _
    $region5: #{custom-call.13} parent=1 // pred_fallthru
      _
    %32 = vnop
    %s34 = sshllo.u32 0, 2
    %v35 = vld [vmem:[#allocation1] sm:%s34]
    %36 = vst [vmem:[#allocation0] sm:%s34] %v35
    %v37 = vlaneseq
    %v38 = vand.u32 %v37, 127
    %vm39 = vcmp.lt.s32.totalorder %v38, 2
    %v40 = vlaneseq
    %v41 = vshrl.u32 %v40, 7
    %vm43 = vcmp.eq.s32.totalorder %v41, %v38
    %v44 = vld [vmem:[#allocation0] sm:$0xff]
    %v45 = vsel %vm43, %v44, 0.0
    %46 = vadd.xlane.f32.xlu0 %v45
    %v47 = vpop.xlane.xlu0 %46
    %vm48 = vcmp.ge.s32.totalorder %v41, %v38
    %vm49 = vmand %vm48, %vm39
    %v50 = vsel %vm49, %v44, 0.0
    %v51 = vrcp.pop %v47
    %v52 = vmul.f32 %v50, %v51
    %53 = vst [vmem:[#allocation4] sm:$0xff] %v52
    %v54 = vlaneseq
    %v55 = vand.u32 %v54, 127
    %v56 = vlaneseq
    %v57 = vshrl.u32 %v56, 7
    %vm59 = vcmp.eq.s32.totalorder %v55, %v57
    %v60 = vlaneseq
    %v61 = vand.u32 %v60, 127
    %vm62 = vcmp.eq.s32.totalorder %v61, 0
    %v63 = vsel %vm62, 1.0, -1.0
    %v64 = vsel %vm59, %v63, 0.0
    %s65 = scalar_lea.vmem [#allocation4], 1
    %v66 = vld [vmem:[%s65] ss:$0 sm:$0xff]
    %v67 = vxor.u32 %v66, 2147483648
    %v68 = vlaneseq
    %v69 = vand.u32 %v68, 127
    %vm70 = vcmp.eq.s32.totalorder %v69, 1
    %v71 = vmul.f32 %v67, %v64
    %72 = vadd.xlane.f32.xlu0 %v71
    %v73 = vpop.xlane.xlu0 %72
    %v74 = vsel %vm70, %v73, %v64
    %v75 = vrcp.pop %v47
    %v76 = vmul.f32 %v74, %v75
    %vm77 = vweird.f32 %v47
    %v78 = vsel %vm77, %v74, %v76
    %79 = vst [vmem:[#allocation2] sm:$0xff] %v78
    %s81 = sshllo.u32 0, 2
    %v83 = vld [vmem:[#allocation2] sm:%s81]
    %s84 = sshllo.u32 0, 2
    %85 = vst [vmem:[#allocation3] sm:%s84] %v83
    // Predicated region
    $region32: #{custom-call.13} parent=1 // pred_check
      _
    $region33: #{custom-call.13} parent=1 // pred_check_branch
      %87 = sbr.rel (0) target = $region35
    $region34: #{custom-call.13} parent=1 // pred_region
      // Predicated region
      $region36: #{custom-call.13} parent=34 // pred_check
        _
      $region37: #{custom-call.13} parent=34 // pred_check_branch
        %89 = sbr.rel target = $region39
      $region38: #{custom-call.13} parent=34 // pred_region
        // Predicated region
        $region51: #{custom-call.13} parent=38 // pred_check
          _
        $region52: #{custom-call.13} parent=38 // pred_check_branch
          %104 = sbr.rel (0) target = $region54
        $region53: #{custom-call.13} parent=38 // pred_region
          loop: start=0, step=1, limit=1
          $region55: #{custom-call.13} parent=53 // loop_pre_header
            _
          $region56: #{custom-call.13} parent=53 // loop_header
            %s107 = sphi 0, %s111
            %p108 = scmp.ge.s32.totalorder %s107, 1
            %s112 = sphi [#allocation3], [#allocation3]
            %s113 = sphi %s1, %s1
          $region57: #{custom-call.13} parent=53 // loop_header_branch
            %110 = sbr.rel (%p108) target = $region61
          $region58: #{custom-call.13} parent=53 // loop_body
            %v114 = vld [vmem:[%s112] sm:$0x3]
            %115 = vst [vmem:[%s113] sm:$0x3] %v114
          $region59: #{custom-call.13} parent=53 // loop_footer
            %s111 = sadd.s32 1, %s107
          $region60: #{custom-call.13} parent=53 // loop_footer_branch
            %106 = sbr.rel target = $region56
          $region61: #{custom-call.13} parent=53 // loop_exit
            _
        $region54: #{custom-call.13} parent=38 // pred_fallthru
          _
      $region39: #{custom-call.13} parent=34 // pred_fallthru
        _
      // Predicated region
      $region40: #{custom-call.13} parent=34 // pred_check
        _
      $region41: #{custom-call.13} parent=34 // pred_check_branch
        %91 = sbr.rel (0) target = $region43
      $region42: #{custom-call.13} parent=34 // pred_region
        loop: start=0, step=1, limit=1
        $region44: #{custom-call.13} parent=42 // loop_pre_header
          _
        $region45: #{custom-call.13} parent=42 // loop_header
          %s94 = sphi 0, %s98
          %p95 = scmp.ge.s32.totalorder %s94, 1
          %s99 = sphi [#allocation3], [#allocation3]
          %s100 = sphi %s1, %s1
        $region46: #{custom-call.13} parent=42 // loop_header_branch
          %97 = sbr.rel (%p95) target = $region50
        $region47: #{custom-call.13} parent=42 // loop_body
          %v101 = vld [vmem:[%s99] sm:$0x3]
          %102 = vst [vmem:[%s100] sm:$0x3] %v101
        $region48: #{custom-call.13} parent=42 // loop_footer
          %s98 = sadd.s32 1, %s94
        $region49: #{custom-call.13} parent=42 // loop_footer_branch
          %93 = sbr.rel target = $region45
        $region50: #{custom-call.13} parent=42 // loop_exit
          _
      $region43: #{custom-call.13} parent=34 // pred_fallthru
        _
    $region35: #{custom-call.13} parent=1 // pred_fallthru
      _
    %116 = vnop

// kernel: custom-call.12
$region0: #{custom-call.12}
  %s0 = inlined_call_operand.vmem [shape: f32[1,2,2], index: 0, kind: input, shape index: {}]
  %s1 = inlined_call_operand.vmem [shape: f32[1,2,2], index: 1, kind: output, shape index: {}]
  $region1: #{custom-call.12} parent=0
    #allocation0 [shape = 'u8[4096]{0}', space=vmem, size = 0x1000, scoped, tag = 'operand span for operand 0']
    #allocation1 [shape = 'u8[1024]{0}', space=vmem, size = 0x400, scoped, tag = 'packed  for operand 0']
    #allocation2 [shape = 'u8[4096]{0}', space=vmem, size = 0x1000, scoped, tag = 'operand span for operand 1']
    #allocation3 [shape = 'u8[1024]{0}', space=vmem, size = 0x400, scoped, tag = 'packed  for operand 1']
    #allocation4 [shape = 'f32[2,2]{1,0}', space=vmem, size = 0x1000, scoped, tag = 'rescaled input a']
    // Predicated region
    $region2: #{custom-call.12} parent=1 // pred_check
      _
    $region3: #{custom-call.12} parent=1 // pred_check_branch
      %3 = sbr.rel (0) target = $region5
    $region4: #{custom-call.12} parent=1 // pred_region
      // Predicated region
      $region6: #{custom-call.12} parent=4 // pred_check
        _
      $region7: #{custom-call.12} parent=4 // pred_check_branch
        %5 = sbr.rel target = $region9
      $region8: #{custom-call.12} parent=4 // pred_region
        // Predicated region
        $region21: #{custom-call.12} parent=8 // pred_check
          _
        $region22: #{custom-call.12} parent=8 // pred_check_branch
          %20 = sbr.rel (0) target = $region24
        $region23: #{custom-call.12} parent=8 // pred_region
          loop: start=0, step=1, limit=1
          $region25: #{custom-call.12} parent=23 // loop_pre_header
            _
          $region26: #{custom-call.12} parent=23 // loop_header
            %s23 = sphi 0, %s27
            %p24 = scmp.ge.s32.totalorder %s23, 1
            %s28 = sphi %s0, %s0
            %s29 = sphi [#allocation1], [#allocation1]
          $region27: #{custom-call.12} parent=23 // loop_header_branch
            %26 = sbr.rel (%p24) target = $region31
          $region28: #{custom-call.12} parent=23 // loop_body
            %v30 = vld [vmem:[%s28] sm:$0x3]
            %31 = vst [vmem:[%s29] sm:$0x3] %v30
          $region29: #{custom-call.12} parent=23 // loop_footer
            %s27 = sadd.s32 1, %s23
          $region30: #{custom-call.12} parent=23 // loop_footer_branch
            %22 = sbr.rel target = $region26
          $region31: #{custom-call.12} parent=23 // loop_exit
            _
        $region24: #{custom-call.12} parent=8 // pred_fallthru
          _
      $region9: #{custom-call.12} parent=4 // pred_fallthru
        _
      // Predicated region
      $region10: #{custom-call.12} parent=4 // pred_check
        _
      $region11: #{custom-call.12} parent=4 // pred_check_branch
        %7 = sbr.rel (0) target = $region13
      $region12: #{custom-call.12} parent=4 // pred_region
        loop: start=0, step=1, limit=1
        $region14: #{custom-call.12} parent=12 // loop_pre_header
          _
        $region15: #{custom-call.12} parent=12 // loop_header
          %s10 = sphi 0, %s14
          %p11 = scmp.ge.s32.totalorder %s10, 1
          %s15 = sphi %s0, %s0
          %s16 = sphi [#allocation1], [#allocation1]
        $region16: #{custom-call.12} parent=12 // loop_header_branch
          %13 = sbr.rel (%p11) target = $region20
        $region17: #{custom-call.12} parent=12 // loop_body
          %v17 = vld [vmem:[%s15] sm:$0x3]
          %18 = vst [vmem:[%s16] sm:$0x3] %v17
        $region18: #{custom-call.12} parent=12 // loop_footer
          %s14 = sadd.s32 1, %s10
        $region19: #{custom-call.12} parent=12 // loop_footer_branch
          %9 = sbr.rel target = $region15
        $region20: #{custom-call.12} parent=12 // loop_exit
          _
      $region13: #{custom-call.12} parent=4 // pred_fallthru
        _
    $region5: #{custom-call.12} parent=1 // pred_fallthru
      _
    %32 = vnop
    %s34 = sshllo.u32 0, 2
    %v35 = vld [vmem:[#allocation1] sm:%s34]
    %36 = vst [vmem:[#allocation0] sm:%s34] %v35
    %v37 = vlaneseq
    %v38 = vand.u32 %v37, 127
    %vm39 = vcmp.lt.s32.totalorder %v38, 2
    %v40 = vlaneseq
    %v41 = vshrl.u32 %v40, 7
    %vm43 = vcmp.eq.s32.totalorder %v41, %v38
    %v44 = vld [vmem:[#allocation0] sm:$0xff]
    %v45 = vsel %vm43, %v44, 0.0
    %46 = vadd.xlane.f32.xlu0 %v45
    %v47 = vpop.xlane.xlu0 %46
    %vm48 = vcmp.le.s32.totalorder %v41, %v38
    %vm49 = vmand %vm48, %vm39
    %v50 = vsel %vm49, %v44, 0.0
    %v51 = vrcp.pop %v47
    %v52 = vmul.f32 %v50, %v51
    %53 = vst [vmem:[#allocation4] sm:$0xff] %v52
    %v54 = vlaneseq
    %v55 = vand.u32 %v54, 127
    %v56 = vlaneseq
    %v57 = vshrl.u32 %v56, 7
    %vm59 = vcmp.eq.s32.totalorder %v55, %v57
    %v60 = vlaneseq
    %v61 = vand.u32 %v60, 127
    %vm62 = vcmp.eq.s32.totalorder %v61, 1
    %v63 = vsel %vm62, 1.0, -1.0
    %v64 = vsel %vm59, %v63, 0.0
    %v65 = vld [vmem:[#allocation4] ss:$0 sm:$0xff]
    %v66 = vxor.u32 %v65, 2147483648
    %v67 = vlaneseq
    %v68 = vand.u32 %v67, 127
    %vm69 = vcmp.eq.s32.totalorder %v68, 0
    %v70 = vmul.f32 %v66, %v64
    %71 = vadd.xlane.f32.xlu0 %v70
    %v72 = vpop.xlane.xlu0 %71
    %v73 = vsel %vm69, %v72, %v64
    %v74 = vrcp.pop %v47
    %v75 = vmul.f32 %v73, %v74
    %vm76 = vweird.f32 %v47
    %v77 = vsel %vm76, %v73, %v75
    %78 = vst [vmem:[#allocation2] sm:$0xff] %v77
    %s80 = sshllo.u32 0, 2
    %v82 = vld [vmem:[#allocation2] sm:%s80]
    %s83 = sshllo.u32 0, 2
    %84 = vst [vmem:[#allocation3] sm:%s83] %v82
    // Predicated region
    $region32: #{custom-call.12} parent=1 // pred_check
      _
    $region33: #{custom-call.12} parent=1 // pred_check_branch
      %86 = sbr.rel (0) target = $region35
    $region34: #{custom-call.12} parent=1 // pred_region
      // Predicated region
      $region36: #{custom-call.12} parent=34 // pred_check
        _
      $region37: #{custom-call.12} parent=34 // pred_check_branch
        %88 = sbr.rel target = $region39
      $region38: #{custom-call.12} parent=34 // pred_region
        // Predicated region
        $region51: #{custom-call.12} parent=38 // pred_check
          _
        $region52: #{custom-call.12} parent=38 // pred_check_branch
          %103 = sbr.rel (0) target = $region54
        $region53: #{custom-call.12} parent=38 // pred_region
          loop: start=0, step=1, limit=1
          $region55: #{custom-call.12} parent=53 // loop_pre_header
            _
          $region56: #{custom-call.12} parent=53 // loop_header
            %s106 = sphi 0, %s110
            %p107 = scmp.ge.s32.totalorder %s106, 1
            %s111 = sphi [#allocation3], [#allocation3]
            %s112 = sphi %s1, %s1
          $region57: #{custom-call.12} parent=53 // loop_header_branch
            %109 = sbr.rel (%p107) target = $region61
          $region58: #{custom-call.12} parent=53 // loop_body
            %v113 = vld [vmem:[%s111] sm:$0x3]
            %114 = vst [vmem:[%s112] sm:$0x3] %v113
          $region59: #{custom-call.12} parent=53 // loop_footer
            %s110 = sadd.s32 1, %s106
          $region60: #{custom-call.12} parent=53 // loop_footer_branch
            %105 = sbr.rel target = $region56
          $region61: #{custom-call.12} parent=53 // loop_exit
            _
        $region54: #{custom-call.12} parent=38 // pred_fallthru
          _
      $region39: #{custom-call.12} parent=34 // pred_fallthru
        _
      // Predicated region
      $region40: #{custom-call.12} parent=34 // pred_check
        _
      $region41: #{custom-call.12} parent=34 // pred_check_branch
        %90 = sbr.rel (0) target = $region43
      $region42: #{custom-call.12} parent=34 // pred_region
        loop: start=0, step=1, limit=1
        $region44: #{custom-call.12} parent=42 // loop_pre_header
          _
        $region45: #{custom-call.12} parent=42 // loop_header
          %s93 = sphi 0, %s97
          %p94 = scmp.ge.s32.totalorder %s93, 1
          %s98 = sphi [#allocation3], [#allocation3]
          %s99 = sphi %s1, %s1
        $region46: #{custom-call.12} parent=42 // loop_header_branch
          %96 = sbr.rel (%p94) target = $region50
        $region47: #{custom-call.12} parent=42 // loop_body
          %v100 = vld [vmem:[%s98] sm:$0x3]
          %101 = vst [vmem:[%s99] sm:$0x3] %v100
        $region48: #{custom-call.12} parent=42 // loop_footer
          %s97 = sadd.s32 1, %s93
        $region49: #{custom-call.12} parent=42 // loop_footer_branch
          %92 = sbr.rel target = $region45
        $region50: #{custom-call.12} parent=42 // loop_exit
          _
      $region43: #{custom-call.12} parent=34 // pred_fallthru
        _
    $region35: #{custom-call.12} parent=1 // pred_fallthru
      _
    %115 = vnop

// kernel: _normalize.6
$region0: #{_normalize.6}
  #allocation0 [shape = 'u32[]', space=smem, size = 0x4, offset = 0x4, fixed_abs, tag = 'smem constant byte address 0x4 - core index']
  #allocation1 [shape = 'u32[144,128]{1,0:T(1,128)}', space=vmem, size = 0x12000, scoped, tag = 'internal scratch']
  %s0 = inlined_call_operand.vmem [shape: f32[2,3], index: 0, kind: input, shape index: {}]
  %s1 = inlined_call_operand.vmem [shape: f32[3,16,128], index: 1, kind: input, shape index: {}]
  %s2 = inlined_call_operand.vmem [shape: f32[2,16,128], index: 2, kind: output, shape index: {}]
  %s3 = sld [smem:[#allocation0]]
  $region117: #{_normalize.6} parent=0
    _
  %s5 = ssub.s32 1, %s3
  %s6 = scalar_select 0, %s5, %s3
  $region1: #{_normalize.6} parent=0
    #allocation2 [shape = 'u8[1024]{0}', space=smem, size = 0x400, scoped, tag = 'input window, operand 0, single buffered']
    #allocation3 [shape = 's32[2]{0}', space=sflag, size = 0x8, scoped, tag = 'scoped memory for _normalize.6']
    #allocation4 [shape = 'u8[24576]{0}', space=vmem, size = 0x6000, scoped, tag = 'input window, operand 1']
    #allocation5 [shape = 'u8[16384]{0}', space=vmem, size = 0x4000, scoped, tag = 'output window, operand 0']
    %7 = vsyncpa [#allocation3], 0
    loop: start=0, step=1, limit=4
    $region2: #{_normalize.6} parent=1 // loop_pre_header
      _
    $region3: #{_normalize.6} parent=1 // loop_header
      %s9 = sphi 0, %s13
      %p10 = scmp.ge.s32.totalorder %s9, 4
      %s17 = sphi 0, %s17
      %s19 = sphi 0, %s17
      %s20 = sphi 0, %s19
      %s34 = sphi 0, %s20
      %s40 = sphi 0, %s42
      %s43 = sphi 0, %s40
      %s44 = sphi 0, %s43
      %s60 = sphi 0, %s44
      %s66 = sphi 0, %s68
      %s69 = sphi 0, %s66
      %s70 = sphi 0, %s69
      %s86 = sphi 0, %s70
    $region4: #{_normalize.6} parent=1 // loop_header_branch
      %12 = sbr.rel (%p10) target = $region8
    $region5: #{_normalize.6} parent=1 // loop_body
      %s14 = ssub.s32 %s9, 1
      %s15 = ssub.s32 %s9, 2
      %s16 = sadd.s32 %s9, 1
      %s18 = sadd.s32 %s17, 1
      %p21 = scmp.eq.s32.totalorder %s9, 1
      %p22 = scmp.ne.s32.totalorder %s17, %s19
      %p23 = scmp.eq.s32.totalorder %s9, 0
      %p24 = por %p22, %p23
      %p25 = scmp.ne.s32.totalorder %s17, %s19
      %p26 = scmp.eq.s32.totalorder %s14, 1
      %p27 = por %p25, %p26
      %p28 = scmp.ne.s32.totalorder %s19, %s20
      %p29 = scmp.eq.s32.totalorder %s14, 0
      %p30 = por %p28, %p29
      %p31 = scmp.ne.s32.totalorder %s19, %s20
      %p32 = scmp.eq.s32.totalorder %s15, 1
      %p33 = por %p31, %p32
      %p35 = scmp.ne.s32.totalorder %s20, %s34
      %p36 = scmp.eq.s32.totalorder %s15, 0
      %p37 = por %p35, %p36
      %s38 = ssub.s32 %s9, %s16
      %p39 = scmp.eq.s32.totalorder %s38, 0
      %s41 = sadd.s32 %s40, 1
      %s42 = scalar_select %p39, %s40, %s41
      %p45 = pneg %p39
      %p46 = scmp.eq.s32.totalorder %s9, 1
      %p47 = por %p45, %p46
      %p48 = scmp.ne.s32.totalorder %s40, %s43
      %p49 = scmp.eq.s32.totalorder %s9, 0
      %p50 = por %p48, %p49
      %p51 = scmp.ne.s32.totalorder %s40, %s43
      %p52 = scmp.eq.s32.totalorder %s14, 1
      %p53 = por %p51, %p52
      %p54 = scmp.ne.s32.totalorder %s43, %s44
      %p55 = scmp.eq.s32.totalorder %s14, 0
      %p56 = por %p54, %p55
      %p57 = scmp.ne.s32.totalorder %s43, %s44
      %p58 = scmp.eq.s32.totalorder %s15, 1
      %p59 = por %p57, %p58
      %p61 = scmp.ne.s32.totalorder %s44, %s60
      %p62 = scmp.eq.s32.totalorder %s15, 0
      %p63 = por %p61, %p62
      %s64 = ssub.s32 %s9, %s16
      %p65 = scmp.eq.s32.totalorder %s64, 0
      %s67 = sadd.s32 %s66, 1
      %s68 = scalar_select %p65, %s66, %s67
      %p71 = pneg %p65
      %p72 = scmp.eq.s32.totalorder %s9, 1
      %p73 = por %p71, %p72
      %p74 = scmp.ne.s32.totalorder %s66, %s69
      %p75 = scmp.eq.s32.totalorder %s9, 0
      %p76 = por %p74, %p75
      %p77 = scmp.ne.s32.totalorder %s66, %s69
      %p78 = scmp.eq.s32.totalorder %s14, 1
      %p79 = por %p77, %p78
      %p80 = scmp.ne.s32.totalorder %s69, %s70
      %p81 = scmp.eq.s32.totalorder %s14, 0
      %p82 = por %p80, %p81
      %p83 = scmp.ne.s32.totalorder %s69, %s70
      %p84 = scmp.eq.s32.totalorder %s15, 1
      %p85 = por %p83, %p84
      %p87 = scmp.ne.s32.totalorder %s70, %s86
      %p88 = scmp.eq.s32.totalorder %s15, 0
      %p89 = por %p87, %p88
      %p90 = scmp.le.s32.totalorder 1, %s9
      %p91 = scmp.lt.s32.totalorder %s9, 3
      %p92 = pnand %p90, %p91
      %p93 = pneg %p92
      // Predicated region
      $region9: #{_normalize.6} parent=5 // pred_check
        _
      $region10: #{_normalize.6} parent=5 // pred_check_branch
        %95 = sbr.rel (%p92) target = $region12
      $region11: #{_normalize.6} parent=5 // pred_region
        %s96 = ssub.s32 %s9, 1
        // Predicated region
        $region13: #{_normalize.6} parent=11 // pred_check
          %p97 = pneg %p30
        $region14: #{_normalize.6} parent=11 // pred_check_branch
          %99 = sbr.rel (%p97) target = $region16
        $region15: #{_normalize.6} parent=11 // pred_region
          %s101 = ssub.s32 32, 32
          %102 = vsyncadd [#allocation3], %s101
          %s104 = sshll.u32 %s0, 4
          %s105 = int_to_ptr.vmem [resolvable:$true] %s104
          %107 = dma.vmem_to_smem %s105, 32, [#allocation2], [#allocation3]
        $region16: #{_normalize.6} parent=11 // pred_fallthru
          _
      $region12: #{_normalize.6} parent=5 // pred_fallthru
        _
      %p108 = scmp.lt.s32.totalorder %s9, 2
      // Predicated region
      $region17: #{_normalize.6} parent=5 // pred_check
        %p109 = pneg %p108
      $region18: #{_normalize.6} parent=5 // pred_check_branch
        %111 = sbr.rel (%p109) target = $region20
      $region19: #{_normalize.6} parent=5 // pred_region
        // Predicated region
        $region21: #{_normalize.6} parent=19 // pred_check
          %p112 = pneg %p50
        $region22: #{_normalize.6} parent=19 // pred_check_branch
          %114 = sbr.rel (%p112) target = $region24
        $region23: #{_normalize.6} parent=19 // pred_region
          %s115 = sand.u32 %s40, 1
          %s116 = sand.u32 %s40, 1
          %s117 = smul.addr %s116, 24
          %s118 = scalar_lea.vmem [#allocation4], %s117
          %s119 = smul.addr %s9, 8
          %s120 = scalar_lea.vmem %s1, %s119
          // Predicated region
          $region25: #{_normalize.6} parent=23 // pred_check
            _
          $region26: #{_normalize.6} parent=23 // pred_check_branch
            %122 = sbr.rel (0) target = $region28
          $region27: #{_normalize.6} parent=23 // pred_region
            // Predicated region
            $region29: #{_normalize.6} parent=27 // pred_check
              _
            $region30: #{_normalize.6} parent=27 // pred_check_branch
              %124 = sbr.rel (0) target = $region32
            $region31: #{_normalize.6} parent=27 // pred_region
              // Predicated region
              $region44: #{_normalize.6} parent=31 // pred_check
                _
              $region45: #{_normalize.6} parent=31 // pred_check_branch
                %143 = sbr.rel (0) target = $region47
              $region46: #{_normalize.6} parent=31 // pred_region
                loop: start=0, step=1, limit=1
                $region48: #{_normalize.6} parent=46 // loop_pre_header
                  _
                $region49: #{_normalize.6} parent=46 // loop_header
                  %s145 = sphi 0, %s149
                  %p146 = scmp.ge.s32.totalorder %s145, 1
                  %s150 = sphi %s120, %s120
                  %s151 = sphi %s118, %s118
                $region50: #{_normalize.6} parent=46 // loop_header_branch
                  %148 = sbr.rel (%p146) target = $region54
                $region51: #{_normalize.6} parent=46 // loop_body
                  %v152 = vld [vmem:[%s150] sm:$0xff]
                  %153 = vst [vmem:[%s151] sm:$0xff] %v152
                  %v154 = vld [vmem:[%s150 + $0x10] sm:$0xff]
                  %155 = vst [vmem:[%s151 + $0x8] sm:$0xff] %v154
                  %v156 = vld [vmem:[%s150 + $0x20] sm:$0xff]
                  %157 = vst [vmem:[%s151 + $0x10] sm:$0xff] %v156
                $region52: #{_normalize.6} parent=46 // loop_footer
                  %s149 = sadd.s32 1, %s145
                $region53: #{_normalize.6} parent=46 // loop_footer_branch
                  %144 = sbr.rel target = $region49
                $region54: #{_normalize.6} parent=46 // loop_exit
                  _
              $region47: #{_normalize.6} parent=31 // pred_fallthru
                _
              // Predicated region
              $region55: #{_normalize.6} parent=31 // pred_check
                _
              $region56: #{_normalize.6} parent=31 // pred_check_branch
                %159 = sbr.rel target = $region58
              $region57: #{_normalize.6} parent=31 // pred_region
                _
              $region58: #{_normalize.6} parent=31 // pred_fallthru
                _
            $region32: #{_normalize.6} parent=27 // pred_fallthru
              _
            // Predicated region
            $region33: #{_normalize.6} parent=27 // pred_check
              _
            $region34: #{_normalize.6} parent=27 // pred_check_branch
              %126 = sbr.rel target = $region36
            $region35: #{_normalize.6} parent=27 // pred_region
              loop: start=0, step=1, limit=1
              $region37: #{_normalize.6} parent=35 // loop_pre_header
                _
              $region38: #{_normalize.6} parent=35 // loop_header
                %s129 = sphi 0, %s133
                %p130 = scmp.ge.s32.totalorder %s129, 1
                %s134 = sphi %s120, %s120
                %s135 = sphi %s118, %s118
              $region39: #{_normalize.6} parent=35 // loop_header_branch
                %132 = sbr.rel (%p130) target = $region43
              $region40: #{_normalize.6} parent=35 // loop_body
                %v136 = vld [vmem:[%s134] sm:$0xff]
                %137 = vst [vmem:[%s135] sm:$0xff] %v136
                %v138 = vld [vmem:[%s134 + $0x10] sm:$0xff]
                %139 = vst [vmem:[%s135 + $0x8] sm:$0xff] %v138
                %v140 = vld [vmem:[%s134 + $0x20] sm:$0xff]
                %141 = vst [vmem:[%s135 + $0x10] sm:$0xff] %v140
              $region41: #{_normalize.6} parent=35 // loop_footer
                %s133 = sadd.s32 1, %s129
              $region42: #{_normalize.6} parent=35 // loop_footer_branch
                %128 = sbr.rel target = $region38
              $region43: #{_normalize.6} parent=35 // loop_exit
                _
            $region36: #{_normalize.6} parent=27 // pred_fallthru
              _
          $region28: #{_normalize.6} parent=23 // pred_fallthru
            _
          %160 = vnop
        $region24: #{_normalize.6} parent=19 // pred_fallthru
          _
      $region20: #{_normalize.6} parent=5 // pred_fallthru
        _
      %p161 = scmp.le.s32.totalorder 1, %s9
      %p162 = scmp.lt.s32.totalorder %s9, 3
      %p163 = pnand %p161, %p162
      %p164 = pneg %p163
      // Predicated region
      $region59: #{_normalize.6} parent=5 // pred_check
        _
      $region60: #{_normalize.6} parent=5 // pred_check_branch
        %166 = sbr.rel (%p163) target = $region62
      $region61: #{_normalize.6} parent=5 // pred_region
        %s167 = ssub.s32 %s9, 1
        // Predicated region
        $region63: #{_normalize.6} parent=61 // pred_check
          %p168 = pneg %p30
        $region64: #{_normalize.6} parent=61 // pred_check_branch
          %170 = sbr.rel (%p168) target = $region66
        $region65: #{_normalize.6} parent=61 // pred_region
          %171 = dma.done [#allocation3], 32
        $region66: #{_normalize.6} parent=61 // pred_fallthru
          _
        %s172 = sand.u32 %s43, 1
        %s173 = sand.u32 %s43, 1
        %s174 = smul.addr %s173, 24
        %s175 = scalar_lea.vmem [#allocation4], %s174
        // Predicated region
        $region67: #{_normalize.6} parent=61 // pred_check
          %p176 = pneg %p56
        $region68: #{_normalize.6} parent=61 // pred_check_branch
          %178 = sbr.rel (%p176) target = $region70
        $region69: #{_normalize.6} parent=61 // pred_region
          _
        $region70: #{_normalize.6} parent=61 // pred_fallthru
          _
        %179 = sfence
        %p180 = pneg %p30
        %p181 = pneg %p27
        %s182 = sand.u32 %s43, 1
        %s183 = sand.u32 %s43, 1
        %s184 = smul.addr %s183, 24
        %s185 = scalar_lea.vmem [#allocation4], %s184
        %p186 = pneg %p56
        %p187 = pneg %p53
        %p188 = pneg %p82
        %p189 = pneg %p79
        %s190 = sand.u32 %s69, 1
        %s191 = sand.u32 %s69, 1
        %s192 = smul.addr %s191, 16
        %s193 = scalar_lea.vmem [#allocation5], %s192
        %v194 = vld [vmem:[%s175] sm:$0xff]
        %v195 = vld [vmem:[%s175 + $0x8] sm:$0xff]
        %v196 = vld [vmem:[%s175 + $0x10] sm:$0xff]
        %v197 = vlaneseq
        %v198 = vshrl.u32 %v197, 7
        %s199 = smul.u32 %s14, 8
        %v200 = vstv %s199
        %v201 = vadd.s32 %v198, %v200
        %v202 = vlaneseq
        %v203 = vand.u32 %v202, 127
        %v204 = vmul.u32 %v201, 128
        %v205 = vadd.s32 %v204, %v203
        %vm206 = vcmp.lt.s32.totalorder %v205, 256
        %s207 = sld [smem:[#allocation2]]
        %v208 = vstv %s207
        %v209 = vmul.f32 %v208, %v194
        %s210 = sld [smem:[#allocation2 + $0x1]]
        %v211 = vstv %s210
        %v212 = vmul.f32 %v211, %v195
        %v213 = vadd.f32 %v209, %v212
        %s214 = sld [smem:[#allocation2 + $0x2]]
        %v215 = vstv %s214
        %v216 = vmul.f32 %v215, %v196
        %v217 = vadd.f32 %v213, %v216
        %v218 = vsel %vm206, %v217, -1e+30
        %219 = vst [vmem:[%s193] sm:$0xff] %v218
        %s220 = sld [smem:[#allocation2 + $0x80]]
        %v221 = vstv %s220
        %v222 = vmul.f32 %v221, %v194
        %s223 = sld [smem:[#allocation2 + $0x81]]
        %v224 = vstv %s223
        %v225 = vmul.f32 %v224, %v195
        %v226 = vadd.f32 %v222, %v225
        %s227 = sld [smem:[#allocation2 + $0x82]]
        %v228 = vstv %s227
        %v229 = vmul.f32 %v228, %v196
        %v230 = vadd.f32 %v226, %v229
        %v231 = vsel %vm206, %v230, -1e+30
        %s232 = scalar_lea.vmem %s193, 8 [#allocation5]
        %233 = vst [vmem:[%s232] sm:$0xff] %v231
        %s234 = sand.u32 %s69, 1
        %s235 = sand.u32 %s69, 1
        %s236 = smul.addr %s235, 16
        %s237 = scalar_lea.vmem [#allocation5], %s236
        // Predicated region
        $region71: #{_normalize.6} parent=61 // pred_check
          %p238 = pneg %p79
        $region72: #{_normalize.6} parent=61 // pred_check_branch
          %240 = sbr.rel (%p238) target = $region74
        $region73: #{_normalize.6} parent=61 // pred_region
          %s241 = smul.addr %s14, 8
          %s242 = scalar_lea.vmem %s2, %s241
          // Predicated region
          $region75: #{_normalize.6} parent=73 // pred_check
            _
          $region76: #{_normalize.6} parent=73 // pred_check_branch
            %244 = sbr.rel (0) target = $region78
          $region77: #{_normalize.6} parent=73 // pred_region
            // Predicated region
            $region79: #{_normalize.6} parent=77 // pred_check
              _
            $region80: #{_normalize.6} parent=77 // pred_check_branch
              %246 = sbr.rel (0) target = $region82
            $region81: #{_normalize.6} parent=77 // pred_region
              // Predicated region
              $region94: #{_normalize.6} parent=81 // pred_check
                _
              $region95: #{_normalize.6} parent=81 // pred_check_branch
                %263 = sbr.rel (0) target = $region97
              $region96: #{_normalize.6} parent=81 // pred_region
                loop: start=0, step=1, limit=1
                $region98: #{_normalize.6} parent=96 // loop_pre_header
                  _
                $region99: #{_normalize.6} parent=96 // loop_header
                  %s265 = sphi 0, %s269
                  %p266 = scmp.ge.s32.totalorder %s265, 1
                  %s270 = sphi %s237, %s237
                  %s271 = sphi %s242, %s242
                $region100: #{_normalize.6} parent=96 // loop_header_branch
                  %268 = sbr.rel (%p266) target = $region104
                $region101: #{_normalize.6} parent=96 // loop_body
                  %v272 = vld [vmem:[%s270] sm:$0xff]
                  %273 = vst [vmem:[%s271] sm:$0xff] %v272
                  %v274 = vld [vmem:[%s270 + $0x8] sm:$0xff]
                  %275 = vst [vmem:[%s271 + $0x10] sm:$0xff] %v274
                $region102: #{_normalize.6} parent=96 // loop_footer
                  %s269 = sadd.s32 1, %s265
                $region103: #{_normalize.6} parent=96 // loop_footer_branch
                  %264 = sbr.rel target = $region99
                $region104: #{_normalize.6} parent=96 // loop_exit
                  _
              $region97: #{_normalize.6} parent=81 // pred_fallthru
                _
              // Predicated region
              $region105: #{_normalize.6} parent=81 // pred_check
                _
              $region106: #{_normalize.6} parent=81 // pred_check_branch
                %277 = sbr.rel target = $region108
              $region107: #{_normalize.6} parent=81 // pred_region
                _
              $region108: #{_normalize.6} parent=81 // pred_fallthru
                _
            $region82: #{_normalize.6} parent=77 // pred_fallthru
              _
            // Predicated region
            $region83: #{_normalize.6} parent=77 // pred_check
              _
            $region84: #{_normalize.6} parent=77 // pred_check_branch
              %248 = sbr.rel target = $region86
            $region85: #{_normalize.6} parent=77 // pred_region
              loop: start=0, step=1, limit=1
              $region87: #{_normalize.6} parent=85 // loop_pre_header
                _
              $region88: #{_normalize.6} parent=85 // loop_header
                %s251 = sphi 0, %s255
                %p252 = scmp.ge.s32.totalorder %s251, 1
                %s256 = sphi %s237, %s237
                %s257 = sphi %s242, %s242
              $region89: #{_normalize.6} parent=85 // loop_header_branch
                %254 = sbr.rel (%p252) target = $region93
              $region90: #{_normalize.6} parent=85 // loop_body
                %v258 = vld [vmem:[%s256] sm:$0xff]
                %259 = vst [vmem:[%s257] sm:$0xff] %v258
                %v260 = vld [vmem:[%s256 + $0x8] sm:$0xff]
                %261 = vst [vmem:[%s257 + $0x10] sm:$0xff] %v260
              $region91: #{_normalize.6} parent=85 // loop_footer
                %s255 = sadd.s32 1, %s251
              $region92: #{_normalize.6} parent=85 // loop_footer_branch
                %250 = sbr.rel target = $region88
              $region93: #{_normalize.6} parent=85 // loop_exit
                _
            $region86: #{_normalize.6} parent=77 // pred_fallthru
              _
          $region78: #{_normalize.6} parent=73 // pred_fallthru
            _
          %278 = vnop
        $region74: #{_normalize.6} parent=61 // pred_fallthru
          _
      $region62: #{_normalize.6} parent=5 // pred_fallthru
        _
      %p279 = scmp.le.s32.totalorder 2, %s9
      // Predicated region
      $region109: #{_normalize.6} parent=5 // pred_check
        %p280 = pneg %p279
      $region110: #{_normalize.6} parent=5 // pred_check_branch
        %282 = sbr.rel (%p280) target = $region112
      $region111: #{_normalize.6} parent=5 // pred_region
        %s283 = ssub.s32 %s9, 2
        // Predicated region
        $region113: #{_normalize.6} parent=111 // pred_check
          %p284 = pneg %p85
        $region114: #{_normalize.6} parent=111 // pred_check_branch
          %286 = sbr.rel (%p284) target = $region116
        $region115: #{_normalize.6} parent=111 // pred_region
          %s287 = sand.u32 %s70, 1
          %s288 = sand.u32 %s70, 1
          %s289 = smul.addr %s288, 16
          %s290 = scalar_lea.vmem [#allocation5], %s289
        $region116: #{_normalize.6} parent=111 // pred_fallthru
          _
      $region112: #{_normalize.6} parent=5 // pred_fallthru
        _
    $region6: #{_normalize.6} parent=1 // loop_footer
      %s13 = sadd.s32 1, %s9
    $region7: #{_normalize.6} parent=1 // loop_footer_branch
      %8 = sbr.rel target = $region3
    $region8: #{_normalize.6} parent=1 // loop_exit
      _
    %291 = vsyncpa [#allocation3], 1
    %s292 = scalar_lea.sflag [#allocation3], 1
    %293 = vsyncpa %s292, 1

// kernel: _normalize.7
$region0: #{_normalize.7}
  #allocation0 [shape = 'u32[]', space=smem, size = 0x4, offset = 0x4, fixed_abs, tag = 'smem constant byte address 0x4 - core index']
  #allocation1 [shape = 'u32[144,128]{1,0:T(1,128)}', space=vmem, size = 0x12000, scoped, tag = 'internal scratch']
  %s0 = inlined_call_operand.vmem [shape: f32[3,2], index: 0, kind: input, shape index: {}]
  %s1 = inlined_call_operand.vmem [shape: f32[2,16,128], index: 1, kind: input, shape index: {}]
  %s2 = inlined_call_operand.vmem [shape: s32[16,128], index: 2, kind: output, shape index: {}]
  %s3 = sld [smem:[#allocation0]]
  $region83: #{_normalize.7} parent=0
    _
  %s5 = ssub.s32 1, %s3
  %s6 = scalar_select 0, %s5, %s3
  $region1: #{_normalize.7} parent=0
    #allocation2 [shape = 'u8[2048]{0}', space=smem, size = 0x800, scoped, tag = 'input window, operand 0, single buffered']
    #allocation3 [shape = 's32[2]{0}', space=sflag, size = 0x8, scoped, tag = 'scoped memory for _normalize.7']
    #allocation4 [shape = 'u8[16384]{0}', space=vmem, size = 0x4000, scoped, tag = 'input window, operand 1']
    %7 = vsyncpa [#allocation3], 0
    loop: start=0, step=1, limit=4
    $region2: #{_normalize.7} parent=1 // loop_pre_header
      _
    $region3: #{_normalize.7} parent=1 // loop_header
      %s9 = sphi 0, %s13
      %p10 = scmp.ge.s32.totalorder %s9, 4
      %s17 = sphi 0, %s17
      %s19 = sphi 0, %s17
      %s20 = sphi 0, %s19
      %s34 = sphi 0, %s20
      %s40 = sphi 0, %s42
      %s43 = sphi 0, %s40
      %s44 = sphi 0, %s43
      %s60 = sphi 0, %s44
      %s66 = sphi 0, %s68
      %s69 = sphi 0, %s66
      %s70 = sphi 0, %s69
      %s86 = sphi 0, %s70
    $region4: #{_normalize.7} parent=1 // loop_header_branch
      %12 = sbr.rel (%p10) target = $region8
    $region5: #{_normalize.7} parent=1 // loop_body
      %s14 = ssub.s32 %s9, 1
      %s15 = ssub.s32 %s9, 2
      %s16 = sadd.s32 %s9, 1
      %s18 = sadd.s32 %s17, 1
      %p21 = scmp.eq.s32.totalorder %s9, 1
      %p22 = scmp.ne.s32.totalorder %s17, %s19
      %p23 = scmp.eq.s32.totalorder %s9, 0
      %p24 = por %p22, %p23
      %p25 = scmp.ne.s32.totalorder %s17, %s19
      %p26 = scmp.eq.s32.totalorder %s14, 1
      %p27 = por %p25, %p26
      %p28 = scmp.ne.s32.totalorder %s19, %s20
      %p29 = scmp.eq.s32.totalorder %s14, 0
      %p30 = por %p28, %p29
      %p31 = scmp.ne.s32.totalorder %s19, %s20
      %p32 = scmp.eq.s32.totalorder %s15, 1
      %p33 = por %p31, %p32
      %p35 = scmp.ne.s32.totalorder %s20, %s34
      %p36 = scmp.eq.s32.totalorder %s15, 0
      %p37 = por %p35, %p36
      %s38 = ssub.s32 %s9, %s16
      %p39 = scmp.eq.s32.totalorder %s38, 0
      %s41 = sadd.s32 %s40, 1
      %s42 = scalar_select %p39, %s40, %s41
      %p45 = pneg %p39
      %p46 = scmp.eq.s32.totalorder %s9, 1
      %p47 = por %p45, %p46
      %p48 = scmp.ne.s32.totalorder %s40, %s43
      %p49 = scmp.eq.s32.totalorder %s9, 0
      %p50 = por %p48, %p49
      %p51 = scmp.ne.s32.totalorder %s40, %s43
      %p52 = scmp.eq.s32.totalorder %s14, 1
      %p53 = por %p51, %p52
      %p54 = scmp.ne.s32.totalorder %s43, %s44
      %p55 = scmp.eq.s32.totalorder %s14, 0
      %p56 = por %p54, %p55
      %p57 = scmp.ne.s32.totalorder %s43, %s44
      %p58 = scmp.eq.s32.totalorder %s15, 1
      %p59 = por %p57, %p58
      %p61 = scmp.ne.s32.totalorder %s44, %s60
      %p62 = scmp.eq.s32.totalorder %s15, 0
      %p63 = por %p61, %p62
      %s64 = ssub.s32 %s9, %s16
      %p65 = scmp.eq.s32.totalorder %s64, 0
      %s67 = sadd.s32 %s66, 1
      %s68 = scalar_select %p65, %s66, %s67
      %p71 = pneg %p65
      %p72 = scmp.eq.s32.totalorder %s9, 1
      %p73 = por %p71, %p72
      %p74 = scmp.ne.s32.totalorder %s66, %s69
      %p75 = scmp.eq.s32.totalorder %s9, 0
      %p76 = por %p74, %p75
      %p77 = scmp.ne.s32.totalorder %s66, %s69
      %p78 = scmp.eq.s32.totalorder %s14, 1
      %p79 = por %p77, %p78
      %p80 = scmp.ne.s32.totalorder %s69, %s70
      %p81 = scmp.eq.s32.totalorder %s14, 0
      %p82 = por %p80, %p81
      %p83 = scmp.ne.s32.totalorder %s69, %s70
      %p84 = scmp.eq.s32.totalorder %s15, 1
      %p85 = por %p83, %p84
      %p87 = scmp.ne.s32.totalorder %s70, %s86
      %p88 = scmp.eq.s32.totalorder %s15, 0
      %p89 = por %p87, %p88
      %p90 = scmp.le.s32.totalorder 1, %s9
      %p91 = scmp.lt.s32.totalorder %s9, 3
      %p92 = pnand %p90, %p91
      %p93 = pneg %p92
      // Predicated region
      $region9: #{_normalize.7} parent=5 // pred_check
        _
      $region10: #{_normalize.7} parent=5 // pred_check_branch
        %95 = sbr.rel (%p92) target = $region12
      $region11: #{_normalize.7} parent=5 // pred_region
        %s96 = ssub.s32 %s9, 1
        // Predicated region
        $region13: #{_normalize.7} parent=11 // pred_check
          %p97 = pneg %p30
        $region14: #{_normalize.7} parent=11 // pred_check_branch
          %99 = sbr.rel (%p97) target = $region16
        $region15: #{_normalize.7} parent=11 // pred_region
          %s101 = ssub.s32 64, 64
          %102 = vsyncadd [#allocation3], %s101
          %s104 = sshll.u32 %s0, 4
          %s105 = int_to_ptr.vmem [resolvable:$true] %s104
          %107 = dma.vmem_to_smem %s105, 64, [#allocation2], [#allocation3]
        $region16: #{_normalize.7} parent=11 // pred_fallthru
          _
      $region12: #{_normalize.7} parent=5 // pred_fallthru
        _
      %p108 = scmp.lt.s32.totalorder %s9, 2
      // Predicated region
      $region17: #{_normalize.7} parent=5 // pred_check
        %p109 = pneg %p108
      $region18: #{_normalize.7} parent=5 // pred_check_branch
        %111 = sbr.rel (%p109) target = $region20
      $region19: #{_normalize.7} parent=5 // pred_region
        // Predicated region
        $region21: #{_normalize.7} parent=19 // pred_check
          %p112 = pneg %p50
        $region22: #{_normalize.7} parent=19 // pred_check_branch
          %114 = sbr.rel (%p112) target = $region24
        $region23: #{_normalize.7} parent=19 // pred_region
          %s115 = sand.u32 %s40, 1
          %s116 = sand.u32 %s40, 1
          %s117 = smul.addr %s116, 16
          %s118 = scalar_lea.vmem [#allocation4], %s117
          %s119 = smul.addr %s9, 8
          %s120 = scalar_lea.vmem %s1, %s119
          // Predicated region
          $region25: #{_normalize.7} parent=23 // pred_check
            _
          $region26: #{_normalize.7} parent=23 // pred_check_branch
            %122 = sbr.rel (0) target = $region28
          $region27: #{_normalize.7} parent=23 // pred_region
            // Predicated region
            $region29: #{_normalize.7} parent=27 // pred_check
              _
            $region30: #{_normalize.7} parent=27 // pred_check_branch
              %124 = sbr.rel (0) target = $region32
            $region31: #{_normalize.7} parent=27 // pred_region
              // Predicated region
              $region44: #{_normalize.7} parent=31 // pred_check
                _
              $region45: #{_normalize.7} parent=31 // pred_check_branch
                %141 = sbr.rel (0) target = $region47
              $region46: #{_normalize.7} parent=31 // pred_region
                loop: start=0, step=1, limit=1
                $region48: #{_normalize.7} parent=46 // loop_pre_header
                  _
                $region49: #{_normalize.7} parent=46 // loop_header
                  %s143 = sphi 0, %s147
                  %p144 = scmp.ge.s32.totalorder %s143, 1
                  %s148 = sphi %s120, %s120
                  %s149 = sphi %s118, %s118
                $region50: #{_normalize.7} parent=46 // loop_header_branch
                  %146 = sbr.rel (%p144) target = $region54
                $region51: #{_normalize.7} parent=46 // loop_body
                  %v150 = vld [vmem:[%s148] sm:$0xff]
                  %151 = vst [vmem:[%s149] sm:$0xff] %v150
                  %v152 = vld [vmem:[%s148 + $0x10] sm:$0xff]
                  %153 = vst [vmem:[%s149 + $0x8] sm:$0xff] %v152
                $region52: #{_normalize.7} parent=46 // loop_footer
                  %s147 = sadd.s32 1, %s143
                $region53: #{_normalize.7} parent=46 // loop_footer_branch
                  %142 = sbr.rel target = $region49
                $region54: #{_normalize.7} parent=46 // loop_exit
                  _
              $region47: #{_normalize.7} parent=31 // pred_fallthru
                _
              // Predicated region
              $region55: #{_normalize.7} parent=31 // pred_check
                _
              $region56: #{_normalize.7} parent=31 // pred_check_branch
                %155 = sbr.rel target = $region58
              $region57: #{_normalize.7} parent=31 // pred_region
                _
              $region58: #{_normalize.7} parent=31 // pred_fallthru
                _
            $region32: #{_normalize.7} parent=27 // pred_fallthru
              _
            // Predicated region
            $region33: #{_normalize.7} parent=27 // pred_check
              _
            $region34: #{_normalize.7} parent=27 // pred_check_branch
              %126 = sbr.rel target = $region36
            $region35: #{_normalize.7} parent=27 // pred_region
              loop: start=0, step=1, limit=1
              $region37: #{_normalize.7} parent=35 // loop_pre_header
                _
              $region38: #{_normalize.7} parent=35 // loop_header
                %s129 = sphi 0, %s133
                %p130 = scmp.ge.s32.totalorder %s129, 1
                %s134 = sphi %s120, %s120
                %s135 = sphi %s118, %s118
              $region39: #{_normalize.7} parent=35 // loop_header_branch
                %132 = sbr.rel (%p130) target = $region43
              $region40: #{_normalize.7} parent=35 // loop_body
                %v136 = vld [vmem:[%s134] sm:$0xff]
                %137 = vst [vmem:[%s135] sm:$0xff] %v136
                %v138 = vld [vmem:[%s134 + $0x10] sm:$0xff]
                %139 = vst [vmem:[%s135 + $0x8] sm:$0xff] %v138
              $region41: #{_normalize.7} parent=35 // loop_footer
                %s133 = sadd.s32 1, %s129
              $region42: #{_normalize.7} parent=35 // loop_footer_branch
                %128 = sbr.rel target = $region38
              $region43: #{_normalize.7} parent=35 // loop_exit
                _
            $region36: #{_normalize.7} parent=27 // pred_fallthru
              _
          $region28: #{_normalize.7} parent=23 // pred_fallthru
            _
          %156 = vnop
        $region24: #{_normalize.7} parent=19 // pred_fallthru
          _
      $region20: #{_normalize.7} parent=5 // pred_fallthru
        _
      %p157 = scmp.le.s32.totalorder 1, %s9
      %p158 = scmp.lt.s32.totalorder %s9, 3
      %p159 = pnand %p157, %p158
      %p160 = pneg %p159
      // Predicated region
      $region59: #{_normalize.7} parent=5 // pred_check
        _
      $region60: #{_normalize.7} parent=5 // pred_check_branch
        %162 = sbr.rel (%p159) target = $region62
      $region61: #{_normalize.7} parent=5 // pred_region
        %s163 = ssub.s32 %s9, 1
        // Predicated region
        $region63: #{_normalize.7} parent=61 // pred_check
          %p164 = pneg %p30
        $region64: #{_normalize.7} parent=61 // pred_check_branch
          %166 = sbr.rel (%p164) target = $region66
        $region65: #{_normalize.7} parent=61 // pred_region
          %167 = dma.done [#allocation3], 64
        $region66: #{_normalize.7} parent=61 // pred_fallthru
          _
        %s168 = sand.u32 %s43, 1
        %s169 = sand.u32 %s43, 1
        %s170 = smul.addr %s169, 16
        %s171 = scalar_lea.vmem [#allocation4], %s170
        // Predicated region
        $region67: #{_normalize.7} parent=61 // pred_check
          %p172 = pneg %p56
        $region68: #{_normalize.7} parent=61 // pred_check_branch
          %174 = sbr.rel (%p172) target = $region70
        $region69: #{_normalize.7} parent=61 // pred_region
          _
        $region70: #{_normalize.7} parent=61 // pred_fallthru
          _
        %175 = sfence
        %p176 = pneg %p30
        %p177 = pneg %p27
        %s178 = sand.u32 %s43, 1
        %s179 = sand.u32 %s43, 1
        %s180 = smul.addr %s179, 16
        %s181 = scalar_lea.vmem [#allocation4], %s180
        %p182 = pneg %p56
        %p183 = pneg %p53
        %p184 = pneg %p82
        %p185 = pneg %p79
        %p186 = scmp.lt.s32.totalorder %s14, 1
        %s187 = scalar_select %p186, %s14, 1
        %s188 = smul.addr %s187, 8
        %s189 = scalar_lea.vmem %s2, %s188
        %p190 = scmp.lt.s32.totalorder %s14, 1
        %s191 = scalar_select %p190, %s14, 1
        %s192 = smul.addr %s191, 8
        %s193 = scalar_lea.vmem %s2, %s192
        %v194 = vld [vmem:[%s171] sm:$0xff]
        %v195 = vld [vmem:[%s171 + $0x8] sm:$0xff]
        %s196 = sld [smem:[#allocation2]]
        %v197 = vstv %s196
        %v198 = vmul.f32 %v197, %v194
        %s199 = sld [smem:[#allocation2 + $0x1]]
        %v200 = vstv %s199
        %v201 = vmul.f32 %v200, %v195
        %v202 = vadd.f32 %v198, %v201
        %v203 = vsub.f32 0.0, %v202
        %v204 = vmul.f32 %v203, 1.442695
        %v205 = vpow.pop %v204
        %v206 = vmul.f32 %v205, 240.0
        %v207 = vmin.f32 %v206, 255.0
        %v208 = vmax.f32 %v207, 0.0
        %v209 = vcvt.f32.s32.to.zero.pseudo %v208
        %s210 = sld [smem:[#allocation2 + $0x80]]
        %v211 = vstv %s210
        %v212 = vmul.f32 %v211, %v194
        %s213 = sld [smem:[#allocation2 + $0x81]]
        %v214 = vstv %s213
        %v215 = vmul.f32 %v214, %v195
        %v216 = vadd.f32 %v212, %v215
        %v217 = vsub.f32 0.0, %v216
        %v218 = vmul.f32 %v217, 1.442695
        %v219 = vpow.pop %v218
        %v220 = vmul.f32 %v219, 240.0
        %v221 = vmin.f32 %v220, 255.0
        %v222 = vmax.f32 %v221, 0.0
        %v223 = vcvt.f32.s32.to.zero.pseudo %v222
        %v224 = vmul.u32 %v223, 256
        %v225 = vadd.s32 %v209, %v224
        %s226 = sld [smem:[#allocation2 + $0x100]]
        %v227 = vstv %s226
        %v228 = vmul.f32 %v227, %v194
        %s229 = sld [smem:[#allocation2 + $0x101]]
        %v230 = vstv %s229
        %v231 = vmul.f32 %v230, %v195
        %v232 = vadd.f32 %v228, %v231
        %v233 = vsub.f32 0.0, %v232
        %v234 = vmul.f32 %v233, 1.442695
        %v235 = vpow.pop %v234
        %v236 = vmul.f32 %v235, 240.0
        %v237 = vmin.f32 %v236, 255.0
        %v238 = vmax.f32 %v237, 0.0
        %v239 = vcvt.f32.s32.to.zero.pseudo %v238
        %v240 = vmul.u32 %v239, 65536
        %v241 = vadd.s32 %v225, %v240
        %242 = vst [vmem:[%s193] sm:$0xff] %v241
        %p243 = scmp.lt.s32.totalorder %s14, 1
        %s244 = scalar_select %p243, %s14, 1
        %s245 = smul.addr %s244, 8
        %s246 = scalar_lea.vmem %s2, %s245
        // Predicated region
        $region71: #{_normalize.7} parent=61 // pred_check
          %p247 = pneg %p79
        $region72: #{_normalize.7} parent=61 // pred_check_branch
          %249 = sbr.rel (%p247) target = $region74
        $region73: #{_normalize.7} parent=61 // pred_region
          _
        $region74: #{_normalize.7} parent=61 // pred_fallthru
          _
      $region62: #{_normalize.7} parent=5 // pred_fallthru
        _
      %p250 = scmp.le.s32.totalorder 2, %s9
      // Predicated region
      $region75: #{_normalize.7} parent=5 // pred_check
        %p251 = pneg %p250
      $region76: #{_normalize.7} parent=5 // pred_check_branch
        %253 = sbr.rel (%p251) target = $region78
      $region77: #{_normalize.7} parent=5 // pred_region
        %s254 = ssub.s32 %s9, 2
        // Predicated region
        $region79: #{_normalize.7} parent=77 // pred_check
          %p255 = pneg %p85
        $region80: #{_normalize.7} parent=77 // pred_check_branch
          %257 = sbr.rel (%p255) target = $region82
        $region81: #{_normalize.7} parent=77 // pred_region
          %p258 = scmp.lt.s32.totalorder %s15, 1
          %s259 = scalar_select %p258, %s15, 1
          %s260 = smul.addr %s259, 8
          %s261 = scalar_lea.vmem %s2, %s260
        $region82: #{_normalize.7} parent=77 // pred_fallthru
          _
      $region78: #{_normalize.7} parent=5 // pred_fallthru
        _
    $region6: #{_normalize.7} parent=1 // loop_footer
      %s13 = sadd.s32 1, %s9
    $region7: #{_normalize.7} parent=1 // loop_footer_branch
      %8 = sbr.rel target = $region3
    $region8: #{_normalize.7} parent=1 // loop_exit
      _
    %262 = vsyncpa [#allocation3], 1
    %s263 = scalar_lea.sflag [#allocation3], 1
    %264 = vsyncpa %s263, 1

</llo_original>
